<compile_context>
chip_gen: v7x
topology: tpu7x:2x2x1
jax: 0.10.0
libtpu: 0.0.40
codegen_flags: <defaults>
</compile_context>

<pallas_src>
import functools

import jax
import jax.numpy as jnp
from jax.experimental import pallas as pl
from jax.experimental.pallas import tpu as pltpu

LANE = 128


# ---------------------------------------------------------------------------
# Shared LSTM gate math.  Gate layout is [i | f | o | g]: sigmoid gates are a
# single contiguous [B, 3H] slice, the tanh gate is [B, H].  (We construct the
# random weights in this layout, so it is just a column permutation of the
# PyTorch i,f,g,o order.)
# ---------------------------------------------------------------------------
def _lstm_elementwise(gates, c, hidden):
    sig = jax.nn.sigmoid(gates[:, :3 * hidden])          # [B, 3H] f32
    g = jnp.tanh(gates[:, 3 * hidden:])                  # [B, H]  f32
    c_new = sig[:, hidden:2 * hidden] * c + sig[:, :hidden] * g
    h_new = sig[:, 2 * hidden:3 * hidden] * jnp.tanh(c_new)
    return h_new, c_new


# ---------------------------------------------------------------------------
# Encoder: single invocation, recurrence fully unrolled in-kernel.
# The x @ W_ih projection (gates_x, bias folded) is precomputed in the wrapper.
# ---------------------------------------------------------------------------
def _encoder_kernel(gx_ref, w_hh_ref, h_out_ref, c_out_ref):
    S, B, _ = gx_ref.shape
    H = w_hh_ref.shape[0]

    w_hh = w_hh_ref[...]                                  # [H, 4H] bf16, resident
    h = jnp.zeros((B, H), jnp.bfloat16)
    c = jnp.zeros((B, H), jnp.float32)

    for t in range(S):                                    # static unrolled loop
        gates = gx_ref[t] + jnp.dot(h, w_hh, preferred_element_type=jnp.float32)
        h_f32, c = _lstm_elementwise(gates, c, H)
        h = h_f32.astype(jnp.bfloat16)                    # bf16 shadow for next matmul

    h_out_ref[...] = h
    c_out_ref[...] = c


def _encode(src_emb, w_ih, w_hh, b):
    S, B, E = src_emb.shape
    H, G = w_hh.shape

    # Hoisted input projection: one [S*B, E] x [E, 4H] matmul, bias folded once.
    gates_x = jnp.einsum("sbe,eg->sbg", src_emb, w_ih,
                         preferred_element_type=jnp.float32) + b   # [S, B, 4H] f32

    return pl.pallas_call(
        _encoder_kernel,
        grid=(1,),
        in_specs=[
            pl.BlockSpec((S, B, G), lambda i: (0, 0, 0)),          # gates_x (resident)
            pl.BlockSpec((H, G), lambda i: (0, 0)),                # w_hh    (resident)
        ],
        out_specs=(
            pl.BlockSpec((B, H), lambda i: (0, 0)),
            pl.BlockSpec((B, H), lambda i: (0, 0)),
        ),
        out_shape=(jax.ShapeDtypeStruct((B, H), jnp.bfloat16),     # h (bf16 feedback)
                   jax.ShapeDtypeStruct((B, H), jnp.float32)),     # c (f32)
        compiler_params=pltpu.CompilerParams(dimension_semantics=("arbitrary",)),
    )(gates_x, w_hh)


# ---------------------------------------------------------------------------
# Decoder: single invocation, all target steps unrolled in-kernel.
# Per step: one fused [B, E+H] x [E+H, 4H] matmul, gate math, lane-dense vocab
# projection, first-occurrence argmax, one-hot embedding of the prediction,
# teacher-forcing select (coin flips live in SMEM via scalar prefetch).
# ---------------------------------------------------------------------------
def _decoder_kernel(sel_ref,                                  # SMEM (scalar prefetch)
                    tgt_emb_ref, h0_ref, c0_ref,
                    w_ref, b_ref, emb_ref, out_w_ref, out_b_ref,
                    logits_ref):
    T, B, E = tgt_emb_ref.shape
    H = h0_ref.shape[1]
    Vp = out_w_ref.shape[1]

    w = w_ref[...]                                        # [E+H, 4H] bf16, resident
    b = b_ref[...]                                        # [1, 4H]  f32
    out_w = out_w_ref[...]                                # [H, Vp]  bf16
    out_b = out_b_ref[...]                                # [1, Vp]  f32 (pad cols -1e30)
    emb = emb_ref[...]                                    # [Vp, E]  bf16
    col = jax.lax.broadcasted_iota(jnp.int32, (B, Vp), 1)

    x = tgt_emb_ref[0]                                    # x = target[0] embedded, bf16
    h = h0_ref[...]                                       # bf16
    c = c0_ref[...]                                       # f32

    for i in range(T - 1):                                # static unrolled loop
        t = i + 1

        # ---- fused LSTM cell: one K = E+H matmul ----
        xh = jnp.concatenate([x, h], axis=1)              # [B, E+H] bf16
        gates = jnp.dot(xh, w, preferred_element_type=jnp.float32) + b
        h_f32, c = _lstm_elementwise(gates, c, H)
        h = h_f32.astype(jnp.bfloat16)

        # ---- lane-dense vocab projection (padded cols carry bias -1e30) ----
        logits = jnp.dot(h, out_w, preferred_element_type=jnp.float32) + out_b
        logits_ref[i] = logits                            # outputs[t] = output

        # ---- greedy pick (first argmax) + embed via one-hot bf16 matmul ----
        m = jnp.max(logits, axis=1, keepdims=True)
        best_idx = jnp.min(jnp.where(logits == m, col, Vp), axis=1, keepdims=True)
        best_onehot = (col == best_idx).astype(jnp.bfloat16)        # [B, Vp]
        best_emb = jnp.dot(best_onehot, emb,
                           preferred_element_type=jnp.float32).astype(jnp.bfloat16)

        # ---- reference: x = best_guess if random() < ratio else target[t] ----
        use_best = sel_ref[t] == 1
        x = jnp.where(use_best, best_emb, tgt_emb_ref[t])


def _decode(sel, tgt_emb, h0, c0, w_fused, b, emb_pad, out_w, out_b):
    T, B, E = tgt_emb.shape
    H = h0.shape[1]
    G = b.shape[1]
    Vp = out_w.shape[1]
    steps = T - 1

    grid_spec = pltpu.PrefetchScalarGridSpec(
        num_scalar_prefetch=1,                            # sel -> SMEM
        grid=(1,),
        in_specs=[
            pl.BlockSpec((T, B, E), lambda i, s: (0, 0, 0)),   # target embeds (bf16)
            pl.BlockSpec((B, H), lambda i, s: (0, 0)),         # h0 (bf16)
            pl.BlockSpec((B, H), lambda i, s: (0, 0)),         # c0 (f32)
            pl.BlockSpec((E + H, G), lambda i, s: (0, 0)),     # fused [W_ih; W_hh]
            pl.BlockSpec((1, G), lambda i, s: (0, 0)),         # bias
            pl.BlockSpec((Vp, E), lambda i, s: (0, 0)),        # padded embedding table
            pl.BlockSpec((H, Vp), lambda i, s: (0, 0)),        # out_w (padded)
            pl.BlockSpec((1, Vp), lambda i, s: (0, 0)),        # out_b (padded, -1e30)
        ],
        out_specs=pl.BlockSpec((steps, B, Vp), lambda i, s: (0, 0, 0)),
    )

    return pl.pallas_call(
        _decoder_kernel,
        grid_spec=grid_spec,
        out_shape=jax.ShapeDtypeStruct((steps, B, Vp), jnp.float32),
        compiler_params=pltpu.CompilerParams(dimension_semantics=("arbitrary",)),
    )(sel, tgt_emb, h0, c0, w_fused, b, emb_pad, out_w, out_b)


# ---------------------------------------------------------------------------
# seq2seq forward (matches the PyTorch reference control flow)
# ---------------------------------------------------------------------------
@functools.partial(jax.jit, static_argnames=("tgt_vocab",))
def seq2seq_forward(params, source, target, tgt_vocab,
                    teacher_force_ratio=0.5, tf_key=None):
    if tf_key is None:
        tf_key = jax.random.PRNGKey(42)

    _, batch = source.shape
    tgt_len, _ = target.shape

    # ----- encoder -----
    src_emb = jnp.take(params["enc_emb"], source, axis=0)          # [S, B, E] bf16
    h, c = _encode(src_emb, params["enc_w_ih"], params["enc_w_hh"], params["enc_b"])

    # ----- decoder -----
    # Deterministic stand-in for python random.random() per-step coin flips.
    # Reference: x = best_guess if random() < teacher_force_ratio else target[t]
    coin = jax.random.uniform(tf_key, (tgt_len,))
    sel = (coin < teacher_force_ratio).astype(jnp.int32)           # 1 -> feed prediction back
    tgt_emb = jnp.take(params["dec_emb"], target, axis=0)          # [T, B, E] bf16

    dec_logits = _decode(sel, tgt_emb, h, c,
                         params["dec_w"], params["dec_b"],
                         params["dec_emb"], params["out_w"], params["out_b"])

    out0 = jnp.zeros((1, batch, tgt_vocab), jnp.float32)           # outputs[0] stays 0
    return jnp.concatenate([out0, dec_logits[:, :, :tgt_vocab]], axis=0)


# ---------------------------------------------------------------------------
# Deterministic parameter construction
# Gate column layout is [i | f | o | g] (sigmoids contiguous, tanh last).
# ---------------------------------------------------------------------------
def make_params(key, src_vocab, tgt_vocab, emb_dim, hidden):
    ks = jax.random.split(key, 10)
    scale = 0.1

    def u(k, shape):
        return (jax.random.uniform(k, shape, jnp.float32) - 0.5) * 2.0 * scale

    vocab_pad = ((tgt_vocab + LANE - 1) // LANE) * LANE

    # decoder embedding table padded to the lane width (extra rows are zero and
    # never selected); output projection padded to lane width, padded columns
    # get bias -1e30 so the in-kernel argmax can never pick them.
    dec_emb = jnp.zeros((vocab_pad, emb_dim), jnp.float32)
    dec_emb = dec_emb.at[:tgt_vocab].set(u(ks[4], (tgt_vocab, emb_dim)))
    out_w = jnp.zeros((hidden, vocab_pad), jnp.float32)
    out_w = out_w.at[:, :tgt_vocab].set(u(ks[8], (hidden, tgt_vocab)))
    out_b = jnp.full((1, vocab_pad), -1e30, jnp.float32)
    out_b = out_b.at[:, :tgt_vocab].set(u(ks[9], (1, tgt_vocab)))

    # decoder recurrent weights fused: [W_ih ; W_hh] -> [E + H, 4H]
    dec_w_ih = u(ks[5], (emb_dim, 4 * hidden))
    dec_w_hh = u(ks[6], (hidden, 4 * hidden))
    dec_w = jnp.concatenate([dec_w_ih, dec_w_hh], axis=0)

    return {
        # encoder
        "enc_emb":  u(ks[0], (src_vocab, emb_dim)).astype(jnp.bfloat16),
        "enc_w_ih": u(ks[1], (emb_dim, 4 * hidden)).astype(jnp.bfloat16),
        "enc_w_hh": u(ks[2], (hidden, 4 * hidden)).astype(jnp.bfloat16),
        "enc_b":    u(ks[3], (1, 4 * hidden)),              # b_ih + b_hh folded, f32
        # decoder
        "dec_emb":  dec_emb.astype(jnp.bfloat16),            # [Vp, E] bf16
        "dec_w":    dec_w.astype(jnp.bfloat16),               # [E+H, 4H] bf16 (fused)
        "dec_b":    u(ks[7], (1, 4 * hidden)),
        # output projection (lane-padded)
        "out_w":    out_w.astype(jnp.bfloat16),               # [H, Vp] bf16
        "out_b":    out_b,                                    # [1, Vp] f32
    }


if __name__ == "__main__":
    SRC_VOCAB = 48
    TGT_VOCAB = 48          # plays the role of len(english.vocab)
    EMB = 128
    HIDDEN = 128            # 4H = 512 -> gate slices are 128-lane aligned
    SRC_LEN = 6
    TGT_LEN = 8
    BATCH = 8

    root = jax.random.PRNGKey(0)
    k_par, k_src, k_tgt = jax.random.split(root, 3)

    params = make_params(k_par, SRC_VOCAB, TGT_VOCAB, EMB, HIDDEN)
    source = jax.random.randint(k_src, (SRC_LEN, BATCH), 0, SRC_VOCAB, jnp.int32)
    target = jax.random.randint(k_tgt, (TGT_LEN, BATCH), 0, TGT_VOCAB, jnp.int32)

    outputs = seq2seq_forward(params, source, target, tgt_vocab=TGT_VOCAB,
                              teacher_force_ratio=0.5)
    outputs = jax.block_until_ready(outputs)

    assert outputs.shape == (TGT_LEN, BATCH, TGT_VOCAB)
    assert bool(jnp.all(outputs[0] == 0.0))
    assert bool(jnp.all(jnp.isfinite(outputs)))
    print("KERNEL_OK")
</pallas_src>

<mosaic_0001>
module attributes {stable_mosaic.version = 11 : i64} {
  func.func @_decoder_kernel(%arg0: i32, %arg1: memref<8xi32, #tpu.memory_space<smem>>, %arg2: memref<8x8x128xbf16, #tpu.memory_space<vmem>>, %arg3: memref<8x128xbf16, #tpu.memory_space<vmem>>, %arg4: memref<8x128xf32, #tpu.memory_space<vmem>>, %arg5: memref<256x512xbf16, #tpu.memory_space<vmem>>, %arg6: memref<1x512xf32, #tpu.memory_space<vmem>>, %arg7: memref<128x128xbf16, #tpu.memory_space<vmem>>, %arg8: memref<128x128xbf16, #tpu.memory_space<vmem>>, %arg9: memref<1x128xf32, #tpu.memory_space<vmem>>, %arg10: memref<7x8x128xf32, #tpu.memory_space<vmem>>) attributes {dimension_semantics = [#tpu.dimension_semantics<arbitrary>], iteration_bounds = array<i64: 1>, scalar_prefetch = 1 : i64, scratch_operands = 0 : i64, tpu.core_type = #tpu.core_type<tc>, window_params = [{pipeline_mode = #tpu.pipeline_mode<synchronous>, transform_indices = @transform_0, window_bounds = array<i64: 8, 8, 128>}, {pipeline_mode = #tpu.pipeline_mode<synchronous>, transform_indices = @transform_1, window_bounds = array<i64: 8, 128>}, {pipeline_mode = #tpu.pipeline_mode<synchronous>, transform_indices = @transform_2, window_bounds = array<i64: 8, 128>}, {pipeline_mode = #tpu.pipeline_mode<synchronous>, transform_indices = @transform_3, window_bounds = array<i64: 256, 512>}, {pipeline_mode = #tpu.pipeline_mode<synchronous>, transform_indices = @transform_4, window_bounds = array<i64: 1, 512>}, {pipeline_mode = #tpu.pipeline_mode<synchronous>, transform_indices = @transform_5, window_bounds = array<i64: 128, 128>}, {pipeline_mode = #tpu.pipeline_mode<synchronous>, transform_indices = @transform_6, window_bounds = array<i64: 128, 128>}, {pipeline_mode = #tpu.pipeline_mode<synchronous>, transform_indices = @transform_7, window_bounds = array<i64: 1, 128>}, {pipeline_mode = #tpu.pipeline_mode<synchronous>, transform_indices = @transform_8, window_bounds = array<i64: 7, 8, 128>}]} {
    %c0 = arith.constant 0 : index
    %c0_0 = arith.constant 0 : index
    %0 = vector.load %arg5[%c0, %c0_0] : memref<256x512xbf16, #tpu.memory_space<vmem>>, vector<256x512xbf16>
    %c0_1 = arith.constant 0 : index
    %c0_2 = arith.constant 0 : index
    %1 = vector.load %arg6[%c0_1, %c0_2] : memref<1x512xf32, #tpu.memory_space<vmem>>, vector<1x512xf32>
    %c0_3 = arith.constant 0 : index
    %c0_4 = arith.constant 0 : index
    %2 = vector.load %arg8[%c0_3, %c0_4] : memref<128x128xbf16, #tpu.memory_space<vmem>>, vector<128x128xbf16>
    %c0_5 = arith.constant 0 : index
    %c0_6 = arith.constant 0 : index
    %3 = vector.load %arg9[%c0_5, %c0_6] : memref<1x128xf32, #tpu.memory_space<vmem>>, vector<1x128xf32>
    %c0_7 = arith.constant 0 : index
    %c0_8 = arith.constant 0 : index
    %4 = vector.load %arg7[%c0_7, %c0_8] : memref<128x128xbf16, #tpu.memory_space<vmem>>, vector<128x128xbf16>
    %5 = tpu.iota {dimensions = array<i32: 1>} : vector<8x128xi32>
    %c0_9 = arith.constant 0 : index
    %c0_10 = arith.constant 0 : index
    %c0_11 = arith.constant 0 : index
    %6 = vector.load %arg2[%c0_9, %c0_10, %c0_11] : memref<8x8x128xbf16, #tpu.memory_space<vmem>>, vector<1x8x128xbf16>
    %7 = vector.shape_cast %6 : vector<1x8x128xbf16> to vector<8x128xbf16>
    %c0_12 = arith.constant 0 : index
    %c0_13 = arith.constant 0 : index
    %8 = vector.load %arg3[%c0_12, %c0_13] : memref<8x128xbf16, #tpu.memory_space<vmem>>, vector<8x128xbf16>
    %c0_14 = arith.constant 0 : index
    %c0_15 = arith.constant 0 : index
    %9 = vector.load %arg4[%c0_14, %c0_15] : memref<8x128xf32, #tpu.memory_space<vmem>>, vector<8x128xf32>
    %10 = tpu.concatenate %7, %8 in 1 : vector<8x128xbf16>, vector<8x128xbf16> -> vector<8x256xbf16>
    %cst = arith.constant dense<0.000000e+00> : vector<8x512xf32>
    %11 = tpu.matmul %10, %0, %cst {dimension_numbers = #tpu.dot_dimension_numbers<[1], [0], [0], [1], [0, 0, 1, 1], [], []>} : vector<8x256xbf16>, vector<256x512xbf16>, vector<8x512xf32> -> vector<8x512xf32>
    %12 = vector.broadcast %1 : vector<1x512xf32> to vector<8x512xf32>
    %13 = arith.addf %11, %12 : vector<8x512xf32>
    %14 = vector.extract_strided_slice %13 {offsets = [0, 0], sizes = [8, 384], strides = [1, 1]} : vector<8x512xf32> to vector<8x384xf32>
    %15 = arith.negf %14 : vector<8x384xf32>
    %16 = math.exp %15 : vector<8x384xf32>
    %cst_16 = arith.constant 1.000000e+00 : f32
    %17 = vector.broadcast %cst_16 : f32 to vector<8x384xf32>
    %18 = arith.addf %17, %16 : vector<8x384xf32>
    %19 = arith.divf %17, %18 : vector<8x384xf32>
    %20 = vector.extract_strided_slice %13 {offsets = [0, 384], sizes = [8, 128], strides = [1, 1]} : vector<8x512xf32> to vector<8x128xf32>
    %21 = math.tanh %20 : vector<8x128xf32>
    %22 = vector.extract_strided_slice %19 {offsets = [0, 128], sizes = [8, 128], strides = [1, 1]} : vector<8x384xf32> to vector<8x128xf32>
    %23 = arith.mulf %22, %9 : vector<8x128xf32>
    %24 = vector.extract_strided_slice %19 {offsets = [0, 0], sizes = [8, 128], strides = [1, 1]} : vector<8x384xf32> to vector<8x128xf32>
    %25 = arith.mulf %24, %21 : vector<8x128xf32>
    %26 = arith.addf %23, %25 : vector<8x128xf32>
    %27 = vector.extract_strided_slice %19 {offsets = [0, 256], sizes = [8, 128], strides = [1, 1]} : vector<8x384xf32> to vector<8x128xf32>
    %28 = math.tanh %26 : vector<8x128xf32>
    %29 = arith.mulf %27, %28 : vector<8x128xf32>
    %30 = arith.truncf %29 : vector<8x128xf32> to vector<8x128xbf16>
    %cst_17 = arith.constant dense<0.000000e+00> : vector<8x128xf32>
    %31 = tpu.matmul %30, %2, %cst_17 {dimension_numbers = #tpu.dot_dimension_numbers<[1], [0], [0], [1], [0, 0, 1, 1], [], []>} : vector<8x128xbf16>, vector<128x128xbf16>, vector<8x128xf32> -> vector<8x128xf32>
    %32 = vector.broadcast %3 : vector<1x128xf32> to vector<8x128xf32>
    %33 = arith.addf %31, %32 : vector<8x128xf32>
    %c0_18 = arith.constant 0 : index
    %c0_19 = arith.constant 0 : index
    %c0_20 = arith.constant 0 : index
    %34 = vector.load %arg10[%c0_18, %c0_19, %c0_20] : memref<7x8x128xf32, #tpu.memory_space<vmem>>, vector<1x8x128xf32>
    %35 = vector.shape_cast %34 : vector<1x8x128xf32> to vector<8x128xf32>
    %36 = vector.shape_cast %33 : vector<8x128xf32> to vector<1x8x128xf32>
    tpu.vector_store %arg10[%c0_18, %c0_19, %c0_20], %36 {strides = array<i32>} : memref<7x8x128xf32, #tpu.memory_space<vmem>>, vector<1x8x128xf32>,
    %cst_21 = arith.constant dense<0xFF800000> : vector<8xf32>
    %37 = vector.multi_reduction <maximumf>, %33, %cst_21 [1] : vector<8x128xf32> to vector<8xf32>
    %38 = vector.shape_cast %37 : vector<8xf32> to vector<8x1xf32>
    %39 = vector.broadcast %38 : vector<8x1xf32> to vector<8x128xf32>
    %40 = arith.cmpf oeq, %33, %39 : vector<8x128xf32>
    %c128_i32 = arith.constant 128 : i32
    %41 = vector.broadcast %c128_i32 : i32 to vector<8x128xi32>
    %42 = arith.select %40, %5, %41 : vector<8x128xi1>, vector<8x128xi32>
    %cst_22 = arith.constant dense<2147483647> : vector<8xi32>
    %43 = vector.multi_reduction <minsi>, %42, %cst_22 [1] : vector<8x128xi32> to vector<8xi32>
    %44 = vector.shape_cast %43 : vector<8xi32> to vector<8x1xi32>
    %45 = vector.broadcast %44 : vector<8x1xi32> to vector<8x128xi32>
    %46 = arith.cmpi eq, %5, %45 : vector<8x128xi32>
    %47 = arith.extui %46 : vector<8x128xi1> to vector<8x128xi32>
    %48 = arith.sitofp %47 : vector<8x128xi32> to vector<8x128xf32>
    %49 = arith.truncf %48 : vector<8x128xf32> to vector<8x128xbf16>
    %cst_23 = arith.constant dense<0.000000e+00> : vector<8x128xf32>
    %50 = tpu.matmul %49, %4, %cst_23 {dimension_numbers = #tpu.dot_dimension_numbers<[1], [0], [0], [1], [0, 0, 1, 1], [], []>} : vector<8x128xbf16>, vector<128x128xbf16>, vector<8x128xf32> -> vector<8x128xf32>
    %51 = arith.truncf %50 : vector<8x128xf32> to vector<8x128xbf16>
    %c1 = arith.constant 1 : index
    %52 = memref.load %arg1[%c1] : memref<8xi32, #tpu.memory_space<smem>>
    %c1_i32 = arith.constant 1 : i32
    %53 = arith.cmpi eq, %52, %c1_i32 : i32
    %c1_24 = arith.constant 1 : index
    %c0_25 = arith.constant 0 : index
    %c0_26 = arith.constant 0 : index
    %54 = vector.load %arg2[%c1_24, %c0_25, %c0_26] : memref<8x8x128xbf16, #tpu.memory_space<vmem>>, vector<1x8x128xbf16>
    %55 = vector.shape_cast %54 : vector<1x8x128xbf16> to vector<8x128xbf16>
    %56 = arith.select %53, %51, %55 : vector<8x128xbf16>
    %57 = tpu.concatenate %56, %30 in 1 : vector<8x128xbf16>, vector<8x128xbf16> -> vector<8x256xbf16>
    %cst_27 = arith.constant dense<0.000000e+00> : vector<8x512xf32>
    %58 = tpu.matmul %57, %0, %cst_27 {dimension_numbers = #tpu.dot_dimension_numbers<[1], [0], [0], [1], [0, 0, 1, 1], [], []>} : vector<8x256xbf16>, vector<256x512xbf16>, vector<8x512xf32> -> vector<8x512xf32>
    %59 = vector.broadcast %1 : vector<1x512xf32> to vector<8x512xf32>
    %60 = arith.addf %58, %59 : vector<8x512xf32>
    %61 = vector.extract_strided_slice %60 {offsets = [0, 0], sizes = [8, 384], strides = [1, 1]} : vector<8x512xf32> to vector<8x384xf32>
    %62 = arith.negf %61 : vector<8x384xf32>
    %63 = math.exp %62 : vector<8x384xf32>
    %cst_28 = arith.constant 1.000000e+00 : f32
    %64 = vector.broadcast %cst_28 : f32 to vector<8x384xf32>
    %65 = arith.addf %64, %63 : vector<8x384xf32>
    %66 = arith.divf %64, %65 : vector<8x384xf32>
    %67 = vector.extract_strided_slice %60 {offsets = [0, 384], sizes = [8, 128], strides = [1, 1]} : vector<8x512xf32> to vector<8x128xf32>
    %68 = math.tanh %67 : vector<8x128xf32>
    %69 = vector.extract_strided_slice %66 {offsets = [0, 128], sizes = [8, 128], strides = [1, 1]} : vector<8x384xf32> to vector<8x128xf32>
    %70 = arith.mulf %69, %26 : vector<8x128xf32>
    %71 = vector.extract_strided_slice %66 {offsets = [0, 0], sizes = [8, 128], strides = [1, 1]} : vector<8x384xf32> to vector<8x128xf32>
    %72 = arith.mulf %71, %68 : vector<8x128xf32>
    %73 = arith.addf %70, %72 : vector<8x128xf32>
    %74 = vector.extract_strided_slice %66 {offsets = [0, 256], sizes = [8, 128], strides = [1, 1]} : vector<8x384xf32> to vector<8x128xf32>
    %75 = math.tanh %73 : vector<8x128xf32>
    %76 = arith.mulf %74, %75 : vector<8x128xf32>
    %77 = arith.truncf %76 : vector<8x128xf32> to vector<8x128xbf16>
    %cst_29 = arith.constant dense<0.000000e+00> : vector<8x128xf32>
    %78 = tpu.matmul %77, %2, %cst_29 {dimension_numbers = #tpu.dot_dimension_numbers<[1], [0], [0], [1], [0, 0, 1, 1], [], []>} : vector<8x128xbf16>, vector<128x128xbf16>, vector<8x128xf32> -> vector<8x128xf32>
    %79 = vector.broadcast %3 : vector<1x128xf32> to vector<8x128xf32>
    %80 = arith.addf %78, %79 : vector<8x128xf32>
    %c1_30 = arith.constant 1 : index
    %c0_31 = arith.constant 0 : index
    %c0_32 = arith.constant 0 : index
    %81 = vector.load %arg10[%c1_30, %c0_31, %c0_32] : memref<7x8x128xf32, #tpu.memory_space<vmem>>, vector<1x8x128xf32>
    %82 = vector.shape_cast %81 : vector<1x8x128xf32> to vector<8x128xf32>
    %83 = vector.shape_cast %80 : vector<8x128xf32> to vector<1x8x128xf32>
    tpu.vector_store %arg10[%c1_30, %c0_31, %c0_32], %83 {strides = array<i32>} : memref<7x8x128xf32, #tpu.memory_space<vmem>>, vector<1x8x128xf32>,
    %cst_33 = arith.constant dense<0xFF800000> : vector<8xf32>
    %84 = vector.multi_reduction <maximumf>, %80, %cst_33 [1] : vector<8x128xf32> to vector<8xf32>
    %85 = vector.shape_cast %84 : vector<8xf32> to vector<8x1xf32>
    %86 = vector.broadcast %85 : vector<8x1xf32> to vector<8x128xf32>
    %87 = arith.cmpf oeq, %80, %86 : vector<8x128xf32>
    %c128_i32_34 = arith.constant 128 : i32
    %88 = vector.broadcast %c128_i32_34 : i32 to vector<8x128xi32>
    %89 = arith.select %87, %5, %88 : vector<8x128xi1>, vector<8x128xi32>
    %cst_35 = arith.constant dense<2147483647> : vector<8xi32>
    %90 = vector.multi_reduction <minsi>, %89, %cst_35 [1] : vector<8x128xi32> to vector<8xi32>
    %91 = vector.shape_cast %90 : vector<8xi32> to vector<8x1xi32>
    %92 = vector.broadcast %91 : vector<8x1xi32> to vector<8x128xi32>
    %93 = arith.cmpi eq, %5, %92 : vector<8x128xi32>
    %94 = arith.extui %93 : vector<8x128xi1> to vector<8x128xi32>
    %95 = arith.sitofp %94 : vector<8x128xi32> to vector<8x128xf32>
    %96 = arith.truncf %95 : vector<8x128xf32> to vector<8x128xbf16>
    %cst_36 = arith.constant dense<0.000000e+00> : vector<8x128xf32>
    %97 = tpu.matmul %96, %4, %cst_36 {dimension_numbers = #tpu.dot_dimension_numbers<[1], [0], [0], [1], [0, 0, 1, 1], [], []>} : vector<8x128xbf16>, vector<128x128xbf16>, vector<8x128xf32> -> vector<8x128xf32>
    %98 = arith.truncf %97 : vector<8x128xf32> to vector<8x128xbf16>
    %c2 = arith.constant 2 : index
    %99 = memref.load %arg1[%c2] : memref<8xi32, #tpu.memory_space<smem>>
    %c1_i32_37 = arith.constant 1 : i32
    %100 = arith.cmpi eq, %99, %c1_i32_37 : i32
    %c2_38 = arith.constant 2 : index
    %c0_39 = arith.constant 0 : index
    %c0_40 = arith.constant 0 : index
    %101 = vector.load %arg2[%c2_38, %c0_39, %c0_40] : memref<8x8x128xbf16, #tpu.memory_space<vmem>>, vector<1x8x128xbf16>
    %102 = vector.shape_cast %101 : vector<1x8x128xbf16> to vector<8x128xbf16>
    %103 = arith.select %100, %98, %102 : vector<8x128xbf16>
    %104 = tpu.concatenate %103, %77 in 1 : vector<8x128xbf16>, vector<8x128xbf16> -> vector<8x256xbf16>
    %cst_41 = arith.constant dense<0.000000e+00> : vector<8x512xf32>
    %105 = tpu.matmul %104, %0, %cst_41 {dimension_numbers = #tpu.dot_dimension_numbers<[1], [0], [0], [1], [0, 0, 1, 1], [], []>} : vector<8x256xbf16>, vector<256x512xbf16>, vector<8x512xf32> -> vector<8x512xf32>
    %106 = vector.broadcast %1 : vector<1x512xf32> to vector<8x512xf32>
    %107 = arith.addf %105, %106 : vector<8x512xf32>
    %108 = vector.extract_strided_slice %107 {offsets = [0, 0], sizes = [8, 384], strides = [1, 1]} : vector<8x512xf32> to vector<8x384xf32>
    %109 = arith.negf %108 : vector<8x384xf32>
    %110 = math.exp %109 : vector<8x384xf32>
    %cst_42 = arith.constant 1.000000e+00 : f32
    %111 = vector.broadcast %cst_42 : f32 to vector<8x384xf32>
    %112 = arith.addf %111, %110 : vector<8x384xf32>
    %113 = arith.divf %111, %112 : vector<8x384xf32>
    %114 = vector.extract_strided_slice %107 {offsets = [0, 384], sizes = [8, 128], strides = [1, 1]} : vector<8x512xf32> to vector<8x128xf32>
    %115 = math.tanh %114 : vector<8x128xf32>
    %116 = vector.extract_strided_slice %113 {offsets = [0, 128], sizes = [8, 128], strides = [1, 1]} : vector<8x384xf32> to vector<8x128xf32>
    %117 = arith.mulf %116, %73 : vector<8x128xf32>
    %118 = vector.extract_strided_slice %113 {offsets = [0, 0], sizes = [8, 128], strides = [1, 1]} : vector<8x384xf32> to vector<8x128xf32>
    %119 = arith.mulf %118, %115 : vector<8x128xf32>
    %120 = arith.addf %117, %119 : vector<8x128xf32>
    %121 = vector.extract_strided_slice %113 {offsets = [0, 256], sizes = [8, 128], strides = [1, 1]} : vector<8x384xf32> to vector<8x128xf32>
    %122 = math.tanh %120 : vector<8x128xf32>
    %123 = arith.mulf %121, %122 : vector<8x128xf32>
    %124 = arith.truncf %123 : vector<8x128xf32> to vector<8x128xbf16>
    %cst_43 = arith.constant dense<0.000000e+00> : vector<8x128xf32>
    %125 = tpu.matmul %124, %2, %cst_43 {dimension_numbers = #tpu.dot_dimension_numbers<[1], [0], [0], [1], [0, 0, 1, 1], [], []>} : vector<8x128xbf16>, vector<128x128xbf16>, vector<8x128xf32> -> vector<8x128xf32>
    %126 = vector.broadcast %3 : vector<1x128xf32> to vector<8x128xf32>
    %127 = arith.addf %125, %126 : vector<8x128xf32>
    %c2_44 = arith.constant 2 : index
    %c0_45 = arith.constant 0 : index
    %c0_46 = arith.constant 0 : index
    %128 = vector.load %arg10[%c2_44, %c0_45, %c0_46] : memref<7x8x128xf32, #tpu.memory_space<vmem>>, vector<1x8x128xf32>
    %129 = vector.shape_cast %128 : vector<1x8x128xf32> to vector<8x128xf32>
    %130 = vector.shape_cast %127 : vector<8x128xf32> to vector<1x8x128xf32>
    tpu.vector_store %arg10[%c2_44, %c0_45, %c0_46], %130 {strides = array<i32>} : memref<7x8x128xf32, #tpu.memory_space<vmem>>, vector<1x8x128xf32>,
    %cst_47 = arith.constant dense<0xFF800000> : vector<8xf32>
    %131 = vector.multi_reduction <maximumf>, %127, %cst_47 [1] : vector<8x128xf32> to vector<8xf32>
    %132 = vector.shape_cast %131 : vector<8xf32> to vector<8x1xf32>
    %133 = vector.broadcast %132 : vector<8x1xf32> to vector<8x128xf32>
    %134 = arith.cmpf oeq, %127, %133 : vector<8x128xf32>
    %c128_i32_48 = arith.constant 128 : i32
    %135 = vector.broadcast %c128_i32_48 : i32 to vector<8x128xi32>
    %136 = arith.select %134, %5, %135 : vector<8x128xi1>, vector<8x128xi32>
    %cst_49 = arith.constant dense<2147483647> : vector<8xi32>
    %137 = vector.multi_reduction <minsi>, %136, %cst_49 [1] : vector<8x128xi32> to vector<8xi32>
    %138 = vector.shape_cast %137 : vector<8xi32> to vector<8x1xi32>
    %139 = vector.broadcast %138 : vector<8x1xi32> to vector<8x128xi32>
    %140 = arith.cmpi eq, %5, %139 : vector<8x128xi32>
    %141 = arith.extui %140 : vector<8x128xi1> to vector<8x128xi32>
    %142 = arith.sitofp %141 : vector<8x128xi32> to vector<8x128xf32>
    %143 = arith.truncf %142 : vector<8x128xf32> to vector<8x128xbf16>
    %cst_50 = arith.constant dense<0.000000e+00> : vector<8x128xf32>
    %144 = tpu.matmul %143, %4, %cst_50 {dimension_numbers = #tpu.dot_dimension_numbers<[1], [0], [0], [1], [0, 0, 1, 1], [], []>} : vector<8x128xbf16>, vector<128x128xbf16>, vector<8x128xf32> -> vector<8x128xf32>
    %145 = arith.truncf %144 : vector<8x128xf32> to vector<8x128xbf16>
    %c3 = arith.constant 3 : index
    %146 = memref.load %arg1[%c3] : memref<8xi32, #tpu.memory_space<smem>>
    %c1_i32_51 = arith.constant 1 : i32
    %147 = arith.cmpi eq, %146, %c1_i32_51 : i32
    %c3_52 = arith.constant 3 : index
    %c0_53 = arith.constant 0 : index
    %c0_54 = arith.constant 0 : index
    %148 = vector.load %arg2[%c3_52, %c0_53, %c0_54] : memref<8x8x128xbf16, #tpu.memory_space<vmem>>, vector<1x8x128xbf16>
    %149 = vector.shape_cast %148 : vector<1x8x128xbf16> to vector<8x128xbf16>
    %150 = arith.select %147, %145, %149 : vector<8x128xbf16>
    %151 = tpu.concatenate %150, %124 in 1 : vector<8x128xbf16>, vector<8x128xbf16> -> vector<8x256xbf16>
    %cst_55 = arith.constant dense<0.000000e+00> : vector<8x512xf32>
    %152 = tpu.matmul %151, %0, %cst_55 {dimension_numbers = #tpu.dot_dimension_numbers<[1], [0], [0], [1], [0, 0, 1, 1], [], []>} : vector<8x256xbf16>, vector<256x512xbf16>, vector<8x512xf32> -> vector<8x512xf32>
    %153 = vector.broadcast %1 : vector<1x512xf32> to vector<8x512xf32>
    %154 = arith.addf %152, %153 : vector<8x512xf32>
    %155 = vector.extract_strided_slice %154 {offsets = [0, 0], sizes = [8, 384], strides = [1, 1]} : vector<8x512xf32> to vector<8x384xf32>
    %156 = arith.negf %155 : vector<8x384xf32>
    %157 = math.exp %156 : vector<8x384xf32>
    %cst_56 = arith.constant 1.000000e+00 : f32
    %158 = vector.broadcast %cst_56 : f32 to vector<8x384xf32>
    %159 = arith.addf %158, %157 : vector<8x384xf32>
    %160 = arith.divf %158, %159 : vector<8x384xf32>
    %161 = vector.extract_strided_slice %154 {offsets = [0, 384], sizes = [8, 128], strides = [1, 1]} : vector<8x512xf32> to vector<8x128xf32>
    %162 = math.tanh %161 : vector<8x128xf32>
    %163 = vector.extract_strided_slice %160 {offsets = [0, 128], sizes = [8, 128], strides = [1, 1]} : vector<8x384xf32> to vector<8x128xf32>
    %164 = arith.mulf %163, %120 : vector<8x128xf32>
    %165 = vector.extract_strided_slice %160 {offsets = [0, 0], sizes = [8, 128], strides = [1, 1]} : vector<8x384xf32> to vector<8x128xf32>
    %166 = arith.mulf %165, %162 : vector<8x128xf32>
    %167 = arith.addf %164, %166 : vector<8x128xf32>
    %168 = vector.extract_strided_slice %160 {offsets = [0, 256], sizes = [8, 128], strides = [1, 1]} : vector<8x384xf32> to vector<8x128xf32>
    %169 = math.tanh %167 : vector<8x128xf32>
    %170 = arith.mulf %168, %169 : vector<8x128xf32>
    %171 = arith.truncf %170 : vector<8x128xf32> to vector<8x128xbf16>
    %cst_57 = arith.constant dense<0.000000e+00> : vector<8x128xf32>
    %172 = tpu.matmul %171, %2, %cst_57 {dimension_numbers = #tpu.dot_dimension_numbers<[1], [0], [0], [1], [0, 0, 1, 1], [], []>} : vector<8x128xbf16>, vector<128x128xbf16>, vector<8x128xf32> -> vector<8x128xf32>
    %173 = vector.broadcast %3 : vector<1x128xf32> to vector<8x128xf32>
    %174 = arith.addf %172, %173 : vector<8x128xf32>
    %c3_58 = arith.constant 3 : index
    %c0_59 = arith.constant 0 : index
    %c0_60 = arith.constant 0 : index
    %175 = vector.load %arg10[%c3_58, %c0_59, %c0_60] : memref<7x8x128xf32, #tpu.memory_space<vmem>>, vector<1x8x128xf32>
    %176 = vector.shape_cast %175 : vector<1x8x128xf32> to vector<8x128xf32>
    %177 = vector.shape_cast %174 : vector<8x128xf32> to vector<1x8x128xf32>
    tpu.vector_store %arg10[%c3_58, %c0_59, %c0_60], %177 {strides = array<i32>} : memref<7x8x128xf32, #tpu.memory_space<vmem>>, vector<1x8x128xf32>,
    %cst_61 = arith.constant dense<0xFF800000> : vector<8xf32>
    %178 = vector.multi_reduction <maximumf>, %174, %cst_61 [1] : vector<8x128xf32> to vector<8xf32>
    %179 = vector.shape_cast %178 : vector<8xf32> to vector<8x1xf32>
    %180 = vector.broadcast %179 : vector<8x1xf32> to vector<8x128xf32>
    %181 = arith.cmpf oeq, %174, %180 : vector<8x128xf32>
    %c128_i32_62 = arith.constant 128 : i32
    %182 = vector.broadcast %c128_i32_62 : i32 to vector<8x128xi32>
    %183 = arith.select %181, %5, %182 : vector<8x128xi1>, vector<8x128xi32>
    %cst_63 = arith.constant dense<2147483647> : vector<8xi32>
    %184 = vector.multi_reduction <minsi>, %183, %cst_63 [1] : vector<8x128xi32> to vector<8xi32>
    %185 = vector.shape_cast %184 : vector<8xi32> to vector<8x1xi32>
    %186 = vector.broadcast %185 : vector<8x1xi32> to vector<8x128xi32>
    %187 = arith.cmpi eq, %5, %186 : vector<8x128xi32>
    %188 = arith.extui %187 : vector<8x128xi1> to vector<8x128xi32>
    %189 = arith.sitofp %188 : vector<8x128xi32> to vector<8x128xf32>
    %190 = arith.truncf %189 : vector<8x128xf32> to vector<8x128xbf16>
    %cst_64 = arith.constant dense<0.000000e+00> : vector<8x128xf32>
    %191 = tpu.matmul %190, %4, %cst_64 {dimension_numbers = #tpu.dot_dimension_numbers<[1], [0], [0], [1], [0, 0, 1, 1], [], []>} : vector<8x128xbf16>, vector<128x128xbf16>, vector<8x128xf32> -> vector<8x128xf32>
    %192 = arith.truncf %191 : vector<8x128xf32> to vector<8x128xbf16>
    %c4 = arith.constant 4 : index
    %193 = memref.load %arg1[%c4] : memref<8xi32, #tpu.memory_space<smem>>
    %c1_i32_65 = arith.constant 1 : i32
    %194 = arith.cmpi eq, %193, %c1_i32_65 : i32
    %c4_66 = arith.constant 4 : index
    %c0_67 = arith.constant 0 : index
    %c0_68 = arith.constant 0 : index
    %195 = vector.load %arg2[%c4_66, %c0_67, %c0_68] : memref<8x8x128xbf16, #tpu.memory_space<vmem>>, vector<1x8x128xbf16>
    %196 = vector.shape_cast %195 : vector<1x8x128xbf16> to vector<8x128xbf16>
    %197 = arith.select %194, %192, %196 : vector<8x128xbf16>
    %198 = tpu.concatenate %197, %171 in 1 : vector<8x128xbf16>, vector<8x128xbf16> -> vector<8x256xbf16>
    %cst_69 = arith.constant dense<0.000000e+00> : vector<8x512xf32>
    %199 = tpu.matmul %198, %0, %cst_69 {dimension_numbers = #tpu.dot_dimension_numbers<[1], [0], [0], [1], [0, 0, 1, 1], [], []>} : vector<8x256xbf16>, vector<256x512xbf16>, vector<8x512xf32> -> vector<8x512xf32>
    %200 = vector.broadcast %1 : vector<1x512xf32> to vector<8x512xf32>
    %201 = arith.addf %199, %200 : vector<8x512xf32>
    %202 = vector.extract_strided_slice %201 {offsets = [0, 0], sizes = [8, 384], strides = [1, 1]} : vector<8x512xf32> to vector<8x384xf32>
    %203 = arith.negf %202 : vector<8x384xf32>
    %204 = math.exp %203 : vector<8x384xf32>
    %cst_70 = arith.constant 1.000000e+00 : f32
    %205 = vector.broadcast %cst_70 : f32 to vector<8x384xf32>
    %206 = arith.addf %205, %204 : vector<8x384xf32>
    %207 = arith.divf %205, %206 : vector<8x384xf32>
    %208 = vector.extract_strided_slice %201 {offsets = [0, 384], sizes = [8, 128], strides = [1, 1]} : vector<8x512xf32> to vector<8x128xf32>
    %209 = math.tanh %208 : vector<8x128xf32>
    %210 = vector.extract_strided_slice %207 {offsets = [0, 128], sizes = [8, 128], strides = [1, 1]} : vector<8x384xf32> to vector<8x128xf32>
    %211 = arith.mulf %210, %167 : vector<8x128xf32>
    %212 = vector.extract_strided_slice %207 {offsets = [0, 0], sizes = [8, 128], strides = [1, 1]} : vector<8x384xf32> to vector<8x128xf32>
    %213 = arith.mulf %212, %209 : vector<8x128xf32>
    %214 = arith.addf %211, %213 : vector<8x128xf32>
    %215 = vector.extract_strided_slice %207 {offsets = [0, 256], sizes = [8, 128], strides = [1, 1]} : vector<8x384xf32> to vector<8x128xf32>
    %216 = math.tanh %214 : vector<8x128xf32>
    %217 = arith.mulf %215, %216 : vector<8x128xf32>
    %218 = arith.truncf %217 : vector<8x128xf32> to vector<8x128xbf16>
    %cst_71 = arith.constant dense<0.000000e+00> : vector<8x128xf32>
    %219 = tpu.matmul %218, %2, %cst_71 {dimension_numbers = #tpu.dot_dimension_numbers<[1], [0], [0], [1], [0, 0, 1, 1], [], []>} : vector<8x128xbf16>, vector<128x128xbf16>, vector<8x128xf32> -> vector<8x128xf32>
    %220 = vector.broadcast %3 : vector<1x128xf32> to vector<8x128xf32>
    %221 = arith.addf %219, %220 : vector<8x128xf32>
    %c4_72 = arith.constant 4 : index
    %c0_73 = arith.constant 0 : index
    %c0_74 = arith.constant 0 : index
    %222 = vector.load %arg10[%c4_72, %c0_73, %c0_74] : memref<7x8x128xf32, #tpu.memory_space<vmem>>, vector<1x8x128xf32>
    %223 = vector.shape_cast %222 : vector<1x8x128xf32> to vector<8x128xf32>
    %224 = vector.shape_cast %221 : vector<8x128xf32> to vector<1x8x128xf32>
    tpu.vector_store %arg10[%c4_72, %c0_73, %c0_74], %224 {strides = array<i32>} : memref<7x8x128xf32, #tpu.memory_space<vmem>>, vector<1x8x128xf32>,
    %cst_75 = arith.constant dense<0xFF800000> : vector<8xf32>
    %225 = vector.multi_reduction <maximumf>, %221, %cst_75 [1] : vector<8x128xf32> to vector<8xf32>
    %226 = vector.shape_cast %225 : vector<8xf32> to vector<8x1xf32>
    %227 = vector.broadcast %226 : vector<8x1xf32> to vector<8x128xf32>
    %228 = arith.cmpf oeq, %221, %227 : vector<8x128xf32>
    %c128_i32_76 = arith.constant 128 : i32
    %229 = vector.broadcast %c128_i32_76 : i32 to vector<8x128xi32>
    %230 = arith.select %228, %5, %229 : vector<8x128xi1>, vector<8x128xi32>
    %cst_77 = arith.constant dense<2147483647> : vector<8xi32>
    %231 = vector.multi_reduction <minsi>, %230, %cst_77 [1] : vector<8x128xi32> to vector<8xi32>
    %232 = vector.shape_cast %231 : vector<8xi32> to vector<8x1xi32>
    %233 = vector.broadcast %232 : vector<8x1xi32> to vector<8x128xi32>
    %234 = arith.cmpi eq, %5, %233 : vector<8x128xi32>
    %235 = arith.extui %234 : vector<8x128xi1> to vector<8x128xi32>
    %236 = arith.sitofp %235 : vector<8x128xi32> to vector<8x128xf32>
    %237 = arith.truncf %236 : vector<8x128xf32> to vector<8x128xbf16>
    %cst_78 = arith.constant dense<0.000000e+00> : vector<8x128xf32>
    %238 = tpu.matmul %237, %4, %cst_78 {dimension_numbers = #tpu.dot_dimension_numbers<[1], [0], [0], [1], [0, 0, 1, 1], [], []>} : vector<8x128xbf16>, vector<128x128xbf16>, vector<8x128xf32> -> vector<8x128xf32>
    %239 = arith.truncf %238 : vector<8x128xf32> to vector<8x128xbf16>
    %c5 = arith.constant 5 : index
    %240 = memref.load %arg1[%c5] : memref<8xi32, #tpu.memory_space<smem>>
    %c1_i32_79 = arith.constant 1 : i32
    %241 = arith.cmpi eq, %240, %c1_i32_79 : i32
    %c5_80 = arith.constant 5 : index
    %c0_81 = arith.constant 0 : index
    %c0_82 = arith.constant 0 : index
    %242 = vector.load %arg2[%c5_80, %c0_81, %c0_82] : memref<8x8x128xbf16, #tpu.memory_space<vmem>>, vector<1x8x128xbf16>
    %243 = vector.shape_cast %242 : vector<1x8x128xbf16> to vector<8x128xbf16>
    %244 = arith.select %241, %239, %243 : vector<8x128xbf16>
    %245 = tpu.concatenate %244, %218 in 1 : vector<8x128xbf16>, vector<8x128xbf16> -> vector<8x256xbf16>
    %cst_83 = arith.constant dense<0.000000e+00> : vector<8x512xf32>
    %246 = tpu.matmul %245, %0, %cst_83 {dimension_numbers = #tpu.dot_dimension_numbers<[1], [0], [0], [1], [0, 0, 1, 1], [], []>} : vector<8x256xbf16>, vector<256x512xbf16>, vector<8x512xf32> -> vector<8x512xf32>
    %247 = vector.broadcast %1 : vector<1x512xf32> to vector<8x512xf32>
    %248 = arith.addf %246, %247 : vector<8x512xf32>
    %249 = vector.extract_strided_slice %248 {offsets = [0, 0], sizes = [8, 384], strides = [1, 1]} : vector<8x512xf32> to vector<8x384xf32>
    %250 = arith.negf %249 : vector<8x384xf32>
    %251 = math.exp %250 : vector<8x384xf32>
    %cst_84 = arith.constant 1.000000e+00 : f32
    %252 = vector.broadcast %cst_84 : f32 to vector<8x384xf32>
    %253 = arith.addf %252, %251 : vector<8x384xf32>
    %254 = arith.divf %252, %253 : vector<8x384xf32>
    %255 = vector.extract_strided_slice %248 {offsets = [0, 384], sizes = [8, 128], strides = [1, 1]} : vector<8x512xf32> to vector<8x128xf32>
    %256 = math.tanh %255 : vector<8x128xf32>
    %257 = vector.extract_strided_slice %254 {offsets = [0, 128], sizes = [8, 128], strides = [1, 1]} : vector<8x384xf32> to vector<8x128xf32>
    %258 = arith.mulf %257, %214 : vector<8x128xf32>
    %259 = vector.extract_strided_slice %254 {offsets = [0, 0], sizes = [8, 128], strides = [1, 1]} : vector<8x384xf32> to vector<8x128xf32>
    %260 = arith.mulf %259, %256 : vector<8x128xf32>
    %261 = arith.addf %258, %260 : vector<8x128xf32>
    %262 = vector.extract_strided_slice %254 {offsets = [0, 256], sizes = [8, 128], strides = [1, 1]} : vector<8x384xf32> to vector<8x128xf32>
    %263 = math.tanh %261 : vector<8x128xf32>
    %264 = arith.mulf %262, %263 : vector<8x128xf32>
    %265 = arith.truncf %264 : vector<8x128xf32> to vector<8x128xbf16>
    %cst_85 = arith.constant dense<0.000000e+00> : vector<8x128xf32>
    %266 = tpu.matmul %265, %2, %cst_85 {dimension_numbers = #tpu.dot_dimension_numbers<[1], [0], [0], [1], [0, 0, 1, 1], [], []>} : vector<8x128xbf16>, vector<128x128xbf16>, vector<8x128xf32> -> vector<8x128xf32>
    %267 = vector.broadcast %3 : vector<1x128xf32> to vector<8x128xf32>
    %268 = arith.addf %266, %267 : vector<8x128xf32>
    %c5_86 = arith.constant 5 : index
    %c0_87 = arith.constant 0 : index
    %c0_88 = arith.constant 0 : index
    %269 = vector.load %arg10[%c5_86, %c0_87, %c0_88] : memref<7x8x128xf32, #tpu.memory_space<vmem>>, vector<1x8x128xf32>
    %270 = vector.shape_cast %269 : vector<1x8x128xf32> to vector<8x128xf32>
    %271 = vector.shape_cast %268 : vector<8x128xf32> to vector<1x8x128xf32>
    tpu.vector_store %arg10[%c5_86, %c0_87, %c0_88], %271 {strides = array<i32>} : memref<7x8x128xf32, #tpu.memory_space<vmem>>, vector<1x8x128xf32>,
    %cst_89 = arith.constant dense<0xFF800000> : vector<8xf32>
    %272 = vector.multi_reduction <maximumf>, %268, %cst_89 [1] : vector<8x128xf32> to vector<8xf32>
    %273 = vector.shape_cast %272 : vector<8xf32> to vector<8x1xf32>
    %274 = vector.broadcast %273 : vector<8x1xf32> to vector<8x128xf32>
    %275 = arith.cmpf oeq, %268, %274 : vector<8x128xf32>
    %c128_i32_90 = arith.constant 128 : i32
    %276 = vector.broadcast %c128_i32_90 : i32 to vector<8x128xi32>
    %277 = arith.select %275, %5, %276 : vector<8x128xi1>, vector<8x128xi32>
    %cst_91 = arith.constant dense<2147483647> : vector<8xi32>
    %278 = vector.multi_reduction <minsi>, %277, %cst_91 [1] : vector<8x128xi32> to vector<8xi32>
    %279 = vector.shape_cast %278 : vector<8xi32> to vector<8x1xi32>
    %280 = vector.broadcast %279 : vector<8x1xi32> to vector<8x128xi32>
    %281 = arith.cmpi eq, %5, %280 : vector<8x128xi32>
    %282 = arith.extui %281 : vector<8x128xi1> to vector<8x128xi32>
    %283 = arith.sitofp %282 : vector<8x128xi32> to vector<8x128xf32>
    %284 = arith.truncf %283 : vector<8x128xf32> to vector<8x128xbf16>
    %cst_92 = arith.constant dense<0.000000e+00> : vector<8x128xf32>
    %285 = tpu.matmul %284, %4, %cst_92 {dimension_numbers = #tpu.dot_dimension_numbers<[1], [0], [0], [1], [0, 0, 1, 1], [], []>} : vector<8x128xbf16>, vector<128x128xbf16>, vector<8x128xf32> -> vector<8x128xf32>
    %286 = arith.truncf %285 : vector<8x128xf32> to vector<8x128xbf16>
    %c6 = arith.constant 6 : index
    %287 = memref.load %arg1[%c6] : memref<8xi32, #tpu.memory_space<smem>>
    %c1_i32_93 = arith.constant 1 : i32
    %288 = arith.cmpi eq, %287, %c1_i32_93 : i32
    %c6_94 = arith.constant 6 : index
    %c0_95 = arith.constant 0 : index
    %c0_96 = arith.constant 0 : index
    %289 = vector.load %arg2[%c6_94, %c0_95, %c0_96] : memref<8x8x128xbf16, #tpu.memory_space<vmem>>, vector<1x8x128xbf16>
    %290 = vector.shape_cast %289 : vector<1x8x128xbf16> to vector<8x128xbf16>
    %291 = arith.select %288, %286, %290 : vector<8x128xbf16>
    %292 = tpu.concatenate %291, %265 in 1 : vector<8x128xbf16>, vector<8x128xbf16> -> vector<8x256xbf16>
    %cst_97 = arith.constant dense<0.000000e+00> : vector<8x512xf32>
    %293 = tpu.matmul %292, %0, %cst_97 {dimension_numbers = #tpu.dot_dimension_numbers<[1], [0], [0], [1], [0, 0, 1, 1], [], []>} : vector<8x256xbf16>, vector<256x512xbf16>, vector<8x512xf32> -> vector<8x512xf32>
    %294 = vector.broadcast %1 : vector<1x512xf32> to vector<8x512xf32>
    %295 = arith.addf %293, %294 : vector<8x512xf32>
    %296 = vector.extract_strided_slice %295 {offsets = [0, 0], sizes = [8, 384], strides = [1, 1]} : vector<8x512xf32> to vector<8x384xf32>
    %297 = arith.negf %296 : vector<8x384xf32>
    %298 = math.exp %297 : vector<8x384xf32>
    %cst_98 = arith.constant 1.000000e+00 : f32
    %299 = vector.broadcast %cst_98 : f32 to vector<8x384xf32>
    %300 = arith.addf %299, %298 : vector<8x384xf32>
    %301 = arith.divf %299, %300 : vector<8x384xf32>
    %302 = vector.extract_strided_slice %295 {offsets = [0, 384], sizes = [8, 128], strides = [1, 1]} : vector<8x512xf32> to vector<8x128xf32>
    %303 = math.tanh %302 : vector<8x128xf32>
    %304 = vector.extract_strided_slice %301 {offsets = [0, 128], sizes = [8, 128], strides = [1, 1]} : vector<8x384xf32> to vector<8x128xf32>
    %305 = arith.mulf %304, %261 : vector<8x128xf32>
    %306 = vector.extract_strided_slice %301 {offsets = [0, 0], sizes = [8, 128], strides = [1, 1]} : vector<8x384xf32> to vector<8x128xf32>
    %307 = arith.mulf %306, %303 : vector<8x128xf32>
    %308 = arith.addf %305, %307 : vector<8x128xf32>
    %309 = vector.extract_strided_slice %301 {offsets = [0, 256], sizes = [8, 128], strides = [1, 1]} : vector<8x384xf32> to vector<8x128xf32>
    %310 = math.tanh %308 : vector<8x128xf32>
    %311 = arith.mulf %309, %310 : vector<8x128xf32>
    %312 = arith.truncf %311 : vector<8x128xf32> to vector<8x128xbf16>
    %cst_99 = arith.constant dense<0.000000e+00> : vector<8x128xf32>
    %313 = tpu.matmul %312, %2, %cst_99 {dimension_numbers = #tpu.dot_dimension_numbers<[1], [0], [0], [1], [0, 0, 1, 1], [], []>} : vector<8x128xbf16>, vector<128x128xbf16>, vector<8x128xf32> -> vector<8x128xf32>
    %314 = vector.broadcast %3 : vector<1x128xf32> to vector<8x128xf32>
    %315 = arith.addf %313, %314 : vector<8x128xf32>
    %c6_100 = arith.constant 6 : index
    %c0_101 = arith.constant 0 : index
    %c0_102 = arith.constant 0 : index
    %316 = vector.load %arg10[%c6_100, %c0_101, %c0_102] : memref<7x8x128xf32, #tpu.memory_space<vmem>>, vector<1x8x128xf32>
    %317 = vector.shape_cast %316 : vector<1x8x128xf32> to vector<8x128xf32>
    %318 = vector.shape_cast %315 : vector<8x128xf32> to vector<1x8x128xf32>
    tpu.vector_store %arg10[%c6_100, %c0_101, %c0_102], %318 {strides = array<i32>} : memref<7x8x128xf32, #tpu.memory_space<vmem>>, vector<1x8x128xf32>,
    return
  }
  func.func @transform_0(%arg0: i32, %arg1: memref<8xi32, #tpu.memory_space<smem>>) -> (i32, i32, i32) {
    %c0_i32 = arith.constant 0 : i32
    %c0_i32_0 = arith.constant 0 : i32
    %c0_i32_1 = arith.constant 0 : i32
    %c0_i32_2 = arith.constant 0 : i32
    return %c0_i32, %c0_i32_0, %c0_i32_1 : i32, i32, i32
  }
  func.func @transform_1(%arg0: i32, %arg1: memref<8xi32, #tpu.memory_space<smem>>) -> (i32, i32) {
    %c0_i32 = arith.constant 0 : i32
    %c0_i32_0 = arith.constant 0 : i32
    %c0_i32_1 = arith.constant 0 : i32
    return %c0_i32, %c0_i32_0 : i32, i32
  }
  func.func @transform_2(%arg0: i32, %arg1: memref<8xi32, #tpu.memory_space<smem>>) -> (i32, i32) {
    %c0_i32 = arith.constant 0 : i32
    %c0_i32_0 = arith.constant 0 : i32
    %c0_i32_1 = arith.constant 0 : i32
    return %c0_i32, %c0_i32_0 : i32, i32
  }
  func.func @transform_3(%arg0: i32, %arg1: memref<8xi32, #tpu.memory_space<smem>>) -> (i32, i32) {
    %c0_i32 = arith.constant 0 : i32
    %c0_i32_0 = arith.constant 0 : i32
    %c0_i32_1 = arith.constant 0 : i32
    return %c0_i32, %c0_i32_0 : i32, i32
  }
  func.func @transform_4(%arg0: i32, %arg1: memref<8xi32, #tpu.memory_space<smem>>) -> (i32, i32) {
    %c0_i32 = arith.constant 0 : i32
    %c0_i32_0 = arith.constant 0 : i32
    %c0_i32_1 = arith.constant 0 : i32
    return %c0_i32, %c0_i32_0 : i32, i32
  }
  func.func @transform_5(%arg0: i32, %arg1: memref<8xi32, #tpu.memory_space<smem>>) -> (i32, i32) {
    %c0_i32 = arith.constant 0 : i32
    %c0_i32_0 = arith.constant 0 : i32
    %c0_i32_1 = arith.constant 0 : i32
    return %c0_i32, %c0_i32_0 : i32, i32
  }
  func.func @transform_6(%arg0: i32, %arg1: memref<8xi32, #tpu.memory_space<smem>>) -> (i32, i32) {
    %c0_i32 = arith.constant 0 : i32
    %c0_i32_0 = arith.constant 0 : i32
    %c0_i32_1 = arith.constant 0 : i32
    return %c0_i32, %c0_i32_0 : i32, i32
  }
  func.func @transform_7(%arg0: i32, %arg1: memref<8xi32, #tpu.memory_space<smem>>) -> (i32, i32) {
    %c0_i32 = arith.constant 0 : i32
    %c0_i32_0 = arith.constant 0 : i32
    %c0_i32_1 = arith.constant 0 : i32
    return %c0_i32, %c0_i32_0 : i32, i32
  }
  func.func @transform_8(%arg0: i32, %arg1: memref<8xi32, #tpu.memory_space<smem>>) -> (i32, i32, i32) {
    %c0_i32 = arith.constant 0 : i32
    %c0_i32_0 = arith.constant 0 : i32
    %c0_i32_1 = arith.constant 0 : i32
    %c0_i32_2 = arith.constant 0 : i32
    return %c0_i32, %c0_i32_0, %c0_i32_1 : i32, i32, i32
  }
}

module attributes {stable_mosaic.version = 11 : i64} {
  func.func @_encoder_kernel(%arg0: i32, %arg1: memref<6x8x512xf32, #tpu.memory_space<vmem>>, %arg2: memref<128x512xbf16, #tpu.memory_space<vmem>>, %arg3: memref<8x128xbf16, #tpu.memory_space<vmem>>, %arg4: memref<8x128xf32, #tpu.memory_space<vmem>>) attributes {dimension_semantics = [#tpu.dimension_semantics<arbitrary>], iteration_bounds = array<i64: 1>, scalar_prefetch = 0 : i64, scratch_operands = 0 : i64, tpu.core_type = #tpu.core_type<tc>, window_params = [{pipeline_mode = #tpu.pipeline_mode<synchronous>, transform_indices = @transform_0, window_bounds = array<i64: 6, 8, 512>}, {pipeline_mode = #tpu.pipeline_mode<synchronous>, transform_indices = @transform_1, window_bounds = array<i64: 128, 512>}, {pipeline_mode = #tpu.pipeline_mode<synchronous>, transform_indices = @transform_2, window_bounds = array<i64: 8, 128>}, {pipeline_mode = #tpu.pipeline_mode<synchronous>, transform_indices = @transform_3, window_bounds = array<i64: 8, 128>}]} {
    %c0 = arith.constant 0 : index
    %c0_0 = arith.constant 0 : index
    %0 = vector.load %arg2[%c0, %c0_0] : memref<128x512xbf16, #tpu.memory_space<vmem>>, vector<128x512xbf16>
    %cst = arith.constant 0.000000e+00 : bf16
    %1 = vector.broadcast %cst : bf16 to vector<8x128xbf16>
    %cst_1 = arith.constant 0.000000e+00 : f32
    %2 = vector.broadcast %cst_1 : f32 to vector<8x128xf32>
    %c0_2 = arith.constant 0 : index
    %c0_3 = arith.constant 0 : index
    %c0_4 = arith.constant 0 : index
    %3 = vector.load %arg1[%c0_2, %c0_3, %c0_4] : memref<6x8x512xf32, #tpu.memory_space<vmem>>, vector<1x8x512xf32>
    %4 = vector.shape_cast %3 : vector<1x8x512xf32> to vector<8x512xf32>
    %cst_5 = arith.constant dense<0.000000e+00> : vector<8x512xf32>
    %5 = tpu.matmul %1, %0, %cst_5 {dimension_numbers = #tpu.dot_dimension_numbers<[1], [0], [0], [1], [0, 0, 1, 1], [], []>} : vector<8x128xbf16>, vector<128x512xbf16>, vector<8x512xf32> -> vector<8x512xf32>
    %6 = arith.addf %4, %5 : vector<8x512xf32>
    %7 = vector.extract_strided_slice %6 {offsets = [0, 0], sizes = [8, 384], strides = [1, 1]} : vector<8x512xf32> to vector<8x384xf32>
    %8 = arith.negf %7 : vector<8x384xf32>
    %9 = math.exp %8 : vector<8x384xf32>
    %cst_6 = arith.constant 1.000000e+00 : f32
    %10 = vector.broadcast %cst_6 : f32 to vector<8x384xf32>
    %11 = arith.addf %10, %9 : vector<8x384xf32>
    %12 = arith.divf %10, %11 : vector<8x384xf32>
    %13 = vector.extract_strided_slice %6 {offsets = [0, 384], sizes = [8, 128], strides = [1, 1]} : vector<8x512xf32> to vector<8x128xf32>
    %14 = math.tanh %13 : vector<8x128xf32>
    %15 = vector.extract_strided_slice %12 {offsets = [0, 128], sizes = [8, 128], strides = [1, 1]} : vector<8x384xf32> to vector<8x128xf32>
    %16 = arith.mulf %15, %2 : vector<8x128xf32>
    %17 = vector.extract_strided_slice %12 {offsets = [0, 0], sizes = [8, 128], strides = [1, 1]} : vector<8x384xf32> to vector<8x128xf32>
    %18 = arith.mulf %17, %14 : vector<8x128xf32>
    %19 = arith.addf %16, %18 : vector<8x128xf32>
    %20 = vector.extract_strided_slice %12 {offsets = [0, 256], sizes = [8, 128], strides = [1, 1]} : vector<8x384xf32> to vector<8x128xf32>
    %21 = math.tanh %19 : vector<8x128xf32>
    %22 = arith.mulf %20, %21 : vector<8x128xf32>
    %23 = arith.truncf %22 : vector<8x128xf32> to vector<8x128xbf16>
    %c1 = arith.constant 1 : index
    %c0_7 = arith.constant 0 : index
    %c0_8 = arith.constant 0 : index
    %24 = vector.load %arg1[%c1, %c0_7, %c0_8] : memref<6x8x512xf32, #tpu.memory_space<vmem>>, vector<1x8x512xf32>
    %25 = vector.shape_cast %24 : vector<1x8x512xf32> to vector<8x512xf32>
    %cst_9 = arith.constant dense<0.000000e+00> : vector<8x512xf32>
    %26 = tpu.matmul %23, %0, %cst_9 {dimension_numbers = #tpu.dot_dimension_numbers<[1], [0], [0], [1], [0, 0, 1, 1], [], []>} : vector<8x128xbf16>, vector<128x512xbf16>, vector<8x512xf32> -> vector<8x512xf32>
    %27 = arith.addf %25, %26 : vector<8x512xf32>
    %28 = vector.extract_strided_slice %27 {offsets = [0, 0], sizes = [8, 384], strides = [1, 1]} : vector<8x512xf32> to vector<8x384xf32>
    %29 = arith.negf %28 : vector<8x384xf32>
    %30 = math.exp %29 : vector<8x384xf32>
    %cst_10 = arith.constant 1.000000e+00 : f32
    %31 = vector.broadcast %cst_10 : f32 to vector<8x384xf32>
    %32 = arith.addf %31, %30 : vector<8x384xf32>
    %33 = arith.divf %31, %32 : vector<8x384xf32>
    %34 = vector.extract_strided_slice %27 {offsets = [0, 384], sizes = [8, 128], strides = [1, 1]} : vector<8x512xf32> to vector<8x128xf32>
    %35 = math.tanh %34 : vector<8x128xf32>
    %36 = vector.extract_strided_slice %33 {offsets = [0, 128], sizes = [8, 128], strides = [1, 1]} : vector<8x384xf32> to vector<8x128xf32>
    %37 = arith.mulf %36, %19 : vector<8x128xf32>
    %38 = vector.extract_strided_slice %33 {offsets = [0, 0], sizes = [8, 128], strides = [1, 1]} : vector<8x384xf32> to vector<8x128xf32>
    %39 = arith.mulf %38, %35 : vector<8x128xf32>
    %40 = arith.addf %37, %39 : vector<8x128xf32>
    %41 = vector.extract_strided_slice %33 {offsets = [0, 256], sizes = [8, 128], strides = [1, 1]} : vector<8x384xf32> to vector<8x128xf32>
    %42 = math.tanh %40 : vector<8x128xf32>
    %43 = arith.mulf %41, %42 : vector<8x128xf32>
    %44 = arith.truncf %43 : vector<8x128xf32> to vector<8x128xbf16>
    %c2 = arith.constant 2 : index
    %c0_11 = arith.constant 0 : index
    %c0_12 = arith.constant 0 : index
    %45 = vector.load %arg1[%c2, %c0_11, %c0_12] : memref<6x8x512xf32, #tpu.memory_space<vmem>>, vector<1x8x512xf32>
    %46 = vector.shape_cast %45 : vector<1x8x512xf32> to vector<8x512xf32>
    %cst_13 = arith.constant dense<0.000000e+00> : vector<8x512xf32>
    %47 = tpu.matmul %44, %0, %cst_13 {dimension_numbers = #tpu.dot_dimension_numbers<[1], [0], [0], [1], [0, 0, 1, 1], [], []>} : vector<8x128xbf16>, vector<128x512xbf16>, vector<8x512xf32> -> vector<8x512xf32>
    %48 = arith.addf %46, %47 : vector<8x512xf32>
    %49 = vector.extract_strided_slice %48 {offsets = [0, 0], sizes = [8, 384], strides = [1, 1]} : vector<8x512xf32> to vector<8x384xf32>
    %50 = arith.negf %49 : vector<8x384xf32>
    %51 = math.exp %50 : vector<8x384xf32>
    %cst_14 = arith.constant 1.000000e+00 : f32
    %52 = vector.broadcast %cst_14 : f32 to vector<8x384xf32>
    %53 = arith.addf %52, %51 : vector<8x384xf32>
    %54 = arith.divf %52, %53 : vector<8x384xf32>
    %55 = vector.extract_strided_slice %48 {offsets = [0, 384], sizes = [8, 128], strides = [1, 1]} : vector<8x512xf32> to vector<8x128xf32>
    %56 = math.tanh %55 : vector<8x128xf32>
    %57 = vector.extract_strided_slice %54 {offsets = [0, 128], sizes = [8, 128], strides = [1, 1]} : vector<8x384xf32> to vector<8x128xf32>
    %58 = arith.mulf %57, %40 : vector<8x128xf32>
    %59 = vector.extract_strided_slice %54 {offsets = [0, 0], sizes = [8, 128], strides = [1, 1]} : vector<8x384xf32> to vector<8x128xf32>
    %60 = arith.mulf %59, %56 : vector<8x128xf32>
    %61 = arith.addf %58, %60 : vector<8x128xf32>
    %62 = vector.extract_strided_slice %54 {offsets = [0, 256], sizes = [8, 128], strides = [1, 1]} : vector<8x384xf32> to vector<8x128xf32>
    %63 = math.tanh %61 : vector<8x128xf32>
    %64 = arith.mulf %62, %63 : vector<8x128xf32>
    %65 = arith.truncf %64 : vector<8x128xf32> to vector<8x128xbf16>
    %c3 = arith.constant 3 : index
    %c0_15 = arith.constant 0 : index
    %c0_16 = arith.constant 0 : index
    %66 = vector.load %arg1[%c3, %c0_15, %c0_16] : memref<6x8x512xf32, #tpu.memory_space<vmem>>, vector<1x8x512xf32>
    %67 = vector.shape_cast %66 : vector<1x8x512xf32> to vector<8x512xf32>
    %cst_17 = arith.constant dense<0.000000e+00> : vector<8x512xf32>
    %68 = tpu.matmul %65, %0, %cst_17 {dimension_numbers = #tpu.dot_dimension_numbers<[1], [0], [0], [1], [0, 0, 1, 1], [], []>} : vector<8x128xbf16>, vector<128x512xbf16>, vector<8x512xf32> -> vector<8x512xf32>
    %69 = arith.addf %67, %68 : vector<8x512xf32>
    %70 = vector.extract_strided_slice %69 {offsets = [0, 0], sizes = [8, 384], strides = [1, 1]} : vector<8x512xf32> to vector<8x384xf32>
    %71 = arith.negf %70 : vector<8x384xf32>
    %72 = math.exp %71 : vector<8x384xf32>
    %cst_18 = arith.constant 1.000000e+00 : f32
    %73 = vector.broadcast %cst_18 : f32 to vector<8x384xf32>
    %74 = arith.addf %73, %72 : vector<8x384xf32>
    %75 = arith.divf %73, %74 : vector<8x384xf32>
    %76 = vector.extract_strided_slice %69 {offsets = [0, 384], sizes = [8, 128], strides = [1, 1]} : vector<8x512xf32> to vector<8x128xf32>
    %77 = math.tanh %76 : vector<8x128xf32>
    %78 = vector.extract_strided_slice %75 {offsets = [0, 128], sizes = [8, 128], strides = [1, 1]} : vector<8x384xf32> to vector<8x128xf32>
    %79 = arith.mulf %78, %61 : vector<8x128xf32>
    %80 = vector.extract_strided_slice %75 {offsets = [0, 0], sizes = [8, 128], strides = [1, 1]} : vector<8x384xf32> to vector<8x128xf32>
    %81 = arith.mulf %80, %77 : vector<8x128xf32>
    %82 = arith.addf %79, %81 : vector<8x128xf32>
    %83 = vector.extract_strided_slice %75 {offsets = [0, 256], sizes = [8, 128], strides = [1, 1]} : vector<8x384xf32> to vector<8x128xf32>
    %84 = math.tanh %82 : vector<8x128xf32>
    %85 = arith.mulf %83, %84 : vector<8x128xf32>
    %86 = arith.truncf %85 : vector<8x128xf32> to vector<8x128xbf16>
    %c4 = arith.constant 4 : index
    %c0_19 = arith.constant 0 : index
    %c0_20 = arith.constant 0 : index
    %87 = vector.load %arg1[%c4, %c0_19, %c0_20] : memref<6x8x512xf32, #tpu.memory_space<vmem>>, vector<1x8x512xf32>
    %88 = vector.shape_cast %87 : vector<1x8x512xf32> to vector<8x512xf32>
    %cst_21 = arith.constant dense<0.000000e+00> : vector<8x512xf32>
    %89 = tpu.matmul %86, %0, %cst_21 {dimension_numbers = #tpu.dot_dimension_numbers<[1], [0], [0], [1], [0, 0, 1, 1], [], []>} : vector<8x128xbf16>, vector<128x512xbf16>, vector<8x512xf32> -> vector<8x512xf32>
    %90 = arith.addf %88, %89 : vector<8x512xf32>
    %91 = vector.extract_strided_slice %90 {offsets = [0, 0], sizes = [8, 384], strides = [1, 1]} : vector<8x512xf32> to vector<8x384xf32>
    %92 = arith.negf %91 : vector<8x384xf32>
    %93 = math.exp %92 : vector<8x384xf32>
    %cst_22 = arith.constant 1.000000e+00 : f32
    %94 = vector.broadcast %cst_22 : f32 to vector<8x384xf32>
    %95 = arith.addf %94, %93 : vector<8x384xf32>
    %96 = arith.divf %94, %95 : vector<8x384xf32>
    %97 = vector.extract_strided_slice %90 {offsets = [0, 384], sizes = [8, 128], strides = [1, 1]} : vector<8x512xf32> to vector<8x128xf32>
    %98 = math.tanh %97 : vector<8x128xf32>
    %99 = vector.extract_strided_slice %96 {offsets = [0, 128], sizes = [8, 128], strides = [1, 1]} : vector<8x384xf32> to vector<8x128xf32>
    %100 = arith.mulf %99, %82 : vector<8x128xf32>
    %101 = vector.extract_strided_slice %96 {offsets = [0, 0], sizes = [8, 128], strides = [1, 1]} : vector<8x384xf32> to vector<8x128xf32>
    %102 = arith.mulf %101, %98 : vector<8x128xf32>
    %103 = arith.addf %100, %102 : vector<8x128xf32>
    %104 = vector.extract_strided_slice %96 {offsets = [0, 256], sizes = [8, 128], strides = [1, 1]} : vector<8x384xf32> to vector<8x128xf32>
    %105 = math.tanh %103 : vector<8x128xf32>
    %106 = arith.mulf %104, %105 : vector<8x128xf32>
    %107 = arith.truncf %106 : vector<8x128xf32> to vector<8x128xbf16>
    %c5 = arith.constant 5 : index
    %c0_23 = arith.constant 0 : index
    %c0_24 = arith.constant 0 : index
    %108 = vector.load %arg1[%c5, %c0_23, %c0_24] : memref<6x8x512xf32, #tpu.memory_space<vmem>>, vector<1x8x512xf32>
    %109 = vector.shape_cast %108 : vector<1x8x512xf32> to vector<8x512xf32>
    %cst_25 = arith.constant dense<0.000000e+00> : vector<8x512xf32>
    %110 = tpu.matmul %107, %0, %cst_25 {dimension_numbers = #tpu.dot_dimension_numbers<[1], [0], [0], [1], [0, 0, 1, 1], [], []>} : vector<8x128xbf16>, vector<128x512xbf16>, vector<8x512xf32> -> vector<8x512xf32>
    %111 = arith.addf %109, %110 : vector<8x512xf32>
    %112 = vector.extract_strided_slice %111 {offsets = [0, 0], sizes = [8, 384], strides = [1, 1]} : vector<8x512xf32> to vector<8x384xf32>
    %113 = arith.negf %112 : vector<8x384xf32>
    %114 = math.exp %113 : vector<8x384xf32>
    %cst_26 = arith.constant 1.000000e+00 : f32
    %115 = vector.broadcast %cst_26 : f32 to vector<8x384xf32>
    %116 = arith.addf %115, %114 : vector<8x384xf32>
    %117 = arith.divf %115, %116 : vector<8x384xf32>
    %118 = vector.extract_strided_slice %111 {offsets = [0, 384], sizes = [8, 128], strides = [1, 1]} : vector<8x512xf32> to vector<8x128xf32>
    %119 = math.tanh %118 : vector<8x128xf32>
    %120 = vector.extract_strided_slice %117 {offsets = [0, 128], sizes = [8, 128], strides = [1, 1]} : vector<8x384xf32> to vector<8x128xf32>
    %121 = arith.mulf %120, %103 : vector<8x128xf32>
    %122 = vector.extract_strided_slice %117 {offsets = [0, 0], sizes = [8, 128], strides = [1, 1]} : vector<8x384xf32> to vector<8x128xf32>
    %123 = arith.mulf %122, %119 : vector<8x128xf32>
    %124 = arith.addf %121, %123 : vector<8x128xf32>
    %125 = vector.extract_strided_slice %117 {offsets = [0, 256], sizes = [8, 128], strides = [1, 1]} : vector<8x384xf32> to vector<8x128xf32>
    %126 = math.tanh %124 : vector<8x128xf32>
    %127 = arith.mulf %125, %126 : vector<8x128xf32>
    %128 = arith.truncf %127 : vector<8x128xf32> to vector<8x128xbf16>
    %c0_27 = arith.constant 0 : index
    %c0_28 = arith.constant 0 : index
    %129 = vector.load %arg3[%c0_27, %c0_28] : memref<8x128xbf16, #tpu.memory_space<vmem>>, vector<8x128xbf16>
    tpu.vector_store %arg3[%c0_27, %c0_28], %128 {strides = array<i32>} : memref<8x128xbf16, #tpu.memory_space<vmem>>, vector<8x128xbf16>,
    %c0_29 = arith.constant 0 : index
    %c0_30 = arith.constant 0 : index
    %130 = vector.load %arg4[%c0_29, %c0_30] : memref<8x128xf32, #tpu.memory_space<vmem>>, vector<8x128xf32>
    tpu.vector_store %arg4[%c0_29, %c0_30], %124 {strides = array<i32>} : memref<8x128xf32, #tpu.memory_space<vmem>>, vector<8x128xf32>,
    return
  }
  func.func @transform_0(%arg0: i32) -> (i32, i32, i32) {
    %c0_i32 = arith.constant 0 : i32
    %c0_i32_0 = arith.constant 0 : i32
    %c0_i32_1 = arith.constant 0 : i32
    %c0_i32_2 = arith.constant 0 : i32
    return %c0_i32, %c0_i32_0, %c0_i32_1 : i32, i32, i32
  }
  func.func @transform_1(%arg0: i32) -> (i32, i32) {
    %c0_i32 = arith.constant 0 : i32
    %c0_i32_0 = arith.constant 0 : i32
    %c0_i32_1 = arith.constant 0 : i32
    return %c0_i32, %c0_i32_0 : i32, i32
  }
  func.func @transform_2(%arg0: i32) -> (i32, i32) {
    %c0_i32 = arith.constant 0 : i32
    %c0_i32_0 = arith.constant 0 : i32
    %c0_i32_1 = arith.constant 0 : i32
    return %c0_i32, %c0_i32_0 : i32, i32
  }
  func.func @transform_3(%arg0: i32) -> (i32, i32) {
    %c0_i32 = arith.constant 0 : i32
    %c0_i32_0 = arith.constant 0 : i32
    %c0_i32_1 = arith.constant 0 : i32
    return %c0_i32, %c0_i32_0 : i32, i32
  }
}

</mosaic_0001>

<llo_original>
// kernel: seq2seq_forward.2
$region0: #{seq2seq_forward.2}
  #allocation0 [shape = 'u32[]', space=smem, size = 0x4, offset = 0x4, fixed_abs, tag = 'smem constant byte address 0x4 - core index']
  #allocation1 [shape = 'u32[144,128]{1,0:T(1,128)}', space=vmem, size = 0x12000, scoped, tag = 'internal scratch']
  %s0 = inlined_call_operand.vmem [shape: f32[6,8,512], index: 0, kind: input, shape index: {}]
  %s1 = inlined_call_operand.vmem [shape: bf16[128,512], index: 1, kind: input, shape index: {}]
  %s2 = inlined_call_operand.vmem [shape: bf16[8,128], index: 2, kind: output, shape index: {0}]
  %s3 = inlined_call_operand.vmem [shape: f32[8,128], index: 3, kind: output, shape index: {1}]
  %4 = xla_tuple %s2, %s3
  %s5 = sld [smem:[#allocation0]]
  $region26: #{seq2seq_forward.2} parent=0
    _
  %s7 = ssub.s32 1, %s5
  %s8 = scalar_select 0, %s7, %s5
  // Predicated region
  $region2: #{seq2seq_forward.2} parent=0 // pred_check
    _
  $region3: #{seq2seq_forward.2} parent=0 // pred_check_branch
    %10 = sbr.rel (0) target = $region5
  $region4: #{seq2seq_forward.2} parent=0 // pred_region
    _
  $region5: #{seq2seq_forward.2} parent=0 // pred_fallthru
    _
  // Predicated region
  $region6: #{seq2seq_forward.2} parent=0 // pred_check
    _
  $region7: #{seq2seq_forward.2} parent=0 // pred_check_branch
    %12 = sbr.rel (0) target = $region9
  $region8: #{seq2seq_forward.2} parent=0 // pred_region
    _
  $region9: #{seq2seq_forward.2} parent=0 // pred_fallthru
    _
  %v14 = vld [vmem:[%s1] sm:$0xff]
  %v15 = vld [vmem:[%s1 + $0x8] sm:$0xff]
  %v16 = vld [vmem:[%s1 + $0x10] sm:$0xff]
  %v17 = vld [vmem:[%s1 + $0x18] sm:$0xff]
  %v18 = vld [vmem:[%s1 + $0x20] sm:$0xff]
  %v19 = vld [vmem:[%s1 + $0x28] sm:$0xff]
  %v20 = vld [vmem:[%s1 + $0x30] sm:$0xff]
  %v21 = vld [vmem:[%s1 + $0x38] sm:$0xff]
  %v22 = vld [vmem:[%s1 + $0x40] sm:$0xff]
  %v23 = vld [vmem:[%s1 + $0x48] sm:$0xff]
  %v24 = vld [vmem:[%s1 + $0x50] sm:$0xff]
  %v25 = vld [vmem:[%s1 + $0x58] sm:$0xff]
  %v26 = vld [vmem:[%s1 + $0x60] sm:$0xff]
  %v27 = vld [vmem:[%s1 + $0x68] sm:$0xff]
  %v28 = vld [vmem:[%s1 + $0x70] sm:$0xff]
  %v29 = vld [vmem:[%s1 + $0x78] sm:$0xff]
  %v30 = vld [vmem:[%s1 + $0x80] sm:$0xff]
  %v31 = vld [vmem:[%s1 + $0x88] sm:$0xff]
  %v32 = vld [vmem:[%s1 + $0x90] sm:$0xff]
  %v33 = vld [vmem:[%s1 + $0x98] sm:$0xff]
  %v34 = vld [vmem:[%s1 + $0xa0] sm:$0xff]
  %v35 = vld [vmem:[%s1 + $0xa8] sm:$0xff]
  %v36 = vld [vmem:[%s1 + $0xb0] sm:$0xff]
  %v37 = vld [vmem:[%s1 + $0xb8] sm:$0xff]
  %v38 = vld [vmem:[%s1 + $0xc0] sm:$0xff]
  %v39 = vld [vmem:[%s1 + $0xc8] sm:$0xff]
  %v40 = vld [vmem:[%s1 + $0xd0] sm:$0xff]
  %v41 = vld [vmem:[%s1 + $0xd8] sm:$0xff]
  %v42 = vld [vmem:[%s1 + $0xe0] sm:$0xff]
  %v43 = vld [vmem:[%s1 + $0xe8] sm:$0xff]
  %v44 = vld [vmem:[%s1 + $0xf0] sm:$0xff]
  %v45 = vld [vmem:[%s1 + $0xf8] sm:$0xff]
  %v46 = vld [vmem:[%s0] sm:$0xff]
  %v47 = vld [vmem:[%s0 + $0x8] sm:$0xff]
  %v48 = vld [vmem:[%s0 + $0x10] sm:$0xff]
  %v49 = vld [vmem:[%s0 + $0x18] sm:$0xff]
  %v82 = vunpack.c.l.b16 %v14
  %v83 = vunpack.c.h.b16 %v14
  %v84 = vunpack.c.l.b16 %v15
  %v85 = vunpack.c.h.b16 %v15
  %v86 = vunpack.c.l.b16 %v16
  %v87 = vunpack.c.h.b16 %v16
  %v88 = vunpack.c.l.b16 %v17
  %v89 = vunpack.c.h.b16 %v17
  %v90 = vunpack.c.l.b16 %v18
  %v91 = vunpack.c.h.b16 %v18
  %v92 = vunpack.c.l.b16 %v19
  %v93 = vunpack.c.h.b16 %v19
  %v94 = vunpack.c.l.b16 %v20
  %v95 = vunpack.c.h.b16 %v20
  %v96 = vunpack.c.l.b16 %v21
  %v97 = vunpack.c.h.b16 %v21
  %v98 = vunpack.c.l.b16 %v22
  %v99 = vunpack.c.h.b16 %v22
  %v100 = vunpack.c.l.b16 %v23
  %v101 = vunpack.c.h.b16 %v23
  %v102 = vunpack.c.l.b16 %v24
  %v103 = vunpack.c.h.b16 %v24
  %v104 = vunpack.c.l.b16 %v25
  %v105 = vunpack.c.h.b16 %v25
  %v106 = vunpack.c.l.b16 %v26
  %v107 = vunpack.c.h.b16 %v26
  %v108 = vunpack.c.l.b16 %v27
  %v109 = vunpack.c.h.b16 %v27
  %v110 = vunpack.c.l.b16 %v28
  %v111 = vunpack.c.h.b16 %v28
  %v112 = vunpack.c.l.b16 %v29
  %v113 = vunpack.c.h.b16 %v29
  %v114 = vunpack.c.l.b16 %v30
  %v115 = vunpack.c.h.b16 %v30
  %v116 = vunpack.c.l.b16 %v31
  %v117 = vunpack.c.h.b16 %v31
  %v118 = vunpack.c.l.b16 %v32
  %v119 = vunpack.c.h.b16 %v32
  %v120 = vunpack.c.l.b16 %v33
  %v121 = vunpack.c.h.b16 %v33
  %v122 = vunpack.c.l.b16 %v34
  %v123 = vunpack.c.h.b16 %v34
  %v124 = vunpack.c.l.b16 %v35
  %v125 = vunpack.c.h.b16 %v35
  %v126 = vunpack.c.l.b16 %v36
  %v127 = vunpack.c.h.b16 %v36
  %v128 = vunpack.c.l.b16 %v37
  %v129 = vunpack.c.h.b16 %v37
  %v130 = vunpack.c.l.b16 %v38
  %v131 = vunpack.c.h.b16 %v38
  %v132 = vunpack.c.l.b16 %v39
  %v133 = vunpack.c.h.b16 %v39
  %v134 = vunpack.c.l.b16 %v40
  %v135 = vunpack.c.h.b16 %v40
  %v136 = vunpack.c.l.b16 %v41
  %v137 = vunpack.c.h.b16 %v41
  %v138 = vunpack.c.l.b16 %v42
  %v139 = vunpack.c.h.b16 %v42
  %v140 = vunpack.c.l.b16 %v43
  %v141 = vunpack.c.h.b16 %v43
  %v142 = vunpack.c.l.b16 %v44
  %v143 = vunpack.c.h.b16 %v44
  %v144 = vunpack.c.l.b16 %v45
  %v145 = vunpack.c.h.b16 %v45
  %v146 = vpack.c.b16 %v86, %v82
  %v147 = vpack.c.b16 %v87, %v83
  %v148 = vpack.c.b16 %v88, %v84
  %v149 = vpack.c.b16 %v89, %v85
  %v150 = vpack.c.b16 %v94, %v90
  %v151 = vpack.c.b16 %v95, %v91
  %v152 = vpack.c.b16 %v96, %v92
  %v153 = vpack.c.b16 %v97, %v93
  %v154 = vpack.c.b16 %v102, %v98
  %v155 = vpack.c.b16 %v103, %v99
  %v156 = vpack.c.b16 %v104, %v100
  %v157 = vpack.c.b16 %v105, %v101
  %v158 = vpack.c.b16 %v110, %v106
  %v159 = vpack.c.b16 %v111, %v107
  %v160 = vpack.c.b16 %v112, %v108
  %v161 = vpack.c.b16 %v113, %v109
  %v162 = vpack.c.b16 %v118, %v114
  %v163 = vpack.c.b16 %v119, %v115
  %v164 = vpack.c.b16 %v120, %v116
  %v165 = vpack.c.b16 %v121, %v117
  %v166 = vpack.c.b16 %v126, %v122
  %v167 = vpack.c.b16 %v127, %v123
  %v168 = vpack.c.b16 %v128, %v124
  %v169 = vpack.c.b16 %v129, %v125
  %v170 = vpack.c.b16 %v134, %v130
  %v171 = vpack.c.b16 %v135, %v131
  %v172 = vpack.c.b16 %v136, %v132
  %v173 = vpack.c.b16 %v137, %v133
  %v174 = vpack.c.b16 %v142, %v138
  %v175 = vpack.c.b16 %v143, %v139
  %v176 = vpack.c.b16 %v144, %v140
  %v177 = vpack.c.b16 %v145, %v141
  %210 = vmatprep.subr.bf16.mxu0 %v147
  %211 = vmatpush1.bf16.msra.mxu0 %v146
  %212 = vmatprep.subr.bf16.mxu0 %v151
  %213 = vmatpush1.bf16.msra.mxu0 %v150
  %214 = vmatprep.subr.bf16.mxu0 %v155
  %215 = vmatpush1.bf16.msra.mxu0 %v154
  %216 = vmatprep.subr.bf16.mxu0 %v159
  %217 = vmatpush1.bf16.msra.mxu0 %v158
  %218 = vmatprep.subr.bf16.mxu0 %v163
  %219 = vmatpush1.bf16.msra.mxu0 %v162
  %220 = vmatprep.subr.bf16.mxu0 %v167
  %221 = vmatpush1.bf16.msra.mxu0 %v166
  %222 = vmatprep.subr.bf16.mxu0 %v171
  %223 = vmatpush1.bf16.msra.mxu0 %v170
  %224 = vmatprep.subr.bf16.mxu0 %v175
  %225 = vmatpush1.bf16.msra.mxu0 %v174
  %226 = vmatprep.subr.bf16.mxu0 0
  %227 = vmatpush1.bf16.msra.mxu0 0
  %228 = vmatprep.subr.bf16.mxu0 0
  %229 = vmatpush1.bf16.msra.mxu0 0
  %230 = vmatprep.subr.bf16.mxu0 0
  %231 = vmatpush1.bf16.msra.mxu0 0
  %232 = vmatprep.subr.bf16.mxu0 0
  %233 = vmatpush1.bf16.msra.mxu0 0
  %234 = vmatprep.subr.bf16.mxu0 0
  %235 = vmatpush1.bf16.msra.mxu0 0
  %236 = vmatprep.subr.bf16.mxu0 0
  %237 = vmatpush1.bf16.msra.mxu0 0
  %238 = vmatprep.subr.bf16.mxu0 0
  %239 = vmatpush1.bf16.msra.mxu0 0
  %240 = vmatprep.subr.bf16.mxu0 0
  %241 = vmatpush1.bf16.msra.mxu0 0
  %242 = vmatprep.mubr.bf16.mxu0 0
  %243 = vmatmul.mubr.bf16.gmra.mrb[0].mxu0 0
  %v244 = vpop.f32.mrb[0].mxu0
  %v245 = vadd.f32 0.0, %v244
  %v246 = vpop.f32.mrb[0].mxu0
  %v247 = vadd.f32 0.0, %v246
  %v248 = vpop.f32.mrb[0].mxu0
  %v249 = vpop.f32.mrb[0].mxu0
  %250 = vdwg.mxu0
  %251 = vmatprep.subr.bf16.mxu0 %v149
  %252 = vmatpush1.bf16.msra.mxu0 %v148
  %253 = vmatprep.subr.bf16.mxu0 %v153
  %254 = vmatpush1.bf16.msra.mxu0 %v152
  %255 = vmatprep.subr.bf16.mxu0 %v157
  %256 = vmatpush1.bf16.msra.mxu0 %v156
  %257 = vmatprep.subr.bf16.mxu0 %v161
  %258 = vmatpush1.bf16.msra.mxu0 %v160
  %259 = vmatprep.subr.bf16.mxu0 %v165
  %260 = vmatpush1.bf16.msra.mxu0 %v164
  %261 = vmatprep.subr.bf16.mxu0 %v169
  %262 = vmatpush1.bf16.msra.mxu0 %v168
  %263 = vmatprep.subr.bf16.mxu0 %v173
  %264 = vmatpush1.bf16.msra.mxu0 %v172
  %265 = vmatprep.subr.bf16.mxu0 %v177
  %266 = vmatpush1.bf16.msra.mxu0 %v176
  %267 = vmatprep.subr.bf16.mxu0 0
  %268 = vmatpush1.bf16.msra.mxu0 0
  %269 = vmatprep.subr.bf16.mxu0 0
  %270 = vmatpush1.bf16.msra.mxu0 0
  %271 = vmatprep.subr.bf16.mxu0 0
  %272 = vmatpush1.bf16.msra.mxu0 0
  %273 = vmatprep.subr.bf16.mxu0 0
  %274 = vmatpush1.bf16.msra.mxu0 0
  %275 = vmatprep.subr.bf16.mxu0 0
  %276 = vmatpush1.bf16.msra.mxu0 0
  %277 = vmatprep.subr.bf16.mxu0 0
  %278 = vmatpush1.bf16.msra.mxu0 0
  %279 = vmatprep.subr.bf16.mxu0 0
  %280 = vmatpush1.bf16.msra.mxu0 0
  %281 = vmatprep.subr.bf16.mxu0 0
  %282 = vmatpush1.bf16.msra.mxu0 0
  %283 = vmatprep.mubr.bf16.mxu0 0
  %284 = vmatmul.mubr.bf16.gmra.mrb[0].mxu0 0
  %v285 = vpop.f32.mrb[0].mxu0
  %v286 = vadd.f32 0.0, %v285
  %v287 = vpop.f32.mrb[0].mxu0
  %v288 = vadd.f32 0.0, %v287
  %v289 = vpop.f32.mrb[0].mxu0
  %v290 = vpop.f32.mrb[0].mxu0
  %291 = vdwg.mxu0
  %v292 = vadd.f32 %v46, %v245
  %v293 = vadd.f32 %v47, %v247
  %v294 = vadd.f32 %v48, %v286
  %v295 = vadd.f32 %v49, %v288
  %v296 = vxor.u32 %v292, 2147483648
  %v297 = vxor.u32 %v293, 2147483648
  %v298 = vxor.u32 %v294, 2147483648
  %v299 = vmul.f32 %v296, 1.442695
  %v300 = vpow.pop %v299
  %v301 = vmul.f32 %v297, 1.442695
  %v302 = vpow.pop %v301
  %v303 = vmul.f32 %v298, 1.442695
  %v304 = vpow.pop %v303
  %v305 = vadd.f32 %v300, 1.0
  %v306 = vadd.f32 %v302, 1.0
  %v307 = vadd.f32 %v304, 1.0
  %v308 = vrcp.pop %v305
  %v309 = vmul.f32 1.0, %v308
  %v310 = vrcp.pop %v306
  %v311 = vmul.f32 1.0, %v310
  %v312 = vrcp.pop %v307
  %v313 = vmul.f32 1.0, %v312
  %v314 = vtanh.pop %v295
  %v315 = vmul.f32 %v311, 0.0
  %v316 = vmul.f32 %v309, %v314
  %v317 = vadd.f32 %v315, %v316
  %v318 = vtanh.pop %v317
  %v319 = vmul.f32 %v313, %v318
  %v320 = vpack.c.bf16 %v319, %v319
  %s321 = scalar_lea.vmem %s0, 32
  %v322 = vld [vmem:[%s321] sm:$0xff]
  %v323 = vld [vmem:[%s321 + $0x8] sm:$0xff]
  %v324 = vld [vmem:[%s321 + $0x10] sm:$0xff]
  %v325 = vld [vmem:[%s321 + $0x18] sm:$0xff]
  %326 = vmatprep.subr.bf16.mxu0 %v147
  %327 = vmatpush1.bf16.msra.mxu0 %v146
  %328 = vmatprep.subr.bf16.mxu0 %v151
  %329 = vmatpush1.bf16.msra.mxu0 %v150
  %330 = vmatprep.subr.bf16.mxu0 %v155
  %331 = vmatpush1.bf16.msra.mxu0 %v154
  %332 = vmatprep.subr.bf16.mxu0 %v159
  %333 = vmatpush1.bf16.msra.mxu0 %v158
  %334 = vmatprep.subr.bf16.mxu0 %v163
  %335 = vmatpush1.bf16.msra.mxu0 %v162
  %336 = vmatprep.subr.bf16.mxu0 %v167
  %337 = vmatpush1.bf16.msra.mxu0 %v166
  %338 = vmatprep.subr.bf16.mxu0 %v171
  %339 = vmatpush1.bf16.msra.mxu0 %v170
  %340 = vmatprep.subr.bf16.mxu0 %v175
  %341 = vmatpush1.bf16.msra.mxu0 %v174
  %342 = vmatprep.subr.bf16.mxu0 0
  %343 = vmatpush1.bf16.msra.mxu0 0
  %344 = vmatprep.subr.bf16.mxu0 0
  %345 = vmatpush1.bf16.msra.mxu0 0
  %346 = vmatprep.subr.bf16.mxu0 0
  %347 = vmatpush1.bf16.msra.mxu0 0
  %348 = vmatprep.subr.bf16.mxu0 0
  %349 = vmatpush1.bf16.msra.mxu0 0
  %350 = vmatprep.subr.bf16.mxu0 0
  %351 = vmatpush1.bf16.msra.mxu0 0
  %352 = vmatprep.subr.bf16.mxu0 0
  %353 = vmatpush1.bf16.msra.mxu0 0
  %354 = vmatprep.subr.bf16.mxu0 0
  %355 = vmatpush1.bf16.msra.mxu0 0
  %356 = vmatprep.subr.bf16.mxu0 0
  %357 = vmatpush1.bf16.msra.mxu0 0
  %358 = vmatprep.mubr.bf16.mxu0 0
  %359 = vmatmul.mubr.bf16.gmra.mrb[0].mxu0 %v320
  %v360 = vpop.f32.mrb[0].mxu0
  %v361 = vadd.f32 0.0, %v360
  %v362 = vpop.f32.mrb[0].mxu0
  %v363 = vadd.f32 0.0, %v362
  %v364 = vpop.f32.mrb[0].mxu0
  %v365 = vpop.f32.mrb[0].mxu0
  %366 = vdwg.mxu0
  %367 = vmatprep.subr.bf16.mxu0 %v149
  %368 = vmatpush1.bf16.msra.mxu0 %v148
  %369 = vmatprep.subr.bf16.mxu0 %v153
  %370 = vmatpush1.bf16.msra.mxu0 %v152
  %371 = vmatprep.subr.bf16.mxu0 %v157
  %372 = vmatpush1.bf16.msra.mxu0 %v156
  %373 = vmatprep.subr.bf16.mxu0 %v161
  %374 = vmatpush1.bf16.msra.mxu0 %v160
  %375 = vmatprep.subr.bf16.mxu0 %v165
  %376 = vmatpush1.bf16.msra.mxu0 %v164
  %377 = vmatprep.subr.bf16.mxu0 %v169
  %378 = vmatpush1.bf16.msra.mxu0 %v168
  %379 = vmatprep.subr.bf16.mxu0 %v173
  %380 = vmatpush1.bf16.msra.mxu0 %v172
  %381 = vmatprep.subr.bf16.mxu0 %v177
  %382 = vmatpush1.bf16.msra.mxu0 %v176
  %383 = vmatprep.subr.bf16.mxu0 0
  %384 = vmatpush1.bf16.msra.mxu0 0
  %385 = vmatprep.subr.bf16.mxu0 0
  %386 = vmatpush1.bf16.msra.mxu0 0
  %387 = vmatprep.subr.bf16.mxu0 0
  %388 = vmatpush1.bf16.msra.mxu0 0
  %389 = vmatprep.subr.bf16.mxu0 0
  %390 = vmatpush1.bf16.msra.mxu0 0
  %391 = vmatprep.subr.bf16.mxu0 0
  %392 = vmatpush1.bf16.msra.mxu0 0
  %393 = vmatprep.subr.bf16.mxu0 0
  %394 = vmatpush1.bf16.msra.mxu0 0
  %395 = vmatprep.subr.bf16.mxu0 0
  %396 = vmatpush1.bf16.msra.mxu0 0
  %397 = vmatprep.subr.bf16.mxu0 0
  %398 = vmatpush1.bf16.msra.mxu0 0
  %399 = vmatprep.mubr.bf16.mxu0 0
  %400 = vmatmul.mubr.bf16.gmra.mrb[0].mxu0 %v320
  %v401 = vpop.f32.mrb[0].mxu0
  %v402 = vadd.f32 0.0, %v401
  %v403 = vpop.f32.mrb[0].mxu0
  %v404 = vadd.f32 0.0, %v403
  %v405 = vpop.f32.mrb[0].mxu0
  %v406 = vpop.f32.mrb[0].mxu0
  %407 = vdwg.mxu0
  %v408 = vadd.f32 %v322, %v361
  %v409 = vadd.f32 %v323, %v363
  %v410 = vadd.f32 %v324, %v402
  %v411 = vadd.f32 %v325, %v404
  %v412 = vxor.u32 %v408, 2147483648
  %v413 = vxor.u32 %v409, 2147483648
  %v414 = vxor.u32 %v410, 2147483648
  %v415 = vmul.f32 %v412, 1.442695
  %v416 = vpow.pop %v415
  %v417 = vmul.f32 %v413, 1.442695
  %v418 = vpow.pop %v417
  %v419 = vmul.f32 %v414, 1.442695
  %v420 = vpow.pop %v419
  %v421 = vadd.f32 %v416, 1.0
  %v422 = vadd.f32 %v418, 1.0
  %v423 = vadd.f32 %v420, 1.0
  %v424 = vrcp.pop %v421
  %v425 = vmul.f32 1.0, %v424
  %v426 = vrcp.pop %v422
  %v427 = vmul.f32 1.0, %v426
  %v428 = vrcp.pop %v423
  %v429 = vmul.f32 1.0, %v428
  %v430 = vtanh.pop %v411
  %v431 = vmul.f32 %v427, %v317
  %v432 = vmul.f32 %v425, %v430
  %v433 = vadd.f32 %v431, %v432
  %v434 = vtanh.pop %v433
  %v435 = vmul.f32 %v429, %v434
  %v436 = vpack.c.bf16 %v435, %v435
  %s437 = scalar_lea.vmem %s0, 64
  %v438 = vld [vmem:[%s437] sm:$0xff]
  %v439 = vld [vmem:[%s437 + $0x8] sm:$0xff]
  %v440 = vld [vmem:[%s437 + $0x10] sm:$0xff]
  %v441 = vld [vmem:[%s437 + $0x18] sm:$0xff]
  %442 = vmatprep.subr.bf16.mxu0 %v147
  %443 = vmatpush1.bf16.msra.mxu0 %v146
  %444 = vmatprep.subr.bf16.mxu0 %v151
  %445 = vmatpush1.bf16.msra.mxu0 %v150
  %446 = vmatprep.subr.bf16.mxu0 %v155
  %447 = vmatpush1.bf16.msra.mxu0 %v154
  %448 = vmatprep.subr.bf16.mxu0 %v159
  %449 = vmatpush1.bf16.msra.mxu0 %v158
  %450 = vmatprep.subr.bf16.mxu0 %v163
  %451 = vmatpush1.bf16.msra.mxu0 %v162
  %452 = vmatprep.subr.bf16.mxu0 %v167
  %453 = vmatpush1.bf16.msra.mxu0 %v166
  %454 = vmatprep.subr.bf16.mxu0 %v171
  %455 = vmatpush1.bf16.msra.mxu0 %v170
  %456 = vmatprep.subr.bf16.mxu0 %v175
  %457 = vmatpush1.bf16.msra.mxu0 %v174
  %458 = vmatprep.subr.bf16.mxu0 0
  %459 = vmatpush1.bf16.msra.mxu0 0
  %460 = vmatprep.subr.bf16.mxu0 0
  %461 = vmatpush1.bf16.msra.mxu0 0
  %462 = vmatprep.subr.bf16.mxu0 0
  %463 = vmatpush1.bf16.msra.mxu0 0
  %464 = vmatprep.subr.bf16.mxu0 0
  %465 = vmatpush1.bf16.msra.mxu0 0
  %466 = vmatprep.subr.bf16.mxu0 0
  %467 = vmatpush1.bf16.msra.mxu0 0
  %468 = vmatprep.subr.bf16.mxu0 0
  %469 = vmatpush1.bf16.msra.mxu0 0
  %470 = vmatprep.subr.bf16.mxu0 0
  %471 = vmatpush1.bf16.msra.mxu0 0
  %472 = vmatprep.subr.bf16.mxu0 0
  %473 = vmatpush1.bf16.msra.mxu0 0
  %474 = vmatprep.mubr.bf16.mxu0 0
  %475 = vmatmul.mubr.bf16.gmra.mrb[0].mxu0 %v436
  %v476 = vpop.f32.mrb[0].mxu0
  %v477 = vadd.f32 0.0, %v476
  %v478 = vpop.f32.mrb[0].mxu0
  %v479 = vadd.f32 0.0, %v478
  %v480 = vpop.f32.mrb[0].mxu0
  %v481 = vpop.f32.mrb[0].mxu0
  %482 = vdwg.mxu0
  %483 = vmatprep.subr.bf16.mxu0 %v149
  %484 = vmatpush1.bf16.msra.mxu0 %v148
  %485 = vmatprep.subr.bf16.mxu0 %v153
  %486 = vmatpush1.bf16.msra.mxu0 %v152
  %487 = vmatprep.subr.bf16.mxu0 %v157
  %488 = vmatpush1.bf16.msra.mxu0 %v156
  %489 = vmatprep.subr.bf16.mxu0 %v161
  %490 = vmatpush1.bf16.msra.mxu0 %v160
  %491 = vmatprep.subr.bf16.mxu0 %v165
  %492 = vmatpush1.bf16.msra.mxu0 %v164
  %493 = vmatprep.subr.bf16.mxu0 %v169
  %494 = vmatpush1.bf16.msra.mxu0 %v168
  %495 = vmatprep.subr.bf16.mxu0 %v173
  %496 = vmatpush1.bf16.msra.mxu0 %v172
  %497 = vmatprep.subr.bf16.mxu0 %v177
  %498 = vmatpush1.bf16.msra.mxu0 %v176
  %499 = vmatprep.subr.bf16.mxu0 0
  %500 = vmatpush1.bf16.msra.mxu0 0
  %501 = vmatprep.subr.bf16.mxu0 0
  %502 = vmatpush1.bf16.msra.mxu0 0
  %503 = vmatprep.subr.bf16.mxu0 0
  %504 = vmatpush1.bf16.msra.mxu0 0
  %505 = vmatprep.subr.bf16.mxu0 0
  %506 = vmatpush1.bf16.msra.mxu0 0
  %507 = vmatprep.subr.bf16.mxu0 0
  %508 = vmatpush1.bf16.msra.mxu0 0
  %509 = vmatprep.subr.bf16.mxu0 0
  %510 = vmatpush1.bf16.msra.mxu0 0
  %511 = vmatprep.subr.bf16.mxu0 0
  %512 = vmatpush1.bf16.msra.mxu0 0
  %513 = vmatprep.subr.bf16.mxu0 0
  %514 = vmatpush1.bf16.msra.mxu0 0
  %515 = vmatprep.mubr.bf16.mxu0 0
  %516 = vmatmul.mubr.bf16.gmra.mrb[0].mxu0 %v436
  %v517 = vpop.f32.mrb[0].mxu0
  %v518 = vadd.f32 0.0, %v517
  %v519 = vpop.f32.mrb[0].mxu0
  %v520 = vadd.f32 0.0, %v519
  %v521 = vpop.f32.mrb[0].mxu0
  %v522 = vpop.f32.mrb[0].mxu0
  %523 = vdwg.mxu0
  %v524 = vadd.f32 %v438, %v477
  %v525 = vadd.f32 %v439, %v479
  %v526 = vadd.f32 %v440, %v518
  %v527 = vadd.f32 %v441, %v520
  %v528 = vxor.u32 %v524, 2147483648
  %v529 = vxor.u32 %v525, 2147483648
  %v530 = vxor.u32 %v526, 2147483648
  %v531 = vmul.f32 %v528, 1.442695
  %v532 = vpow.pop %v531
  %v533 = vmul.f32 %v529, 1.442695
  %v534 = vpow.pop %v533
  %v535 = vmul.f32 %v530, 1.442695
  %v536 = vpow.pop %v535
  %v537 = vadd.f32 %v532, 1.0
  %v538 = vadd.f32 %v534, 1.0
  %v539 = vadd.f32 %v536, 1.0
  %v540 = vrcp.pop %v537
  %v541 = vmul.f32 1.0, %v540
  %v542 = vrcp.pop %v538
  %v543 = vmul.f32 1.0, %v542
  %v544 = vrcp.pop %v539
  %v545 = vmul.f32 1.0, %v544
  %v546 = vtanh.pop %v527
  %v547 = vmul.f32 %v543, %v433
  %v548 = vmul.f32 %v541, %v546
  %v549 = vadd.f32 %v547, %v548
  %v550 = vtanh.pop %v549
  %v551 = vmul.f32 %v545, %v550
  %v552 = vpack.c.bf16 %v551, %v551
  %s553 = scalar_lea.vmem %s0, 96
  %v554 = vld [vmem:[%s553] sm:$0xff]
  %v555 = vld [vmem:[%s553 + $0x8] sm:$0xff]
  %v556 = vld [vmem:[%s553 + $0x10] sm:$0xff]
  %v557 = vld [vmem:[%s553 + $0x18] sm:$0xff]
  %558 = vmatprep.subr.bf16.mxu0 %v147
  %559 = vmatpush1.bf16.msra.mxu0 %v146
  %560 = vmatprep.subr.bf16.mxu0 %v151
  %561 = vmatpush1.bf16.msra.mxu0 %v150
  %562 = vmatprep.subr.bf16.mxu0 %v155
  %563 = vmatpush1.bf16.msra.mxu0 %v154
  %564 = vmatprep.subr.bf16.mxu0 %v159
  %565 = vmatpush1.bf16.msra.mxu0 %v158
  %566 = vmatprep.subr.bf16.mxu0 %v163
  %567 = vmatpush1.bf16.msra.mxu0 %v162
  %568 = vmatprep.subr.bf16.mxu0 %v167
  %569 = vmatpush1.bf16.msra.mxu0 %v166
  %570 = vmatprep.subr.bf16.mxu0 %v171
  %571 = vmatpush1.bf16.msra.mxu0 %v170
  %572 = vmatprep.subr.bf16.mxu0 %v175
  %573 = vmatpush1.bf16.msra.mxu0 %v174
  %574 = vmatprep.subr.bf16.mxu0 0
  %575 = vmatpush1.bf16.msra.mxu0 0
  %576 = vmatprep.subr.bf16.mxu0 0
  %577 = vmatpush1.bf16.msra.mxu0 0
  %578 = vmatprep.subr.bf16.mxu0 0
  %579 = vmatpush1.bf16.msra.mxu0 0
  %580 = vmatprep.subr.bf16.mxu0 0
  %581 = vmatpush1.bf16.msra.mxu0 0
  %582 = vmatprep.subr.bf16.mxu0 0
  %583 = vmatpush1.bf16.msra.mxu0 0
  %584 = vmatprep.subr.bf16.mxu0 0
  %585 = vmatpush1.bf16.msra.mxu0 0
  %586 = vmatprep.subr.bf16.mxu0 0
  %587 = vmatpush1.bf16.msra.mxu0 0
  %588 = vmatprep.subr.bf16.mxu0 0
  %589 = vmatpush1.bf16.msra.mxu0 0
  %590 = vmatprep.mubr.bf16.mxu0 0
  %591 = vmatmul.mubr.bf16.gmra.mrb[0].mxu0 %v552
  %v592 = vpop.f32.mrb[0].mxu0
  %v593 = vadd.f32 0.0, %v592
  %v594 = vpop.f32.mrb[0].mxu0
  %v595 = vadd.f32 0.0, %v594
  %v596 = vpop.f32.mrb[0].mxu0
  %v597 = vpop.f32.mrb[0].mxu0
  %598 = vdwg.mxu0
  %599 = vmatprep.subr.bf16.mxu0 %v149
  %600 = vmatpush1.bf16.msra.mxu0 %v148
  %601 = vmatprep.subr.bf16.mxu0 %v153
  %602 = vmatpush1.bf16.msra.mxu0 %v152
  %603 = vmatprep.subr.bf16.mxu0 %v157
  %604 = vmatpush1.bf16.msra.mxu0 %v156
  %605 = vmatprep.subr.bf16.mxu0 %v161
  %606 = vmatpush1.bf16.msra.mxu0 %v160
  %607 = vmatprep.subr.bf16.mxu0 %v165
  %608 = vmatpush1.bf16.msra.mxu0 %v164
  %609 = vmatprep.subr.bf16.mxu0 %v169
  %610 = vmatpush1.bf16.msra.mxu0 %v168
  %611 = vmatprep.subr.bf16.mxu0 %v173
  %612 = vmatpush1.bf16.msra.mxu0 %v172
  %613 = vmatprep.subr.bf16.mxu0 %v177
  %614 = vmatpush1.bf16.msra.mxu0 %v176
  %615 = vmatprep.subr.bf16.mxu0 0
  %616 = vmatpush1.bf16.msra.mxu0 0
  %617 = vmatprep.subr.bf16.mxu0 0
  %618 = vmatpush1.bf16.msra.mxu0 0
  %619 = vmatprep.subr.bf16.mxu0 0
  %620 = vmatpush1.bf16.msra.mxu0 0
  %621 = vmatprep.subr.bf16.mxu0 0
  %622 = vmatpush1.bf16.msra.mxu0 0
  %623 = vmatprep.subr.bf16.mxu0 0
  %624 = vmatpush1.bf16.msra.mxu0 0
  %625 = vmatprep.subr.bf16.mxu0 0
  %626 = vmatpush1.bf16.msra.mxu0 0
  %627 = vmatprep.subr.bf16.mxu0 0
  %628 = vmatpush1.bf16.msra.mxu0 0
  %629 = vmatprep.subr.bf16.mxu0 0
  %630 = vmatpush1.bf16.msra.mxu0 0
  %631 = vmatprep.mubr.bf16.mxu0 0
  %632 = vmatmul.mubr.bf16.gmra.mrb[0].mxu0 %v552
  %v633 = vpop.f32.mrb[0].mxu0
  %v634 = vadd.f32 0.0, %v633
  %v635 = vpop.f32.mrb[0].mxu0
  %v636 = vadd.f32 0.0, %v635
  %v637 = vpop.f32.mrb[0].mxu0
  %v638 = vpop.f32.mrb[0].mxu0
  %639 = vdwg.mxu0
  %v640 = vadd.f32 %v554, %v593
  %v641 = vadd.f32 %v555, %v595
  %v642 = vadd.f32 %v556, %v634
  %v643 = vadd.f32 %v557, %v636
  %v644 = vxor.u32 %v640, 2147483648
  %v645 = vxor.u32 %v641, 2147483648
  %v646 = vxor.u32 %v642, 2147483648
  %v647 = vmul.f32 %v644, 1.442695
  %v648 = vpow.pop %v647
  %v649 = vmul.f32 %v645, 1.442695
  %v650 = vpow.pop %v649
  %v651 = vmul.f32 %v646, 1.442695
  %v652 = vpow.pop %v651
  %v653 = vadd.f32 %v648, 1.0
  %v654 = vadd.f32 %v650, 1.0
  %v655 = vadd.f32 %v652, 1.0
  %v656 = vrcp.pop %v653
  %v657 = vmul.f32 1.0, %v656
  %v658 = vrcp.pop %v654
  %v659 = vmul.f32 1.0, %v658
  %v660 = vrcp.pop %v655
  %v661 = vmul.f32 1.0, %v660
  %v662 = vtanh.pop %v643
  %v663 = vmul.f32 %v659, %v549
  %v664 = vmul.f32 %v657, %v662
  %v665 = vadd.f32 %v663, %v664
  %v666 = vtanh.pop %v665
  %v667 = vmul.f32 %v661, %v666
  %v668 = vpack.c.bf16 %v667, %v667
  %s669 = scalar_lea.vmem %s0, 128
  %v670 = vld [vmem:[%s669] sm:$0xff]
  %v671 = vld [vmem:[%s669 + $0x8] sm:$0xff]
  %v672 = vld [vmem:[%s669 + $0x10] sm:$0xff]
  %v673 = vld [vmem:[%s669 + $0x18] sm:$0xff]
  %674 = vmatprep.subr.bf16.mxu0 %v147
  %675 = vmatpush1.bf16.msra.mxu0 %v146
  %676 = vmatprep.subr.bf16.mxu0 %v151
  %677 = vmatpush1.bf16.msra.mxu0 %v150
  %678 = vmatprep.subr.bf16.mxu0 %v155
  %679 = vmatpush1.bf16.msra.mxu0 %v154
  %680 = vmatprep.subr.bf16.mxu0 %v159
  %681 = vmatpush1.bf16.msra.mxu0 %v158
  %682 = vmatprep.subr.bf16.mxu0 %v163
  %683 = vmatpush1.bf16.msra.mxu0 %v162
  %684 = vmatprep.subr.bf16.mxu0 %v167
  %685 = vmatpush1.bf16.msra.mxu0 %v166
  %686 = vmatprep.subr.bf16.mxu0 %v171
  %687 = vmatpush1.bf16.msra.mxu0 %v170
  %688 = vmatprep.subr.bf16.mxu0 %v175
  %689 = vmatpush1.bf16.msra.mxu0 %v174
  %690 = vmatprep.subr.bf16.mxu0 0
  %691 = vmatpush1.bf16.msra.mxu0 0
  %692 = vmatprep.subr.bf16.mxu0 0
  %693 = vmatpush1.bf16.msra.mxu0 0
  %694 = vmatprep.subr.bf16.mxu0 0
  %695 = vmatpush1.bf16.msra.mxu0 0
  %696 = vmatprep.subr.bf16.mxu0 0
  %697 = vmatpush1.bf16.msra.mxu0 0
  %698 = vmatprep.subr.bf16.mxu0 0
  %699 = vmatpush1.bf16.msra.mxu0 0
  %700 = vmatprep.subr.bf16.mxu0 0
  %701 = vmatpush1.bf16.msra.mxu0 0
  %702 = vmatprep.subr.bf16.mxu0 0
  %703 = vmatpush1.bf16.msra.mxu0 0
  %704 = vmatprep.subr.bf16.mxu0 0
  %705 = vmatpush1.bf16.msra.mxu0 0
  %706 = vmatprep.mubr.bf16.mxu0 0
  %707 = vmatmul.mubr.bf16.gmra.mrb[0].mxu0 %v668
  %v708 = vpop.f32.mrb[0].mxu0
  %v709 = vadd.f32 0.0, %v708
  %v710 = vpop.f32.mrb[0].mxu0
  %v711 = vadd.f32 0.0, %v710
  %v712 = vpop.f32.mrb[0].mxu0
  %v713 = vpop.f32.mrb[0].mxu0
  %714 = vdwg.mxu0
  %715 = vmatprep.subr.bf16.mxu0 %v149
  %716 = vmatpush1.bf16.msra.mxu0 %v148
  %717 = vmatprep.subr.bf16.mxu0 %v153
  %718 = vmatpush1.bf16.msra.mxu0 %v152
  %719 = vmatprep.subr.bf16.mxu0 %v157
  %720 = vmatpush1.bf16.msra.mxu0 %v156
  %721 = vmatprep.subr.bf16.mxu0 %v161
  %722 = vmatpush1.bf16.msra.mxu0 %v160
  %723 = vmatprep.subr.bf16.mxu0 %v165
  %724 = vmatpush1.bf16.msra.mxu0 %v164
  %725 = vmatprep.subr.bf16.mxu0 %v169
  %726 = vmatpush1.bf16.msra.mxu0 %v168
  %727 = vmatprep.subr.bf16.mxu0 %v173
  %728 = vmatpush1.bf16.msra.mxu0 %v172
  %729 = vmatprep.subr.bf16.mxu0 %v177
  %730 = vmatpush1.bf16.msra.mxu0 %v176
  %731 = vmatprep.subr.bf16.mxu0 0
  %732 = vmatpush1.bf16.msra.mxu0 0
  %733 = vmatprep.subr.bf16.mxu0 0
  %734 = vmatpush1.bf16.msra.mxu0 0
  %735 = vmatprep.subr.bf16.mxu0 0
  %736 = vmatpush1.bf16.msra.mxu0 0
  %737 = vmatprep.subr.bf16.mxu0 0
  %738 = vmatpush1.bf16.msra.mxu0 0
  %739 = vmatprep.subr.bf16.mxu0 0
  %740 = vmatpush1.bf16.msra.mxu0 0
  %741 = vmatprep.subr.bf16.mxu0 0
  %742 = vmatpush1.bf16.msra.mxu0 0
  %743 = vmatprep.subr.bf16.mxu0 0
  %744 = vmatpush1.bf16.msra.mxu0 0
  %745 = vmatprep.subr.bf16.mxu0 0
  %746 = vmatpush1.bf16.msra.mxu0 0
  %747 = vmatprep.mubr.bf16.mxu0 0
  %748 = vmatmul.mubr.bf16.gmra.mrb[0].mxu0 %v668
  %v749 = vpop.f32.mrb[0].mxu0
  %v750 = vadd.f32 0.0, %v749
  %v751 = vpop.f32.mrb[0].mxu0
  %v752 = vadd.f32 0.0, %v751
  %v753 = vpop.f32.mrb[0].mxu0
  %v754 = vpop.f32.mrb[0].mxu0
  %755 = vdwg.mxu0
  %v756 = vadd.f32 %v670, %v709
  %v757 = vadd.f32 %v671, %v711
  %v758 = vadd.f32 %v672, %v750
  %v759 = vadd.f32 %v673, %v752
  %v760 = vxor.u32 %v756, 2147483648
  %v761 = vxor.u32 %v757, 2147483648
  %v762 = vxor.u32 %v758, 2147483648
  %v763 = vmul.f32 %v760, 1.442695
  %v764 = vpow.pop %v763
  %v765 = vmul.f32 %v761, 1.442695
  %v766 = vpow.pop %v765
  %v767 = vmul.f32 %v762, 1.442695
  %v768 = vpow.pop %v767
  %v769 = vadd.f32 %v764, 1.0
  %v770 = vadd.f32 %v766, 1.0
  %v771 = vadd.f32 %v768, 1.0
  %v772 = vrcp.pop %v769
  %v773 = vmul.f32 1.0, %v772
  %v774 = vrcp.pop %v770
  %v775 = vmul.f32 1.0, %v774
  %v776 = vrcp.pop %v771
  %v777 = vmul.f32 1.0, %v776
  %v778 = vtanh.pop %v759
  %v779 = vmul.f32 %v775, %v665
  %v780 = vmul.f32 %v773, %v778
  %v781 = vadd.f32 %v779, %v780
  %v782 = vtanh.pop %v781
  %v783 = vmul.f32 %v777, %v782
  %v784 = vpack.c.bf16 %v783, %v783
  %s785 = scalar_lea.vmem %s0, 160
  %v786 = vld [vmem:[%s785] sm:$0xff]
  %v787 = vld [vmem:[%s785 + $0x8] sm:$0xff]
  %v788 = vld [vmem:[%s785 + $0x10] sm:$0xff]
  %v789 = vld [vmem:[%s785 + $0x18] sm:$0xff]
  %790 = vmatprep.subr.bf16.mxu0 %v147
  %791 = vmatpush1.bf16.msra.mxu0 %v146
  %792 = vmatprep.subr.bf16.mxu0 %v151
  %793 = vmatpush1.bf16.msra.mxu0 %v150
  %794 = vmatprep.subr.bf16.mxu0 %v155
  %795 = vmatpush1.bf16.msra.mxu0 %v154
  %796 = vmatprep.subr.bf16.mxu0 %v159
  %797 = vmatpush1.bf16.msra.mxu0 %v158
  %798 = vmatprep.subr.bf16.mxu0 %v163
  %799 = vmatpush1.bf16.msra.mxu0 %v162
  %800 = vmatprep.subr.bf16.mxu0 %v167
  %801 = vmatpush1.bf16.msra.mxu0 %v166
  %802 = vmatprep.subr.bf16.mxu0 %v171
  %803 = vmatpush1.bf16.msra.mxu0 %v170
  %804 = vmatprep.subr.bf16.mxu0 %v175
  %805 = vmatpush1.bf16.msra.mxu0 %v174
  %806 = vmatprep.subr.bf16.mxu0 0
  %807 = vmatpush1.bf16.msra.mxu0 0
  %808 = vmatprep.subr.bf16.mxu0 0
  %809 = vmatpush1.bf16.msra.mxu0 0
  %810 = vmatprep.subr.bf16.mxu0 0
  %811 = vmatpush1.bf16.msra.mxu0 0
  %812 = vmatprep.subr.bf16.mxu0 0
  %813 = vmatpush1.bf16.msra.mxu0 0
  %814 = vmatprep.subr.bf16.mxu0 0
  %815 = vmatpush1.bf16.msra.mxu0 0
  %816 = vmatprep.subr.bf16.mxu0 0
  %817 = vmatpush1.bf16.msra.mxu0 0
  %818 = vmatprep.subr.bf16.mxu0 0
  %819 = vmatpush1.bf16.msra.mxu0 0
  %820 = vmatprep.subr.bf16.mxu0 0
  %821 = vmatpush1.bf16.msra.mxu0 0
  %822 = vmatprep.mubr.bf16.mxu0 0
  %823 = vmatmul.mubr.bf16.gmra.mrb[0].mxu0 %v784
  %v824 = vpop.f32.mrb[0].mxu0
  %v825 = vadd.f32 0.0, %v824
  %v826 = vpop.f32.mrb[0].mxu0
  %v827 = vadd.f32 0.0, %v826
  %v828 = vpop.f32.mrb[0].mxu0
  %v829 = vpop.f32.mrb[0].mxu0
  %830 = vdwg.mxu0
  %831 = vmatprep.subr.bf16.mxu0 %v149
  %832 = vmatpush1.bf16.msra.mxu0 %v148
  %833 = vmatprep.subr.bf16.mxu0 %v153
  %834 = vmatpush1.bf16.msra.mxu0 %v152
  %835 = vmatprep.subr.bf16.mxu0 %v157
  %836 = vmatpush1.bf16.msra.mxu0 %v156
  %837 = vmatprep.subr.bf16.mxu0 %v161
  %838 = vmatpush1.bf16.msra.mxu0 %v160
  %839 = vmatprep.subr.bf16.mxu0 %v165
  %840 = vmatpush1.bf16.msra.mxu0 %v164
  %841 = vmatprep.subr.bf16.mxu0 %v169
  %842 = vmatpush1.bf16.msra.mxu0 %v168
  %843 = vmatprep.subr.bf16.mxu0 %v173
  %844 = vmatpush1.bf16.msra.mxu0 %v172
  %845 = vmatprep.subr.bf16.mxu0 %v177
  %846 = vmatpush1.bf16.msra.mxu0 %v176
  %847 = vmatprep.subr.bf16.mxu0 0
  %848 = vmatpush1.bf16.msra.mxu0 0
  %849 = vmatprep.subr.bf16.mxu0 0
  %850 = vmatpush1.bf16.msra.mxu0 0
  %851 = vmatprep.subr.bf16.mxu0 0
  %852 = vmatpush1.bf16.msra.mxu0 0
  %853 = vmatprep.subr.bf16.mxu0 0
  %854 = vmatpush1.bf16.msra.mxu0 0
  %855 = vmatprep.subr.bf16.mxu0 0
  %856 = vmatpush1.bf16.msra.mxu0 0
  %857 = vmatprep.subr.bf16.mxu0 0
  %858 = vmatpush1.bf16.msra.mxu0 0
  %859 = vmatprep.subr.bf16.mxu0 0
  %860 = vmatpush1.bf16.msra.mxu0 0
  %861 = vmatprep.subr.bf16.mxu0 0
  %862 = vmatpush1.bf16.msra.mxu0 0
  %863 = vmatprep.mubr.bf16.mxu0 0
  %864 = vmatmul.mubr.bf16.gmra.mrb[0].mxu0 %v784
  %v865 = vpop.f32.mrb[0].mxu0
  %v866 = vadd.f32 0.0, %v865
  %v867 = vpop.f32.mrb[0].mxu0
  %v868 = vadd.f32 0.0, %v867
  %v869 = vpop.f32.mrb[0].mxu0
  %v870 = vpop.f32.mrb[0].mxu0
  %871 = vdwg.mxu0
  %v872 = vadd.f32 %v786, %v825
  %v873 = vadd.f32 %v787, %v827
  %v874 = vadd.f32 %v788, %v866
  %v875 = vadd.f32 %v789, %v868
  %v876 = vxor.u32 %v872, 2147483648
  %v877 = vxor.u32 %v873, 2147483648
  %v878 = vxor.u32 %v874, 2147483648
  %v879 = vmul.f32 %v876, 1.442695
  %v880 = vpow.pop %v879
  %v881 = vmul.f32 %v877, 1.442695
  %v882 = vpow.pop %v881
  %v883 = vmul.f32 %v878, 1.442695
  %v884 = vpow.pop %v883
  %v885 = vadd.f32 %v880, 1.0
  %v886 = vadd.f32 %v882, 1.0
  %v887 = vadd.f32 %v884, 1.0
  %v888 = vrcp.pop %v885
  %v889 = vmul.f32 1.0, %v888
  %v890 = vrcp.pop %v886
  %v891 = vmul.f32 1.0, %v890
  %v892 = vrcp.pop %v887
  %v893 = vmul.f32 1.0, %v892
  %v894 = vtanh.pop %v875
  %v895 = vmul.f32 %v891, %v781
  %v896 = vmul.f32 %v889, %v894
  %v897 = vadd.f32 %v895, %v896
  %v898 = vtanh.pop %v897
  %v899 = vmul.f32 %v893, %v898
  %v900 = vpack.c.bf16 %v899, %v899
  %901 = vst [vmem:[%s2] sm:$0xf] %v900
  %902 = vst [vmem:[%s3] sm:$0xff] %v897
  // Predicated region
  $region10: #{seq2seq_forward.2} parent=0 // pred_check
    _
  $region11: #{seq2seq_forward.2} parent=0 // pred_check_branch
    %904 = sbr.rel (0) target = $region13
  $region12: #{seq2seq_forward.2} parent=0 // pred_region
    _
  $region13: #{seq2seq_forward.2} parent=0 // pred_fallthru
    _
  // Predicated region
  $region14: #{seq2seq_forward.2} parent=0 // pred_check
    _
  $region15: #{seq2seq_forward.2} parent=0 // pred_check_branch
    %906 = sbr.rel (0) target = $region17
  $region16: #{seq2seq_forward.2} parent=0 // pred_region
    _
  $region17: #{seq2seq_forward.2} parent=0 // pred_fallthru
    _
  // Predicated region
  $region18: #{seq2seq_forward.2} parent=0 // pred_check
    _
  $region19: #{seq2seq_forward.2} parent=0 // pred_check_branch
    %908 = sbr.rel (0) target = $region21
  $region20: #{seq2seq_forward.2} parent=0 // pred_region
    _
  $region21: #{seq2seq_forward.2} parent=0 // pred_fallthru
    _
  // Predicated region
  $region22: #{seq2seq_forward.2} parent=0 // pred_check
    _
  $region23: #{seq2seq_forward.2} parent=0 // pred_check_branch
    %910 = sbr.rel (0) target = $region25
  $region24: #{seq2seq_forward.2} parent=0 // pred_region
    _
  $region25: #{seq2seq_forward.2} parent=0 // pred_fallthru
    _

// kernel: seq2seq_forward.3
$region0: #{seq2seq_forward.3}
  #allocation0 [shape = 'u32[]', space=smem, size = 0x4, offset = 0x4, fixed_abs, tag = 'smem constant byte address 0x4 - core index']
  #allocation1 [shape = 'u32[144,128]{1,0:T(1,128)}', space=vmem, size = 0x12000, scoped, tag = 'internal scratch']
  #allocation2 [shape = 's32[1]{0}', space=sflag, size = 0x4, scoped, tag = 'scoped memory for seq2seq_forward.3']
  #allocation3 [shape = 'u8[512]{0}', space=smem, size = 0x200, scoped, tag = 'prefetched SMEM operand 0']
  %s0 = inlined_call_operand.vmem [shape: s32[8], index: 0, kind: input, shape index: {}]
  %s1 = inlined_call_operand.vmem [shape: bf16[8,8,128], index: 1, kind: input, shape index: {}]
  %s2 = inlined_call_operand.vmem [shape: bf16[8,128], index: 2, kind: input, shape index: {}]
  %s3 = inlined_call_operand.vmem [shape: f32[8,128], index: 3, kind: input, shape index: {}]
  %s4 = inlined_call_operand.vmem [shape: bf16[256,512], index: 4, kind: input, shape index: {}]
  %s5 = inlined_call_operand.vmem [shape: f32[1,512], index: 5, kind: input, shape index: {}]
  %s6 = inlined_call_operand.vmem [shape: bf16[128,128], index: 6, kind: input, shape index: {}]
  %s7 = inlined_call_operand.vmem [shape: bf16[128,128], index: 7, kind: input, shape index: {}]
  %s8 = inlined_call_operand.vmem [shape: f32[1,128], index: 8, kind: input, shape index: {}]
  %s9 = inlined_call_operand.vmem [shape: f32[7,8,128], index: 9, kind: output, shape index: {}]
  %s10 = sld [smem:[#allocation0]]
  $region42: #{seq2seq_forward.3} parent=0
    _
  %s12 = ssub.s32 1, %s10
  %s13 = scalar_select 0, %s12, %s10
  %s14 = sshll.u32 %s0, 4
  %s15 = int_to_ptr.vmem [resolvable:$true] %s14
  %17 = dma.vmem_to_smem %s15, 16, [#allocation3], [#allocation2]
  %18 = dma.done [#allocation2], 16
  %19 = sfence
  // Predicated region
  $region2: #{seq2seq_forward.3} parent=0 // pred_check
    _
  $region3: #{seq2seq_forward.3} parent=0 // pred_check_branch
    %21 = sbr.rel (0) target = $region5
  $region4: #{seq2seq_forward.3} parent=0 // pred_region
    _
  $region5: #{seq2seq_forward.3} parent=0 // pred_fallthru
    _
  // Predicated region
  $region6: #{seq2seq_forward.3} parent=0 // pred_check
    _
  $region7: #{seq2seq_forward.3} parent=0 // pred_check_branch
    %23 = sbr.rel (0) target = $region9
  $region8: #{seq2seq_forward.3} parent=0 // pred_region
    _
  $region9: #{seq2seq_forward.3} parent=0 // pred_fallthru
    _
  // Predicated region
  $region10: #{seq2seq_forward.3} parent=0 // pred_check
    _
  $region11: #{seq2seq_forward.3} parent=0 // pred_check_branch
    %25 = sbr.rel (0) target = $region13
  $region12: #{seq2seq_forward.3} parent=0 // pred_region
    _
  $region13: #{seq2seq_forward.3} parent=0 // pred_fallthru
    _
  // Predicated region
  $region14: #{seq2seq_forward.3} parent=0 // pred_check
    _
  $region15: #{seq2seq_forward.3} parent=0 // pred_check_branch
    %27 = sbr.rel (0) target = $region17
  $region16: #{seq2seq_forward.3} parent=0 // pred_region
    _
  $region17: #{seq2seq_forward.3} parent=0 // pred_fallthru
    _
  // Predicated region
  $region18: #{seq2seq_forward.3} parent=0 // pred_check
    _
  $region19: #{seq2seq_forward.3} parent=0 // pred_check_branch
    %29 = sbr.rel (0) target = $region21
  $region20: #{seq2seq_forward.3} parent=0 // pred_region
    _
  $region21: #{seq2seq_forward.3} parent=0 // pred_fallthru
    _
  // Predicated region
  $region22: #{seq2seq_forward.3} parent=0 // pred_check
    _
  $region23: #{seq2seq_forward.3} parent=0 // pred_check_branch
    %31 = sbr.rel (0) target = $region25
  $region24: #{seq2seq_forward.3} parent=0 // pred_region
    _
  $region25: #{seq2seq_forward.3} parent=0 // pred_fallthru
    _
  // Predicated region
  $region26: #{seq2seq_forward.3} parent=0 // pred_check
    _
  $region27: #{seq2seq_forward.3} parent=0 // pred_check_branch
    %33 = sbr.rel (0) target = $region29
  $region28: #{seq2seq_forward.3} parent=0 // pred_region
    _
  $region29: #{seq2seq_forward.3} parent=0 // pred_fallthru
    _
  // Predicated region
  $region30: #{seq2seq_forward.3} parent=0 // pred_check
    _
  $region31: #{seq2seq_forward.3} parent=0 // pred_check_branch
    %35 = sbr.rel (0) target = $region33
  $region32: #{seq2seq_forward.3} parent=0 // pred_region
    _
  $region33: #{seq2seq_forward.3} parent=0 // pred_fallthru
    _
  %v37 = vld [vmem:[%s4] sm:$0xff]
  %v38 = vld [vmem:[%s4 + $0x8] sm:$0xff]
  %v39 = vld [vmem:[%s4 + $0x10] sm:$0xff]
  %v40 = vld [vmem:[%s4 + $0x18] sm:$0xff]
  %v41 = vld [vmem:[%s4 + $0x20] sm:$0xff]
  %v42 = vld [vmem:[%s4 + $0x28] sm:$0xff]
  %v43 = vld [vmem:[%s4 + $0x30] sm:$0xff]
  %v44 = vld [vmem:[%s4 + $0x38] sm:$0xff]
  %v45 = vld [vmem:[%s4 + $0x40] sm:$0xff]
  %v46 = vld [vmem:[%s4 + $0x48] sm:$0xff]
  %v47 = vld [vmem:[%s4 + $0x50] sm:$0xff]
  %v48 = vld [vmem:[%s4 + $0x58] sm:$0xff]
  %v49 = vld [vmem:[%s4 + $0x60] sm:$0xff]
  %v50 = vld [vmem:[%s4 + $0x68] sm:$0xff]
  %v51 = vld [vmem:[%s4 + $0x70] sm:$0xff]
  %v52 = vld [vmem:[%s4 + $0x78] sm:$0xff]
  %v53 = vld [vmem:[%s4 + $0x80] sm:$0xff]
  %v54 = vld [vmem:[%s4 + $0x88] sm:$0xff]
  %v55 = vld [vmem:[%s4 + $0x90] sm:$0xff]
  %v56 = vld [vmem:[%s4 + $0x98] sm:$0xff]
  %v57 = vld [vmem:[%s4 + $0xa0] sm:$0xff]
  %v58 = vld [vmem:[%s4 + $0xa8] sm:$0xff]
  %v59 = vld [vmem:[%s4 + $0xb0] sm:$0xff]
  %v60 = vld [vmem:[%s4 + $0xb8] sm:$0xff]
  %v61 = vld [vmem:[%s4 + $0xc0] sm:$0xff]
  %v62 = vld [vmem:[%s4 + $0xc8] sm:$0xff]
  %v63 = vld [vmem:[%s4 + $0xd0] sm:$0xff]
  %v64 = vld [vmem:[%s4 + $0xd8] sm:$0xff]
  %v65 = vld [vmem:[%s4 + $0xe0] sm:$0xff]
  %v66 = vld [vmem:[%s4 + $0xe8] sm:$0xff]
  %v67 = vld [vmem:[%s4 + $0xf0] sm:$0xff]
  %v68 = vld [vmem:[%s4 + $0xf8] sm:$0xff]
  %v69 = vld [vmem:[%s4 + $0x100] sm:$0xff]
  %v70 = vld [vmem:[%s4 + $0x108] sm:$0xff]
  %v71 = vld [vmem:[%s4 + $0x110] sm:$0xff]
  %v72 = vld [vmem:[%s4 + $0x118] sm:$0xff]
  %v73 = vld [vmem:[%s4 + $0x120] sm:$0xff]
  %v74 = vld [vmem:[%s4 + $0x128] sm:$0xff]
  %v75 = vld [vmem:[%s4 + $0x130] sm:$0xff]
  %v76 = vld [vmem:[%s4 + $0x138] sm:$0xff]
  %v77 = vld [vmem:[%s4 + $0x140] sm:$0xff]
  %v78 = vld [vmem:[%s4 + $0x148] sm:$0xff]
  %v79 = vld [vmem:[%s4 + $0x150] sm:$0xff]
  %v80 = vld [vmem:[%s4 + $0x158] sm:$0xff]
  %v81 = vld [vmem:[%s4 + $0x160] sm:$0xff]
  %v82 = vld [vmem:[%s4 + $0x168] sm:$0xff]
  %v83 = vld [vmem:[%s4 + $0x170] sm:$0xff]
  %v84 = vld [vmem:[%s4 + $0x178] sm:$0xff]
  %v85 = vld [vmem:[%s4 + $0x180] sm:$0xff]
  %v86 = vld [vmem:[%s4 + $0x188] sm:$0xff]
  %v87 = vld [vmem:[%s4 + $0x190] sm:$0xff]
  %v88 = vld [vmem:[%s4 + $0x198] sm:$0xff]
  %v89 = vld [vmem:[%s4 + $0x1a0] sm:$0xff]
  %v90 = vld [vmem:[%s4 + $0x1a8] sm:$0xff]
  %v91 = vld [vmem:[%s4 + $0x1b0] sm:$0xff]
  %v92 = vld [vmem:[%s4 + $0x1b8] sm:$0xff]
  %v93 = vld [vmem:[%s4 + $0x1c0] sm:$0xff]
  %v94 = vld [vmem:[%s4 + $0x1c8] sm:$0xff]
  %v95 = vld [vmem:[%s4 + $0x1d0] sm:$0xff]
  %v96 = vld [vmem:[%s4 + $0x1d8] sm:$0xff]
  %v97 = vld [vmem:[%s4 + $0x1e0] sm:$0xff]
  %v98 = vld [vmem:[%s4 + $0x1e8] sm:$0xff]
  %v99 = vld [vmem:[%s4 + $0x1f0] sm:$0xff]
  %v100 = vld [vmem:[%s4 + $0x1f8] sm:$0xff]
  %v101 = vld [vmem:[%s5] sm:$0xf]
  %v102 = vld [vmem:[%s7] sm:$0xf]
  %v103 = vld [vmem:[%s7 + $0x4] sm:$0xf]
  %v104 = vld [vmem:[%s7 + $0x8] sm:$0xf]
  %v105 = vld [vmem:[%s7 + $0xc] sm:$0xf]
  %v106 = vld [vmem:[%s7 + $0x10] sm:$0xf]
  %v107 = vld [vmem:[%s7 + $0x14] sm:$0xf]
  %v108 = vld [vmem:[%s7 + $0x18] sm:$0xf]
  %v109 = vld [vmem:[%s7 + $0x1c] sm:$0xf]
  %v110 = vld [vmem:[%s7 + $0x20] sm:$0xf]
  %v111 = vld [vmem:[%s7 + $0x24] sm:$0xf]
  %v112 = vld [vmem:[%s7 + $0x28] sm:$0xf]
  %v113 = vld [vmem:[%s7 + $0x2c] sm:$0xf]
  %v114 = vld [vmem:[%s7 + $0x30] sm:$0xf]
  %v115 = vld [vmem:[%s7 + $0x34] sm:$0xf]
  %v116 = vld [vmem:[%s7 + $0x38] sm:$0xf]
  %v117 = vld [vmem:[%s7 + $0x3c] sm:$0xf]
  %v118 = vld [vmem:[%s8] sm:$0x1]
  %v119 = vld [vmem:[%s6] sm:$0xf]
  %v120 = vld [vmem:[%s6 + $0x4] sm:$0xf]
  %v121 = vld [vmem:[%s6 + $0x8] sm:$0xf]
  %v122 = vld [vmem:[%s6 + $0xc] sm:$0xf]
  %v123 = vld [vmem:[%s6 + $0x10] sm:$0xf]
  %v124 = vld [vmem:[%s6 + $0x14] sm:$0xf]
  %v125 = vld [vmem:[%s6 + $0x18] sm:$0xf]
  %v126 = vld [vmem:[%s6 + $0x1c] sm:$0xf]
  %v127 = vld [vmem:[%s6 + $0x20] sm:$0xf]
  %v128 = vld [vmem:[%s6 + $0x24] sm:$0xf]
  %v129 = vld [vmem:[%s6 + $0x28] sm:$0xf]
  %v130 = vld [vmem:[%s6 + $0x2c] sm:$0xf]
  %v131 = vld [vmem:[%s6 + $0x30] sm:$0xf]
  %v132 = vld [vmem:[%s6 + $0x34] sm:$0xf]
  %v133 = vld [vmem:[%s6 + $0x38] sm:$0xf]
  %v134 = vld [vmem:[%s6 + $0x3c] sm:$0xf]
  %v135 = vlaneseq
  %v136 = vand.u32 %v135, 127
  %v137 = vld [vmem:[%s1] sm:$0xf]
  %v138 = vld [vmem:[%s2] sm:$0xf]
  %v139 = vld [vmem:[%s3] sm:$0xff]
  %v141 = vlaneseq
  %v142 = vshrl.u32 %v141, 7
  %v143 = vsub.s32 0, %v142
  %v144 = vrot.slane %v101, %v143
  %v145 = vlaneseq
  %v146 = vshrl.u32 %v145, 7
  %v147 = vsub.s32 1, %v146
  %v148 = vrot.slane %v101, %v147
  %v149 = vlaneseq
  %v150 = vshrl.u32 %v149, 7
  %v151 = vsub.s32 2, %v150
  %v152 = vrot.slane %v101, %v151
  %v153 = vlaneseq
  %v154 = vshrl.u32 %v153, 7
  %v155 = vsub.s32 3, %v154
  %v156 = vrot.slane %v101, %v155
  %v225 = vunpack.c.l.b16 %v37
  %v226 = vunpack.c.h.b16 %v37
  %v227 = vunpack.c.l.b16 %v38
  %v228 = vunpack.c.h.b16 %v38
  %v229 = vunpack.c.l.b16 %v39
  %v230 = vunpack.c.h.b16 %v39
  %v231 = vunpack.c.l.b16 %v40
  %v232 = vunpack.c.h.b16 %v40
  %v233 = vunpack.c.l.b16 %v41
  %v234 = vunpack.c.h.b16 %v41
  %v235 = vunpack.c.l.b16 %v42
  %v236 = vunpack.c.h.b16 %v42
  %v237 = vunpack.c.l.b16 %v43
  %v238 = vunpack.c.h.b16 %v43
  %v239 = vunpack.c.l.b16 %v44
  %v240 = vunpack.c.h.b16 %v44
  %v241 = vunpack.c.l.b16 %v45
  %v242 = vunpack.c.h.b16 %v45
  %v243 = vunpack.c.l.b16 %v46
  %v244 = vunpack.c.h.b16 %v46
  %v245 = vunpack.c.l.b16 %v47
  %v246 = vunpack.c.h.b16 %v47
  %v247 = vunpack.c.l.b16 %v48
  %v248 = vunpack.c.h.b16 %v48
  %v249 = vunpack.c.l.b16 %v49
  %v250 = vunpack.c.h.b16 %v49
  %v251 = vunpack.c.l.b16 %v50
  %v252 = vunpack.c.h.b16 %v50
  %v253 = vunpack.c.l.b16 %v51
  %v254 = vunpack.c.h.b16 %v51
  %v255 = vunpack.c.l.b16 %v52
  %v256 = vunpack.c.h.b16 %v52
  %v257 = vunpack.c.l.b16 %v53
  %v258 = vunpack.c.h.b16 %v53
  %v259 = vunpack.c.l.b16 %v54
  %v260 = vunpack.c.h.b16 %v54
  %v261 = vunpack.c.l.b16 %v55
  %v262 = vunpack.c.h.b16 %v55
  %v263 = vunpack.c.l.b16 %v56
  %v264 = vunpack.c.h.b16 %v56
  %v265 = vunpack.c.l.b16 %v57
  %v266 = vunpack.c.h.b16 %v57
  %v267 = vunpack.c.l.b16 %v58
  %v268 = vunpack.c.h.b16 %v58
  %v269 = vunpack.c.l.b16 %v59
  %v270 = vunpack.c.h.b16 %v59
  %v271 = vunpack.c.l.b16 %v60
  %v272 = vunpack.c.h.b16 %v60
  %v273 = vunpack.c.l.b16 %v61
  %v274 = vunpack.c.h.b16 %v61
  %v275 = vunpack.c.l.b16 %v62
  %v276 = vunpack.c.h.b16 %v62
  %v277 = vunpack.c.l.b16 %v63
  %v278 = vunpack.c.h.b16 %v63
  %v279 = vunpack.c.l.b16 %v64
  %v280 = vunpack.c.h.b16 %v64
  %v281 = vunpack.c.l.b16 %v65
  %v282 = vunpack.c.h.b16 %v65
  %v283 = vunpack.c.l.b16 %v66
  %v284 = vunpack.c.h.b16 %v66
  %v285 = vunpack.c.l.b16 %v67
  %v286 = vunpack.c.h.b16 %v67
  %v287 = vunpack.c.l.b16 %v68
  %v288 = vunpack.c.h.b16 %v68
  %v289 = vunpack.c.l.b16 %v69
  %v290 = vunpack.c.h.b16 %v69
  %v291 = vunpack.c.l.b16 %v70
  %v292 = vunpack.c.h.b16 %v70
  %v293 = vunpack.c.l.b16 %v71
  %v294 = vunpack.c.h.b16 %v71
  %v295 = vunpack.c.l.b16 %v72
  %v296 = vunpack.c.h.b16 %v72
  %v297 = vunpack.c.l.b16 %v73
  %v298 = vunpack.c.h.b16 %v73
  %v299 = vunpack.c.l.b16 %v74
  %v300 = vunpack.c.h.b16 %v74
  %v301 = vunpack.c.l.b16 %v75
  %v302 = vunpack.c.h.b16 %v75
  %v303 = vunpack.c.l.b16 %v76
  %v304 = vunpack.c.h.b16 %v76
  %v305 = vunpack.c.l.b16 %v77
  %v306 = vunpack.c.h.b16 %v77
  %v307 = vunpack.c.l.b16 %v78
  %v308 = vunpack.c.h.b16 %v78
  %v309 = vunpack.c.l.b16 %v79
  %v310 = vunpack.c.h.b16 %v79
  %v311 = vunpack.c.l.b16 %v80
  %v312 = vunpack.c.h.b16 %v80
  %v313 = vunpack.c.l.b16 %v81
  %v314 = vunpack.c.h.b16 %v81
  %v315 = vunpack.c.l.b16 %v82
  %v316 = vunpack.c.h.b16 %v82
  %v317 = vunpack.c.l.b16 %v83
  %v318 = vunpack.c.h.b16 %v83
  %v319 = vunpack.c.l.b16 %v84
  %v320 = vunpack.c.h.b16 %v84
  %v321 = vunpack.c.l.b16 %v85
  %v322 = vunpack.c.h.b16 %v85
  %v323 = vunpack.c.l.b16 %v86
  %v324 = vunpack.c.h.b16 %v86
  %v325 = vunpack.c.l.b16 %v87
  %v326 = vunpack.c.h.b16 %v87
  %v327 = vunpack.c.l.b16 %v88
  %v328 = vunpack.c.h.b16 %v88
  %v329 = vunpack.c.l.b16 %v89
  %v330 = vunpack.c.h.b16 %v89
  %v331 = vunpack.c.l.b16 %v90
  %v332 = vunpack.c.h.b16 %v90
  %v333 = vunpack.c.l.b16 %v91
  %v334 = vunpack.c.h.b16 %v91
  %v335 = vunpack.c.l.b16 %v92
  %v336 = vunpack.c.h.b16 %v92
  %v337 = vunpack.c.l.b16 %v93
  %v338 = vunpack.c.h.b16 %v93
  %v339 = vunpack.c.l.b16 %v94
  %v340 = vunpack.c.h.b16 %v94
  %v341 = vunpack.c.l.b16 %v95
  %v342 = vunpack.c.h.b16 %v95
  %v343 = vunpack.c.l.b16 %v96
  %v344 = vunpack.c.h.b16 %v96
  %v345 = vunpack.c.l.b16 %v97
  %v346 = vunpack.c.h.b16 %v97
  %v347 = vunpack.c.l.b16 %v98
  %v348 = vunpack.c.h.b16 %v98
  %v349 = vunpack.c.l.b16 %v99
  %v350 = vunpack.c.h.b16 %v99
  %v351 = vunpack.c.l.b16 %v100
  %v352 = vunpack.c.h.b16 %v100
  %v353 = vpack.c.b16 %v229, %v225
  %v354 = vpack.c.b16 %v230, %v226
  %v355 = vpack.c.b16 %v231, %v227
  %v356 = vpack.c.b16 %v232, %v228
  %v357 = vpack.c.b16 %v237, %v233
  %v358 = vpack.c.b16 %v238, %v234
  %v359 = vpack.c.b16 %v239, %v235
  %v360 = vpack.c.b16 %v240, %v236
  %v361 = vpack.c.b16 %v245, %v241
  %v362 = vpack.c.b16 %v246, %v242
  %v363 = vpack.c.b16 %v247, %v243
  %v364 = vpack.c.b16 %v248, %v244
  %v365 = vpack.c.b16 %v253, %v249
  %v366 = vpack.c.b16 %v254, %v250
  %v367 = vpack.c.b16 %v255, %v251
  %v368 = vpack.c.b16 %v256, %v252
  %v369 = vpack.c.b16 %v261, %v257
  %v370 = vpack.c.b16 %v262, %v258
  %v371 = vpack.c.b16 %v263, %v259
  %v372 = vpack.c.b16 %v264, %v260
  %v373 = vpack.c.b16 %v269, %v265
  %v374 = vpack.c.b16 %v270, %v266
  %v375 = vpack.c.b16 %v271, %v267
  %v376 = vpack.c.b16 %v272, %v268
  %v377 = vpack.c.b16 %v277, %v273
  %v378 = vpack.c.b16 %v278, %v274
  %v379 = vpack.c.b16 %v279, %v275
  %v380 = vpack.c.b16 %v280, %v276
  %v381 = vpack.c.b16 %v285, %v281
  %v382 = vpack.c.b16 %v286, %v282
  %v383 = vpack.c.b16 %v287, %v283
  %v384 = vpack.c.b16 %v288, %v284
  %v385 = vpack.c.b16 %v293, %v289
  %v386 = vpack.c.b16 %v294, %v290
  %v387 = vpack.c.b16 %v295, %v291
  %v388 = vpack.c.b16 %v296, %v292
  %v389 = vpack.c.b16 %v301, %v297
  %v390 = vpack.c.b16 %v302, %v298
  %v391 = vpack.c.b16 %v303, %v299
  %v392 = vpack.c.b16 %v304, %v300
  %v393 = vpack.c.b16 %v309, %v305
  %v394 = vpack.c.b16 %v310, %v306
  %v395 = vpack.c.b16 %v311, %v307
  %v396 = vpack.c.b16 %v312, %v308
  %v397 = vpack.c.b16 %v317, %v313
  %v398 = vpack.c.b16 %v318, %v314
  %v399 = vpack.c.b16 %v319, %v315
  %v400 = vpack.c.b16 %v320, %v316
  %v401 = vpack.c.b16 %v325, %v321
  %v402 = vpack.c.b16 %v326, %v322
  %v403 = vpack.c.b16 %v327, %v323
  %v404 = vpack.c.b16 %v328, %v324
  %v405 = vpack.c.b16 %v333, %v329
  %v406 = vpack.c.b16 %v334, %v330
  %v407 = vpack.c.b16 %v335, %v331
  %v408 = vpack.c.b16 %v336, %v332
  %v409 = vpack.c.b16 %v341, %v337
  %v410 = vpack.c.b16 %v342, %v338
  %v411 = vpack.c.b16 %v343, %v339
  %v412 = vpack.c.b16 %v344, %v340
  %v413 = vpack.c.b16 %v349, %v345
  %v414 = vpack.c.b16 %v350, %v346
  %v415 = vpack.c.b16 %v351, %v347
  %v416 = vpack.c.b16 %v352, %v348
  %481 = vmatprep.subr.bf16.mxu0 %v354
  %482 = vmatpush1.bf16.msra.mxu0 %v353
  %483 = vmatprep.subr.bf16.mxu0 %v358
  %484 = vmatpush1.bf16.msra.mxu0 %v357
  %485 = vmatprep.subr.bf16.mxu0 %v362
  %486 = vmatpush1.bf16.msra.mxu0 %v361
  %487 = vmatprep.subr.bf16.mxu0 %v366
  %488 = vmatpush1.bf16.msra.mxu0 %v365
  %489 = vmatprep.subr.bf16.mxu0 %v370
  %490 = vmatpush1.bf16.msra.mxu0 %v369
  %491 = vmatprep.subr.bf16.mxu0 %v374
  %492 = vmatpush1.bf16.msra.mxu0 %v373
  %493 = vmatprep.subr.bf16.mxu0 %v378
  %494 = vmatpush1.bf16.msra.mxu0 %v377
  %495 = vmatprep.subr.bf16.mxu0 %v382
  %496 = vmatpush1.bf16.msra.mxu0 %v381
  %497 = vmatprep.subr.bf16.mxu0 %v386
  %498 = vmatpush1.bf16.msra.mxu0 %v385
  %499 = vmatprep.subr.bf16.mxu0 %v390
  %500 = vmatpush1.bf16.msra.mxu0 %v389
  %501 = vmatprep.subr.bf16.mxu0 %v394
  %502 = vmatpush1.bf16.msra.mxu0 %v393
  %503 = vmatprep.subr.bf16.mxu0 %v398
  %504 = vmatpush1.bf16.msra.mxu0 %v397
  %505 = vmatprep.subr.bf16.mxu0 %v402
  %506 = vmatpush1.bf16.msra.mxu0 %v401
  %507 = vmatprep.subr.bf16.mxu0 %v406
  %508 = vmatpush1.bf16.msra.mxu0 %v405
  %509 = vmatprep.subr.bf16.mxu0 %v410
  %510 = vmatpush1.bf16.msra.mxu0 %v409
  %511 = vmatprep.subr.bf16.mxu0 %v414
  %512 = vmatpush1.bf16.msra.mxu0 %v413
  %513 = vmatprep.mubr.bf16.mxu0 %v138
  %514 = vmatmul.mubr.bf16.gmra.mrb[0].mxu0 %v137
  %v515 = vpop.f32.mrb[0].mxu0
  %v516 = vadd.f32 %v144, %v515
  %v517 = vpop.f32.mrb[0].mxu0
  %v518 = vadd.f32 %v148, %v517
  %v519 = vpop.f32.mrb[0].mxu0
  %v520 = vpop.f32.mrb[0].mxu0
  %521 = vdwg.mxu0
  %522 = vmatprep.subr.bf16.mxu0 %v356
  %523 = vmatpush1.bf16.msra.mxu0 %v355
  %524 = vmatprep.subr.bf16.mxu0 %v360
  %525 = vmatpush1.bf16.msra.mxu0 %v359
  %526 = vmatprep.subr.bf16.mxu0 %v364
  %527 = vmatpush1.bf16.msra.mxu0 %v363
  %528 = vmatprep.subr.bf16.mxu0 %v368
  %529 = vmatpush1.bf16.msra.mxu0 %v367
  %530 = vmatprep.subr.bf16.mxu0 %v372
  %531 = vmatpush1.bf16.msra.mxu0 %v371
  %532 = vmatprep.subr.bf16.mxu0 %v376
  %533 = vmatpush1.bf16.msra.mxu0 %v375
  %534 = vmatprep.subr.bf16.mxu0 %v380
  %535 = vmatpush1.bf16.msra.mxu0 %v379
  %536 = vmatprep.subr.bf16.mxu0 %v384
  %537 = vmatpush1.bf16.msra.mxu0 %v383
  %538 = vmatprep.subr.bf16.mxu0 %v388
  %539 = vmatpush1.bf16.msra.mxu0 %v387
  %540 = vmatprep.subr.bf16.mxu0 %v392
  %541 = vmatpush1.bf16.msra.mxu0 %v391
  %542 = vmatprep.subr.bf16.mxu0 %v396
  %543 = vmatpush1.bf16.msra.mxu0 %v395
  %544 = vmatprep.subr.bf16.mxu0 %v400
  %545 = vmatpush1.bf16.msra.mxu0 %v399
  %546 = vmatprep.subr.bf16.mxu0 %v404
  %547 = vmatpush1.bf16.msra.mxu0 %v403
  %548 = vmatprep.subr.bf16.mxu0 %v408
  %549 = vmatpush1.bf16.msra.mxu0 %v407
  %550 = vmatprep.subr.bf16.mxu0 %v412
  %551 = vmatpush1.bf16.msra.mxu0 %v411
  %552 = vmatprep.subr.bf16.mxu0 %v416
  %553 = vmatpush1.bf16.msra.mxu0 %v415
  %554 = vmatprep.mubr.bf16.mxu0 %v138
  %555 = vmatmul.mubr.bf16.gmra.mrb[0].mxu0 %v137
  %v556 = vpop.f32.mrb[0].mxu0
  %v557 = vadd.f32 %v152, %v556
  %v558 = vpop.f32.mrb[0].mxu0
  %v559 = vadd.f32 %v156, %v558
  %v560 = vpop.f32.mrb[0].mxu0
  %v561 = vpop.f32.mrb[0].mxu0
  %562 = vdwg.mxu0
  %v563 = vxor.u32 %v516, 2147483648
  %v564 = vxor.u32 %v518, 2147483648
  %v565 = vxor.u32 %v557, 2147483648
  %v566 = vmul.f32 %v563, 1.442695
  %v567 = vpow.pop %v566
  %v568 = vmul.f32 %v564, 1.442695
  %v569 = vpow.pop %v568
  %v570 = vmul.f32 %v565, 1.442695
  %v571 = vpow.pop %v570
  %v572 = vadd.f32 %v567, 1.0
  %v573 = vadd.f32 %v569, 1.0
  %v574 = vadd.f32 %v571, 1.0
  %v575 = vrcp.pop %v572
  %v576 = vmul.f32 1.0, %v575
  %v577 = vrcp.pop %v573
  %v578 = vmul.f32 1.0, %v577
  %v579 = vrcp.pop %v574
  %v580 = vmul.f32 1.0, %v579
  %v581 = vtanh.pop %v559
  %v582 = vmul.f32 %v578, %v139
  %v583 = vmul.f32 %v576, %v581
  %v584 = vadd.f32 %v582, %v583
  %v585 = vtanh.pop %v584
  %v586 = vmul.f32 %v580, %v585
  %v587 = vpack.c.bf16 %v586, %v586
  %v589 = vlaneseq
  %v590 = vshrl.u32 %v589, 7
  %v591 = vsub.s32 0, %v590
  %v592 = vrot.slane %v118, %v591
  %v610 = vunpack.c.l.b16 %v102
  %v611 = vunpack.c.l.b16 %v103
  %v612 = vunpack.c.l.b16 %v104
  %v613 = vunpack.c.l.b16 %v105
  %v614 = vunpack.c.l.b16 %v106
  %v615 = vunpack.c.l.b16 %v107
  %v616 = vunpack.c.l.b16 %v108
  %v617 = vunpack.c.l.b16 %v109
  %v618 = vunpack.c.l.b16 %v110
  %v619 = vunpack.c.l.b16 %v111
  %v620 = vunpack.c.l.b16 %v112
  %v621 = vunpack.c.l.b16 %v113
  %v622 = vunpack.c.l.b16 %v114
  %v623 = vunpack.c.l.b16 %v115
  %v624 = vunpack.c.l.b16 %v116
  %v625 = vunpack.c.l.b16 %v117
  %v626 = vpack.c.b16 %v611, %v610
  %v627 = vpack.c.b16 %v613, %v612
  %v628 = vpack.c.b16 %v615, %v614
  %v629 = vpack.c.b16 %v617, %v616
  %v630 = vpack.c.b16 %v619, %v618
  %v631 = vpack.c.b16 %v621, %v620
  %v632 = vpack.c.b16 %v623, %v622
  %v633 = vpack.c.b16 %v625, %v624
  %642 = vmatprep.subr.bf16.mxu0 0
  %643 = vmatpush1.bf16.msra.mxu0 %v626
  %644 = vmatprep.subr.bf16.mxu0 0
  %645 = vmatpush1.bf16.msra.mxu0 %v627
  %646 = vmatprep.subr.bf16.mxu0 0
  %647 = vmatpush1.bf16.msra.mxu0 %v628
  %648 = vmatprep.subr.bf16.mxu0 0
  %649 = vmatpush1.bf16.msra.mxu0 %v629
  %650 = vmatprep.subr.bf16.mxu0 0
  %651 = vmatpush1.bf16.msra.mxu0 %v630
  %652 = vmatprep.subr.bf16.mxu0 0
  %653 = vmatpush1.bf16.msra.mxu0 %v631
  %654 = vmatprep.subr.bf16.mxu0 0
  %655 = vmatpush1.bf16.msra.mxu0 %v632
  %656 = vmatprep.subr.bf16.mxu0 0
  %657 = vmatpush1.bf16.msra.mxu0 %v633
  %658 = vmatprep.subr.bf16.mxu0 0
  %659 = vmatpush1.bf16.msra.mxu0 0
  %660 = vmatprep.subr.bf16.mxu0 0
  %661 = vmatpush1.bf16.msra.mxu0 0
  %662 = vmatprep.subr.bf16.mxu0 0
  %663 = vmatpush1.bf16.msra.mxu0 0
  %664 = vmatprep.subr.bf16.mxu0 0
  %665 = vmatpush1.bf16.msra.mxu0 0
  %666 = vmatprep.subr.bf16.mxu0 0
  %667 = vmatpush1.bf16.msra.mxu0 0
  %668 = vmatprep.subr.bf16.mxu0 0
  %669 = vmatpush1.bf16.msra.mxu0 0
  %670 = vmatprep.subr.bf16.mxu0 0
  %671 = vmatpush1.bf16.msra.mxu0 0
  %672 = vmatprep.subr.bf16.mxu0 0
  %673 = vmatpush1.bf16.msra.mxu0 0
  %674 = vmatprep.mubr.bf16.mxu0 0
  %675 = vmatmul.mubr.bf16.gmra.mrb[0].mxu0 %v587
  %v676 = vpop.f32.mrb[0].mxu0
  %v677 = vadd.f32 %v592, %v676
  %v678 = vpop.f32.mrb[0].mxu0
  %v679 = vpop.f32.mrb[0].mxu0
  %v680 = vpop.f32.mrb[0].mxu0
  %681 = vdwg.mxu0
  %682 = vst [vmem:[%s9] sm:$0xff] %v677
  %683 = vmax.xlane.f32.xlu0 %v677
  %v684 = vpop.xlane.xlu0 %683
  %vm685 = vcmp.eq.f32.partialorder %v677, %v684
  %v686 = vsel %vm685, %v136, 128
  %v687 = vand.u32 %v686, 65535
  %v688 = vshra.s32 %v686, 16
  %v689 = vcvt.s32.f32 %v687
  %v690 = vcvt.s32.f32 %v688
  %691 = vmin.xlane.f32.xlu0 %v690
  %v692 = vpop.xlane.xlu0 %691
  %vm693 = vcmp.eq.f32.partialorder %v690, %v692
  %v694 = vsel %vm693, %v689, inf
  %695 = vmin.xlane.f32.xlu0 %v694
  %v696 = vpop.xlane.xlu0 %695
  %v697 = vcvt.f32.s32 %v696
  %v698 = vcvt.f32.s32 %v692
  %v699 = vshll.u32 %v698, 16
  %v700 = vadd.s32 %v699, %v697
  %vm701 = vcmp.eq.s32.totalorder %v136, %v700
  %v702 = vsel %vm701, 1, 0
  %v703 = vcvt.s32.f32 %v702
  %v704 = vpack.c.bf16 %v703, %v703
  %v721 = vunpack.c.l.b16 %v119
  %v722 = vunpack.c.l.b16 %v120
  %v723 = vunpack.c.l.b16 %v121
  %v724 = vunpack.c.l.b16 %v122
  %v725 = vunpack.c.l.b16 %v123
  %v726 = vunpack.c.l.b16 %v124
  %v727 = vunpack.c.l.b16 %v125
  %v728 = vunpack.c.l.b16 %v126
  %v729 = vunpack.c.l.b16 %v127
  %v730 = vunpack.c.l.b16 %v128
  %v731 = vunpack.c.l.b16 %v129
  %v732 = vunpack.c.l.b16 %v130
  %v733 = vunpack.c.l.b16 %v131
  %v734 = vunpack.c.l.b16 %v132
  %v735 = vunpack.c.l.b16 %v133
  %v736 = vunpack.c.l.b16 %v134
  %v737 = vpack.c.b16 %v722, %v721
  %v738 = vpack.c.b16 %v724, %v723
  %v739 = vpack.c.b16 %v726, %v725
  %v740 = vpack.c.b16 %v728, %v727
  %v741 = vpack.c.b16 %v730, %v729
  %v742 = vpack.c.b16 %v732, %v731
  %v743 = vpack.c.b16 %v734, %v733
  %v744 = vpack.c.b16 %v736, %v735
  %753 = vmatprep.subr.bf16.mxu0 0
  %754 = vmatpush1.bf16.msra.mxu0 %v737
  %755 = vmatprep.subr.bf16.mxu0 0
  %756 = vmatpush1.bf16.msra.mxu0 %v738
  %757 = vmatprep.subr.bf16.mxu0 0
  %758 = vmatpush1.bf16.msra.mxu0 %v739
  %759 = vmatprep.subr.bf16.mxu0 0
  %760 = vmatpush1.bf16.msra.mxu0 %v740
  %761 = vmatprep.subr.bf16.mxu0 0
  %762 = vmatpush1.bf16.msra.mxu0 %v741
  %763 = vmatprep.subr.bf16.mxu0 0
  %764 = vmatpush1.bf16.msra.mxu0 %v742
  %765 = vmatprep.subr.bf16.mxu0 0
  %766 = vmatpush1.bf16.msra.mxu0 %v743
  %767 = vmatprep.subr.bf16.mxu0 0
  %768 = vmatpush1.bf16.msra.mxu0 %v744
  %769 = vmatprep.subr.bf16.mxu0 0
  %770 = vmatpush1.bf16.msra.mxu0 0
  %771 = vmatprep.subr.bf16.mxu0 0
  %772 = vmatpush1.bf16.msra.mxu0 0
  %773 = vmatprep.subr.bf16.mxu0 0
  %774 = vmatpush1.bf16.msra.mxu0 0
  %775 = vmatprep.subr.bf16.mxu0 0
  %776 = vmatpush1.bf16.msra.mxu0 0
  %777 = vmatprep.subr.bf16.mxu0 0
  %778 = vmatpush1.bf16.msra.mxu0 0
  %779 = vmatprep.subr.bf16.mxu0 0
  %780 = vmatpush1.bf16.msra.mxu0 0
  %781 = vmatprep.subr.bf16.mxu0 0
  %782 = vmatpush1.bf16.msra.mxu0 0
  %783 = vmatprep.subr.bf16.mxu0 0
  %784 = vmatpush1.bf16.msra.mxu0 0
  %785 = vmatprep.mubr.bf16.mxu0 0
  %786 = vmatmul.mubr.bf16.gmra.mrb[0].mxu0 %v704
  %v787 = vpop.f32.mrb[0].mxu0
  %v788 = vadd.f32 0.0, %v787
  %v789 = vpop.f32.mrb[0].mxu0
  %v790 = vpop.f32.mrb[0].mxu0
  %v791 = vpop.f32.mrb[0].mxu0
  %792 = vdwg.mxu0
  %v793 = vpack.c.bf16 %v788, %v788
  %s794 = sld [smem:[#allocation3 + $0x1]]
  %p795 = scmp.eq.s32.totalorder %s794, 1
  %s796 = scalar_lea.vmem %s1, 4
  %v797 = vld [vmem:[%s796] sm:$0xf]
  %s798 = scalar_select %p795, 1, 0
  %v799 = vstv %s798
  %vm800 = vcmp.eq.s32.totalorder %v799, 1
  %v801 = vsel %vm800, %v793, %v797
  %802 = vmatprep.subr.bf16.mxu0 %v354
  %803 = vmatpush1.bf16.msra.mxu0 %v353
  %804 = vmatprep.subr.bf16.mxu0 %v358
  %805 = vmatpush1.bf16.msra.mxu0 %v357
  %806 = vmatprep.subr.bf16.mxu0 %v362
  %807 = vmatpush1.bf16.msra.mxu0 %v361
  %808 = vmatprep.subr.bf16.mxu0 %v366
  %809 = vmatpush1.bf16.msra.mxu0 %v365
  %810 = vmatprep.subr.bf16.mxu0 %v370
  %811 = vmatpush1.bf16.msra.mxu0 %v369
  %812 = vmatprep.subr.bf16.mxu0 %v374
  %813 = vmatpush1.bf16.msra.mxu0 %v373
  %814 = vmatprep.subr.bf16.mxu0 %v378
  %815 = vmatpush1.bf16.msra.mxu0 %v377
  %816 = vmatprep.subr.bf16.mxu0 %v382
  %817 = vmatpush1.bf16.msra.mxu0 %v381
  %818 = vmatprep.subr.bf16.mxu0 %v386
  %819 = vmatpush1.bf16.msra.mxu0 %v385
  %820 = vmatprep.subr.bf16.mxu0 %v390
  %821 = vmatpush1.bf16.msra.mxu0 %v389
  %822 = vmatprep.subr.bf16.mxu0 %v394
  %823 = vmatpush1.bf16.msra.mxu0 %v393
  %824 = vmatprep.subr.bf16.mxu0 %v398
  %825 = vmatpush1.bf16.msra.mxu0 %v397
  %826 = vmatprep.subr.bf16.mxu0 %v402
  %827 = vmatpush1.bf16.msra.mxu0 %v401
  %828 = vmatprep.subr.bf16.mxu0 %v406
  %829 = vmatpush1.bf16.msra.mxu0 %v405
  %830 = vmatprep.subr.bf16.mxu0 %v410
  %831 = vmatpush1.bf16.msra.mxu0 %v409
  %832 = vmatprep.subr.bf16.mxu0 %v414
  %833 = vmatpush1.bf16.msra.mxu0 %v413
  %834 = vmatprep.mubr.bf16.mxu0 %v587
  %835 = vmatmul.mubr.bf16.gmra.mrb[0].mxu0 %v801
  %v836 = vpop.f32.mrb[0].mxu0
  %v837 = vadd.f32 %v144, %v836
  %v838 = vpop.f32.mrb[0].mxu0
  %v839 = vadd.f32 %v148, %v838
  %v840 = vpop.f32.mrb[0].mxu0
  %v841 = vpop.f32.mrb[0].mxu0
  %842 = vdwg.mxu0
  %843 = vmatprep.subr.bf16.mxu0 %v356
  %844 = vmatpush1.bf16.msra.mxu0 %v355
  %845 = vmatprep.subr.bf16.mxu0 %v360
  %846 = vmatpush1.bf16.msra.mxu0 %v359
  %847 = vmatprep.subr.bf16.mxu0 %v364
  %848 = vmatpush1.bf16.msra.mxu0 %v363
  %849 = vmatprep.subr.bf16.mxu0 %v368
  %850 = vmatpush1.bf16.msra.mxu0 %v367
  %851 = vmatprep.subr.bf16.mxu0 %v372
  %852 = vmatpush1.bf16.msra.mxu0 %v371
  %853 = vmatprep.subr.bf16.mxu0 %v376
  %854 = vmatpush1.bf16.msra.mxu0 %v375
  %855 = vmatprep.subr.bf16.mxu0 %v380
  %856 = vmatpush1.bf16.msra.mxu0 %v379
  %857 = vmatprep.subr.bf16.mxu0 %v384
  %858 = vmatpush1.bf16.msra.mxu0 %v383
  %859 = vmatprep.subr.bf16.mxu0 %v388
  %860 = vmatpush1.bf16.msra.mxu0 %v387
  %861 = vmatprep.subr.bf16.mxu0 %v392
  %862 = vmatpush1.bf16.msra.mxu0 %v391
  %863 = vmatprep.subr.bf16.mxu0 %v396
  %864 = vmatpush1.bf16.msra.mxu0 %v395
  %865 = vmatprep.subr.bf16.mxu0 %v400
  %866 = vmatpush1.bf16.msra.mxu0 %v399
  %867 = vmatprep.subr.bf16.mxu0 %v404
  %868 = vmatpush1.bf16.msra.mxu0 %v403
  %869 = vmatprep.subr.bf16.mxu0 %v408
  %870 = vmatpush1.bf16.msra.mxu0 %v407
  %871 = vmatprep.subr.bf16.mxu0 %v412
  %872 = vmatpush1.bf16.msra.mxu0 %v411
  %873 = vmatprep.subr.bf16.mxu0 %v416
  %874 = vmatpush1.bf16.msra.mxu0 %v415
  %875 = vmatprep.mubr.bf16.mxu0 %v587
  %876 = vmatmul.mubr.bf16.gmra.mrb[0].mxu0 %v801
  %v877 = vpop.f32.mrb[0].mxu0
  %v878 = vadd.f32 %v152, %v877
  %v879 = vpop.f32.mrb[0].mxu0
  %v880 = vadd.f32 %v156, %v879
  %v881 = vpop.f32.mrb[0].mxu0
  %v882 = vpop.f32.mrb[0].mxu0
  %883 = vdwg.mxu0
  %v884 = vxor.u32 %v837, 2147483648
  %v885 = vxor.u32 %v839, 2147483648
  %v886 = vxor.u32 %v878, 2147483648
  %v887 = vmul.f32 %v884, 1.442695
  %v888 = vpow.pop %v887
  %v889 = vmul.f32 %v885, 1.442695
  %v890 = vpow.pop %v889
  %v891 = vmul.f32 %v886, 1.442695
  %v892 = vpow.pop %v891
  %v893 = vadd.f32 %v888, 1.0
  %v894 = vadd.f32 %v890, 1.0
  %v895 = vadd.f32 %v892, 1.0
  %v896 = vrcp.pop %v893
  %v897 = vmul.f32 1.0, %v896
  %v898 = vrcp.pop %v894
  %v899 = vmul.f32 1.0, %v898
  %v900 = vrcp.pop %v895
  %v901 = vmul.f32 1.0, %v900
  %v902 = vtanh.pop %v880
  %v903 = vmul.f32 %v899, %v584
  %v904 = vmul.f32 %v897, %v902
  %v905 = vadd.f32 %v903, %v904
  %v906 = vtanh.pop %v905
  %v907 = vmul.f32 %v901, %v906
  %v908 = vpack.c.bf16 %v907, %v907
  %909 = vmatprep.subr.bf16.mxu0 0
  %910 = vmatpush1.bf16.msra.mxu0 %v626
  %911 = vmatprep.subr.bf16.mxu0 0
  %912 = vmatpush1.bf16.msra.mxu0 %v627
  %913 = vmatprep.subr.bf16.mxu0 0
  %914 = vmatpush1.bf16.msra.mxu0 %v628
  %915 = vmatprep.subr.bf16.mxu0 0
  %916 = vmatpush1.bf16.msra.mxu0 %v629
  %917 = vmatprep.subr.bf16.mxu0 0
  %918 = vmatpush1.bf16.msra.mxu0 %v630
  %919 = vmatprep.subr.bf16.mxu0 0
  %920 = vmatpush1.bf16.msra.mxu0 %v631
  %921 = vmatprep.subr.bf16.mxu0 0
  %922 = vmatpush1.bf16.msra.mxu0 %v632
  %923 = vmatprep.subr.bf16.mxu0 0
  %924 = vmatpush1.bf16.msra.mxu0 %v633
  %925 = vmatprep.subr.bf16.mxu0 0
  %926 = vmatpush1.bf16.msra.mxu0 0
  %927 = vmatprep.subr.bf16.mxu0 0
  %928 = vmatpush1.bf16.msra.mxu0 0
  %929 = vmatprep.subr.bf16.mxu0 0
  %930 = vmatpush1.bf16.msra.mxu0 0
  %931 = vmatprep.subr.bf16.mxu0 0
  %932 = vmatpush1.bf16.msra.mxu0 0
  %933 = vmatprep.subr.bf16.mxu0 0
  %934 = vmatpush1.bf16.msra.mxu0 0
  %935 = vmatprep.subr.bf16.mxu0 0
  %936 = vmatpush1.bf16.msra.mxu0 0
  %937 = vmatprep.subr.bf16.mxu0 0
  %938 = vmatpush1.bf16.msra.mxu0 0
  %939 = vmatprep.subr.bf16.mxu0 0
  %940 = vmatpush1.bf16.msra.mxu0 0
  %941 = vmatprep.mubr.bf16.mxu0 0
  %942 = vmatmul.mubr.bf16.gmra.mrb[0].mxu0 %v908
  %v943 = vpop.f32.mrb[0].mxu0
  %v944 = vadd.f32 %v592, %v943
  %v945 = vpop.f32.mrb[0].mxu0
  %v946 = vpop.f32.mrb[0].mxu0
  %v947 = vpop.f32.mrb[0].mxu0
  %948 = vdwg.mxu0
  %s949 = scalar_lea.vmem %s9, 8
  %950 = vst [vmem:[%s949] sm:$0xff] %v944
  %951 = vmax.xlane.f32.xlu0 %v944
  %v952 = vpop.xlane.xlu0 %951
  %vm953 = vcmp.eq.f32.partialorder %v944, %v952
  %v954 = vsel %vm953, %v136, 128
  %v955 = vand.u32 %v954, 65535
  %v956 = vshra.s32 %v954, 16
  %v957 = vcvt.s32.f32 %v955
  %v958 = vcvt.s32.f32 %v956
  %959 = vmin.xlane.f32.xlu0 %v958
  %v960 = vpop.xlane.xlu0 %959
  %vm961 = vcmp.eq.f32.partialorder %v958, %v960
  %v962 = vsel %vm961, %v957, inf
  %963 = vmin.xlane.f32.xlu0 %v962
  %v964 = vpop.xlane.xlu0 %963
  %v965 = vcvt.f32.s32 %v964
  %v966 = vcvt.f32.s32 %v960
  %v967 = vshll.u32 %v966, 16
  %v968 = vadd.s32 %v967, %v965
  %vm969 = vcmp.eq.s32.totalorder %v136, %v968
  %v970 = vsel %vm969, 1, 0
  %v971 = vcvt.s32.f32 %v970
  %v972 = vpack.c.bf16 %v971, %v971
  %973 = vmatprep.subr.bf16.mxu0 0
  %974 = vmatpush1.bf16.msra.mxu0 %v737
  %975 = vmatprep.subr.bf16.mxu0 0
  %976 = vmatpush1.bf16.msra.mxu0 %v738
  %977 = vmatprep.subr.bf16.mxu0 0
  %978 = vmatpush1.bf16.msra.mxu0 %v739
  %979 = vmatprep.subr.bf16.mxu0 0
  %980 = vmatpush1.bf16.msra.mxu0 %v740
  %981 = vmatprep.subr.bf16.mxu0 0
  %982 = vmatpush1.bf16.msra.mxu0 %v741
  %983 = vmatprep.subr.bf16.mxu0 0
  %984 = vmatpush1.bf16.msra.mxu0 %v742
  %985 = vmatprep.subr.bf16.mxu0 0
  %986 = vmatpush1.bf16.msra.mxu0 %v743
  %987 = vmatprep.subr.bf16.mxu0 0
  %988 = vmatpush1.bf16.msra.mxu0 %v744
  %989 = vmatprep.subr.bf16.mxu0 0
  %990 = vmatpush1.bf16.msra.mxu0 0
  %991 = vmatprep.subr.bf16.mxu0 0
  %992 = vmatpush1.bf16.msra.mxu0 0
  %993 = vmatprep.subr.bf16.mxu0 0
  %994 = vmatpush1.bf16.msra.mxu0 0
  %995 = vmatprep.subr.bf16.mxu0 0
  %996 = vmatpush1.bf16.msra.mxu0 0
  %997 = vmatprep.subr.bf16.mxu0 0
  %998 = vmatpush1.bf16.msra.mxu0 0
  %999 = vmatprep.subr.bf16.mxu0 0
  %1000 = vmatpush1.bf16.msra.mxu0 0
  %1001 = vmatprep.subr.bf16.mxu0 0
  %1002 = vmatpush1.bf16.msra.mxu0 0
  %1003 = vmatprep.subr.bf16.mxu0 0
  %1004 = vmatpush1.bf16.msra.mxu0 0
  %1005 = vmatprep.mubr.bf16.mxu0 0
  %1006 = vmatmul.mubr.bf16.gmra.mrb[0].mxu0 %v972
  %v1007 = vpop.f32.mrb[0].mxu0
  %v1008 = vadd.f32 0.0, %v1007
  %v1009 = vpop.f32.mrb[0].mxu0
  %v1010 = vpop.f32.mrb[0].mxu0
  %v1011 = vpop.f32.mrb[0].mxu0
  %1012 = vdwg.mxu0
  %v1013 = vpack.c.bf16 %v1008, %v1008
  %s1014 = sld [smem:[#allocation3 + $0x2]]
  %p1015 = scmp.eq.s32.totalorder %s1014, 1
  %s1016 = scalar_lea.vmem %s1, 8
  %v1017 = vld [vmem:[%s1016] sm:$0xf]
  %s1018 = scalar_select %p1015, 1, 0
  %v1019 = vstv %s1018
  %vm1020 = vcmp.eq.s32.totalorder %v1019, 1
  %v1021 = vsel %vm1020, %v1013, %v1017
  %1022 = vmatprep.subr.bf16.mxu0 %v354
  %1023 = vmatpush1.bf16.msra.mxu0 %v353
  %1024 = vmatprep.subr.bf16.mxu0 %v358
  %1025 = vmatpush1.bf16.msra.mxu0 %v357
  %1026 = vmatprep.subr.bf16.mxu0 %v362
  %1027 = vmatpush1.bf16.msra.mxu0 %v361
  %1028 = vmatprep.subr.bf16.mxu0 %v366
  %1029 = vmatpush1.bf16.msra.mxu0 %v365
  %1030 = vmatprep.subr.bf16.mxu0 %v370
  %1031 = vmatpush1.bf16.msra.mxu0 %v369
  %1032 = vmatprep.subr.bf16.mxu0 %v374
  %1033 = vmatpush1.bf16.msra.mxu0 %v373
  %1034 = vmatprep.subr.bf16.mxu0 %v378
  %1035 = vmatpush1.bf16.msra.mxu0 %v377
  %1036 = vmatprep.subr.bf16.mxu0 %v382
  %1037 = vmatpush1.bf16.msra.mxu0 %v381
  %1038 = vmatprep.subr.bf16.mxu0 %v386
  %1039 = vmatpush1.bf16.msra.mxu0 %v385
  %1040 = vmatprep.subr.bf16.mxu0 %v390
  %1041 = vmatpush1.bf16.msra.mxu0 %v389
  %1042 = vmatprep.subr.bf16.mxu0 %v394
  %1043 = vmatpush1.bf16.msra.mxu0 %v393
  %1044 = vmatprep.subr.bf16.mxu0 %v398
  %1045 = vmatpush1.bf16.msra.mxu0 %v397
  %1046 = vmatprep.subr.bf16.mxu0 %v402
  %1047 = vmatpush1.bf16.msra.mxu0 %v401
  %1048 = vmatprep.subr.bf16.mxu0 %v406
  %1049 = vmatpush1.bf16.msra.mxu0 %v405
  %1050 = vmatprep.subr.bf16.mxu0 %v410
  %1051 = vmatpush1.bf16.msra.mxu0 %v409
  %1052 = vmatprep.subr.bf16.mxu0 %v414
  %1053 = vmatpush1.bf16.msra.mxu0 %v413
  %1054 = vmatprep.mubr.bf16.mxu0 %v908
  %1055 = vmatmul.mubr.bf16.gmra.mrb[0].mxu0 %v1021
  %v1056 = vpop.f32.mrb[0].mxu0
  %v1057 = vadd.f32 %v144, %v1056
  %v1058 = vpop.f32.mrb[0].mxu0
  %v1059 = vadd.f32 %v148, %v1058
  %v1060 = vpop.f32.mrb[0].mxu0
  %v1061 = vpop.f32.mrb[0].mxu0
  %1062 = vdwg.mxu0
  %1063 = vmatprep.subr.bf16.mxu0 %v356
  %1064 = vmatpush1.bf16.msra.mxu0 %v355
  %1065 = vmatprep.subr.bf16.mxu0 %v360
  %1066 = vmatpush1.bf16.msra.mxu0 %v359
  %1067 = vmatprep.subr.bf16.mxu0 %v364
  %1068 = vmatpush1.bf16.msra.mxu0 %v363
  %1069 = vmatprep.subr.bf16.mxu0 %v368
  %1070 = vmatpush1.bf16.msra.mxu0 %v367
  %1071 = vmatprep.subr.bf16.mxu0 %v372
  %1072 = vmatpush1.bf16.msra.mxu0 %v371
  %1073 = vmatprep.subr.bf16.mxu0 %v376
  %1074 = vmatpush1.bf16.msra.mxu0 %v375
  %1075 = vmatprep.subr.bf16.mxu0 %v380
  %1076 = vmatpush1.bf16.msra.mxu0 %v379
  %1077 = vmatprep.subr.bf16.mxu0 %v384
  %1078 = vmatpush1.bf16.msra.mxu0 %v383
  %1079 = vmatprep.subr.bf16.mxu0 %v388
  %1080 = vmatpush1.bf16.msra.mxu0 %v387
  %1081 = vmatprep.subr.bf16.mxu0 %v392
  %1082 = vmatpush1.bf16.msra.mxu0 %v391
  %1083 = vmatprep.subr.bf16.mxu0 %v396
  %1084 = vmatpush1.bf16.msra.mxu0 %v395
  %1085 = vmatprep.subr.bf16.mxu0 %v400
  %1086 = vmatpush1.bf16.msra.mxu0 %v399
  %1087 = vmatprep.subr.bf16.mxu0 %v404
  %1088 = vmatpush1.bf16.msra.mxu0 %v403
  %1089 = vmatprep.subr.bf16.mxu0 %v408
  %1090 = vmatpush1.bf16.msra.mxu0 %v407
  %1091 = vmatprep.subr.bf16.mxu0 %v412
  %1092 = vmatpush1.bf16.msra.mxu0 %v411
  %1093 = vmatprep.subr.bf16.mxu0 %v416
  %1094 = vmatpush1.bf16.msra.mxu0 %v415
  %1095 = vmatprep.mubr.bf16.mxu0 %v908
  %1096 = vmatmul.mubr.bf16.gmra.mrb[0].mxu0 %v1021
  %v1097 = vpop.f32.mrb[0].mxu0
  %v1098 = vadd.f32 %v152, %v1097
  %v1099 = vpop.f32.mrb[0].mxu0
  %v1100 = vadd.f32 %v156, %v1099
  %v1101 = vpop.f32.mrb[0].mxu0
  %v1102 = vpop.f32.mrb[0].mxu0
  %1103 = vdwg.mxu0
  %v1104 = vxor.u32 %v1057, 2147483648
  %v1105 = vxor.u32 %v1059, 2147483648
  %v1106 = vxor.u32 %v1098, 2147483648
  %v1107 = vmul.f32 %v1104, 1.442695
  %v1108 = vpow.pop %v1107
  %v1109 = vmul.f32 %v1105, 1.442695
  %v1110 = vpow.pop %v1109
  %v1111 = vmul.f32 %v1106, 1.442695
  %v1112 = vpow.pop %v1111
  %v1113 = vadd.f32 %v1108, 1.0
  %v1114 = vadd.f32 %v1110, 1.0
  %v1115 = vadd.f32 %v1112, 1.0
  %v1116 = vrcp.pop %v1113
  %v1117 = vmul.f32 1.0, %v1116
  %v1118 = vrcp.pop %v1114
  %v1119 = vmul.f32 1.0, %v1118
  %v1120 = vrcp.pop %v1115
  %v1121 = vmul.f32 1.0, %v1120
  %v1122 = vtanh.pop %v1100
  %v1123 = vmul.f32 %v1119, %v905
  %v1124 = vmul.f32 %v1117, %v1122
  %v1125 = vadd.f32 %v1123, %v1124
  %v1126 = vtanh.pop %v1125
  %v1127 = vmul.f32 %v1121, %v1126
  %v1128 = vpack.c.bf16 %v1127, %v1127
  %1129 = vmatprep.subr.bf16.mxu0 0
  %1130 = vmatpush1.bf16.msra.mxu0 %v626
  %1131 = vmatprep.subr.bf16.mxu0 0
  %1132 = vmatpush1.bf16.msra.mxu0 %v627
  %1133 = vmatprep.subr.bf16.mxu0 0
  %1134 = vmatpush1.bf16.msra.mxu0 %v628
  %1135 = vmatprep.subr.bf16.mxu0 0
  %1136 = vmatpush1.bf16.msra.mxu0 %v629
  %1137 = vmatprep.subr.bf16.mxu0 0
  %1138 = vmatpush1.bf16.msra.mxu0 %v630
  %1139 = vmatprep.subr.bf16.mxu0 0
  %1140 = vmatpush1.bf16.msra.mxu0 %v631
  %1141 = vmatprep.subr.bf16.mxu0 0
  %1142 = vmatpush1.bf16.msra.mxu0 %v632
  %1143 = vmatprep.subr.bf16.mxu0 0
  %1144 = vmatpush1.bf16.msra.mxu0 %v633
  %1145 = vmatprep.subr.bf16.mxu0 0
  %1146 = vmatpush1.bf16.msra.mxu0 0
  %1147 = vmatprep.subr.bf16.mxu0 0
  %1148 = vmatpush1.bf16.msra.mxu0 0
  %1149 = vmatprep.subr.bf16.mxu0 0
  %1150 = vmatpush1.bf16.msra.mxu0 0
  %1151 = vmatprep.subr.bf16.mxu0 0
  %1152 = vmatpush1.bf16.msra.mxu0 0
  %1153 = vmatprep.subr.bf16.mxu0 0
  %1154 = vmatpush1.bf16.msra.mxu0 0
  %1155 = vmatprep.subr.bf16.mxu0 0
  %1156 = vmatpush1.bf16.msra.mxu0 0
  %1157 = vmatprep.subr.bf16.mxu0 0
  %1158 = vmatpush1.bf16.msra.mxu0 0
  %1159 = vmatprep.subr.bf16.mxu0 0
  %1160 = vmatpush1.bf16.msra.mxu0 0
  %1161 = vmatprep.mubr.bf16.mxu0 0
  %1162 = vmatmul.mubr.bf16.gmra.mrb[0].mxu0 %v1128
  %v1163 = vpop.f32.mrb[0].mxu0
  %v1164 = vadd.f32 %v592, %v1163
  %v1165 = vpop.f32.mrb[0].mxu0
  %v1166 = vpop.f32.mrb[0].mxu0
  %v1167 = vpop.f32.mrb[0].mxu0
  %1168 = vdwg.mxu0
  %s1169 = scalar_lea.vmem %s9, 16
  %1170 = vst [vmem:[%s1169] sm:$0xff] %v1164
  %1171 = vmax.xlane.f32.xlu0 %v1164
  %v1172 = vpop.xlane.xlu0 %1171
  %vm1173 = vcmp.eq.f32.partialorder %v1164, %v1172
  %v1174 = vsel %vm1173, %v136, 128
  %v1175 = vand.u32 %v1174, 65535
  %v1176 = vshra.s32 %v1174, 16
  %v1177 = vcvt.s32.f32 %v1175
  %v1178 = vcvt.s32.f32 %v1176
  %1179 = vmin.xlane.f32.xlu0 %v1178
  %v1180 = vpop.xlane.xlu0 %1179
  %vm1181 = vcmp.eq.f32.partialorder %v1178, %v1180
  %v1182 = vsel %vm1181, %v1177, inf
  %1183 = vmin.xlane.f32.xlu0 %v1182
  %v1184 = vpop.xlane.xlu0 %1183
  %v1185 = vcvt.f32.s32 %v1184
  %v1186 = vcvt.f32.s32 %v1180
  %v1187 = vshll.u32 %v1186, 16
  %v1188 = vadd.s32 %v1187, %v1185
  %vm1189 = vcmp.eq.s32.totalorder %v136, %v1188
  %v1190 = vsel %vm1189, 1, 0
  %v1191 = vcvt.s32.f32 %v1190
  %v1192 = vpack.c.bf16 %v1191, %v1191
  %1193 = vmatprep.subr.bf16.mxu0 0
  %1194 = vmatpush1.bf16.msra.mxu0 %v737
  %1195 = vmatprep.subr.bf16.mxu0 0
  %1196 = vmatpush1.bf16.msra.mxu0 %v738
  %1197 = vmatprep.subr.bf16.mxu0 0
  %1198 = vmatpush1.bf16.msra.mxu0 %v739
  %1199 = vmatprep.subr.bf16.mxu0 0
  %1200 = vmatpush1.bf16.msra.mxu0 %v740
  %1201 = vmatprep.subr.bf16.mxu0 0
  %1202 = vmatpush1.bf16.msra.mxu0 %v741
  %1203 = vmatprep.subr.bf16.mxu0 0
  %1204 = vmatpush1.bf16.msra.mxu0 %v742
  %1205 = vmatprep.subr.bf16.mxu0 0
  %1206 = vmatpush1.bf16.msra.mxu0 %v743
  %1207 = vmatprep.subr.bf16.mxu0 0
  %1208 = vmatpush1.bf16.msra.mxu0 %v744
  %1209 = vmatprep.subr.bf16.mxu0 0
  %1210 = vmatpush1.bf16.msra.mxu0 0
  %1211 = vmatprep.subr.bf16.mxu0 0
  %1212 = vmatpush1.bf16.msra.mxu0 0
  %1213 = vmatprep.subr.bf16.mxu0 0
  %1214 = vmatpush1.bf16.msra.mxu0 0
  %1215 = vmatprep.subr.bf16.mxu0 0
  %1216 = vmatpush1.bf16.msra.mxu0 0
  %1217 = vmatprep.subr.bf16.mxu0 0
  %1218 = vmatpush1.bf16.msra.mxu0 0
  %1219 = vmatprep.subr.bf16.mxu0 0
  %1220 = vmatpush1.bf16.msra.mxu0 0
  %1221 = vmatprep.subr.bf16.mxu0 0
  %1222 = vmatpush1.bf16.msra.mxu0 0
  %1223 = vmatprep.subr.bf16.mxu0 0
  %1224 = vmatpush1.bf16.msra.mxu0 0
  %1225 = vmatprep.mubr.bf16.mxu0 0
  %1226 = vmatmul.mubr.bf16.gmra.mrb[0].mxu0 %v1192
  %v1227 = vpop.f32.mrb[0].mxu0
  %v1228 = vadd.f32 0.0, %v1227
  %v1229 = vpop.f32.mrb[0].mxu0
  %v1230 = vpop.f32.mrb[0].mxu0
  %v1231 = vpop.f32.mrb[0].mxu0
  %1232 = vdwg.mxu0
  %v1233 = vpack.c.bf16 %v1228, %v1228
  %s1234 = sld [smem:[#allocation3 + $0x3]]
  %p1235 = scmp.eq.s32.totalorder %s1234, 1
  %s1236 = scalar_lea.vmem %s1, 12
  %v1237 = vld [vmem:[%s1236] sm:$0xf]
  %s1238 = scalar_select %p1235, 1, 0
  %v1239 = vstv %s1238
  %vm1240 = vcmp.eq.s32.totalorder %v1239, 1
  %v1241 = vsel %vm1240, %v1233, %v1237
  %1242 = vmatprep.subr.bf16.mxu0 %v354
  %1243 = vmatpush1.bf16.msra.mxu0 %v353
  %1244 = vmatprep.subr.bf16.mxu0 %v358
  %1245 = vmatpush1.bf16.msra.mxu0 %v357
  %1246 = vmatprep.subr.bf16.mxu0 %v362
  %1247 = vmatpush1.bf16.msra.mxu0 %v361
  %1248 = vmatprep.subr.bf16.mxu0 %v366
  %1249 = vmatpush1.bf16.msra.mxu0 %v365
  %1250 = vmatprep.subr.bf16.mxu0 %v370
  %1251 = vmatpush1.bf16.msra.mxu0 %v369
  %1252 = vmatprep.subr.bf16.mxu0 %v374
  %1253 = vmatpush1.bf16.msra.mxu0 %v373
  %1254 = vmatprep.subr.bf16.mxu0 %v378
  %1255 = vmatpush1.bf16.msra.mxu0 %v377
  %1256 = vmatprep.subr.bf16.mxu0 %v382
  %1257 = vmatpush1.bf16.msra.mxu0 %v381
  %1258 = vmatprep.subr.bf16.mxu0 %v386
  %1259 = vmatpush1.bf16.msra.mxu0 %v385
  %1260 = vmatprep.subr.bf16.mxu0 %v390
  %1261 = vmatpush1.bf16.msra.mxu0 %v389
  %1262 = vmatprep.subr.bf16.mxu0 %v394
  %1263 = vmatpush1.bf16.msra.mxu0 %v393
  %1264 = vmatprep.subr.bf16.mxu0 %v398
  %1265 = vmatpush1.bf16.msra.mxu0 %v397
  %1266 = vmatprep.subr.bf16.mxu0 %v402
  %1267 = vmatpush1.bf16.msra.mxu0 %v401
  %1268 = vmatprep.subr.bf16.mxu0 %v406
  %1269 = vmatpush1.bf16.msra.mxu0 %v405
  %1270 = vmatprep.subr.bf16.mxu0 %v410
  %1271 = vmatpush1.bf16.msra.mxu0 %v409
  %1272 = vmatprep.subr.bf16.mxu0 %v414
  %1273 = vmatpush1.bf16.msra.mxu0 %v413
  %1274 = vmatprep.mubr.bf16.mxu0 %v1128
  %1275 = vmatmul.mubr.bf16.gmra.mrb[0].mxu0 %v1241
  %v1276 = vpop.f32.mrb[0].mxu0
  %v1277 = vadd.f32 %v144, %v1276
  %v1278 = vpop.f32.mrb[0].mxu0
  %v1279 = vadd.f32 %v148, %v1278
  %v1280 = vpop.f32.mrb[0].mxu0
  %v1281 = vpop.f32.mrb[0].mxu0
  %1282 = vdwg.mxu0
  %1283 = vmatprep.subr.bf16.mxu0 %v356
  %1284 = vmatpush1.bf16.msra.mxu0 %v355
  %1285 = vmatprep.subr.bf16.mxu0 %v360
  %1286 = vmatpush1.bf16.msra.mxu0 %v359
  %1287 = vmatprep.subr.bf16.mxu0 %v364
  %1288 = vmatpush1.bf16.msra.mxu0 %v363
  %1289 = vmatprep.subr.bf16.mxu0 %v368
  %1290 = vmatpush1.bf16.msra.mxu0 %v367
  %1291 = vmatprep.subr.bf16.mxu0 %v372
  %1292 = vmatpush1.bf16.msra.mxu0 %v371
  %1293 = vmatprep.subr.bf16.mxu0 %v376
  %1294 = vmatpush1.bf16.msra.mxu0 %v375
  %1295 = vmatprep.subr.bf16.mxu0 %v380
  %1296 = vmatpush1.bf16.msra.mxu0 %v379
  %1297 = vmatprep.subr.bf16.mxu0 %v384
  %1298 = vmatpush1.bf16.msra.mxu0 %v383
  %1299 = vmatprep.subr.bf16.mxu0 %v388
  %1300 = vmatpush1.bf16.msra.mxu0 %v387
  %1301 = vmatprep.subr.bf16.mxu0 %v392
  %1302 = vmatpush1.bf16.msra.mxu0 %v391
  %1303 = vmatprep.subr.bf16.mxu0 %v396
  %1304 = vmatpush1.bf16.msra.mxu0 %v395
  %1305 = vmatprep.subr.bf16.mxu0 %v400
  %1306 = vmatpush1.bf16.msra.mxu0 %v399
  %1307 = vmatprep.subr.bf16.mxu0 %v404
  %1308 = vmatpush1.bf16.msra.mxu0 %v403
  %1309 = vmatprep.subr.bf16.mxu0 %v408
  %1310 = vmatpush1.bf16.msra.mxu0 %v407
  %1311 = vmatprep.subr.bf16.mxu0 %v412
  %1312 = vmatpush1.bf16.msra.mxu0 %v411
  %1313 = vmatprep.subr.bf16.mxu0 %v416
  %1314 = vmatpush1.bf16.msra.mxu0 %v415
  %1315 = vmatprep.mubr.bf16.mxu0 %v1128
  %1316 = vmatmul.mubr.bf16.gmra.mrb[0].mxu0 %v1241
  %v1317 = vpop.f32.mrb[0].mxu0
  %v1318 = vadd.f32 %v152, %v1317
  %v1319 = vpop.f32.mrb[0].mxu0
  %v1320 = vadd.f32 %v156, %v1319
  %v1321 = vpop.f32.mrb[0].mxu0
  %v1322 = vpop.f32.mrb[0].mxu0
  %1323 = vdwg.mxu0
  %v1324 = vxor.u32 %v1277, 2147483648
  %v1325 = vxor.u32 %v1279, 2147483648
  %v1326 = vxor.u32 %v1318, 2147483648
  %v1327 = vmul.f32 %v1324, 1.442695
  %v1328 = vpow.pop %v1327
  %v1329 = vmul.f32 %v1325, 1.442695
  %v1330 = vpow.pop %v1329
  %v1331 = vmul.f32 %v1326, 1.442695
  %v1332 = vpow.pop %v1331
  %v1333 = vadd.f32 %v1328, 1.0
  %v1334 = vadd.f32 %v1330, 1.0
  %v1335 = vadd.f32 %v1332, 1.0
  %v1336 = vrcp.pop %v1333
  %v1337 = vmul.f32 1.0, %v1336
  %v1338 = vrcp.pop %v1334
  %v1339 = vmul.f32 1.0, %v1338
  %v1340 = vrcp.pop %v1335
  %v1341 = vmul.f32 1.0, %v1340
  %v1342 = vtanh.pop %v1320
  %v1343 = vmul.f32 %v1339, %v1125
  %v1344 = vmul.f32 %v1337, %v1342
  %v1345 = vadd.f32 %v1343, %v1344
  %v1346 = vtanh.pop %v1345
  %v1347 = vmul.f32 %v1341, %v1346
  %v1348 = vpack.c.bf16 %v1347, %v1347
  %1349 = vmatprep.subr.bf16.mxu0 0
  %1350 = vmatpush1.bf16.msra.mxu0 %v626
  %1351 = vmatprep.subr.bf16.mxu0 0
  %1352 = vmatpush1.bf16.msra.mxu0 %v627
  %1353 = vmatprep.subr.bf16.mxu0 0
  %1354 = vmatpush1.bf16.msra.mxu0 %v628
  %1355 = vmatprep.subr.bf16.mxu0 0
  %1356 = vmatpush1.bf16.msra.mxu0 %v629
  %1357 = vmatprep.subr.bf16.mxu0 0
  %1358 = vmatpush1.bf16.msra.mxu0 %v630
  %1359 = vmatprep.subr.bf16.mxu0 0
  %1360 = vmatpush1.bf16.msra.mxu0 %v631
  %1361 = vmatprep.subr.bf16.mxu0 0
  %1362 = vmatpush1.bf16.msra.mxu0 %v632
  %1363 = vmatprep.subr.bf16.mxu0 0
  %1364 = vmatpush1.bf16.msra.mxu0 %v633
  %1365 = vmatprep.subr.bf16.mxu0 0
  %1366 = vmatpush1.bf16.msra.mxu0 0
  %1367 = vmatprep.subr.bf16.mxu0 0
  %1368 = vmatpush1.bf16.msra.mxu0 0
  %1369 = vmatprep.subr.bf16.mxu0 0
  %1370 = vmatpush1.bf16.msra.mxu0 0
  %1371 = vmatprep.subr.bf16.mxu0 0
  %1372 = vmatpush1.bf16.msra.mxu0 0
  %1373 = vmatprep.subr.bf16.mxu0 0
  %1374 = vmatpush1.bf16.msra.mxu0 0
  %1375 = vmatprep.subr.bf16.mxu0 0
  %1376 = vmatpush1.bf16.msra.mxu0 0
  %1377 = vmatprep.subr.bf16.mxu0 0
  %1378 = vmatpush1.bf16.msra.mxu0 0
  %1379 = vmatprep.subr.bf16.mxu0 0
  %1380 = vmatpush1.bf16.msra.mxu0 0
  %1381 = vmatprep.mubr.bf16.mxu0 0
  %1382 = vmatmul.mubr.bf16.gmra.mrb[0].mxu0 %v1348
  %v1383 = vpop.f32.mrb[0].mxu0
  %v1384 = vadd.f32 %v592, %v1383
  %v1385 = vpop.f32.mrb[0].mxu0
  %v1386 = vpop.f32.mrb[0].mxu0
  %v1387 = vpop.f32.mrb[0].mxu0
  %1388 = vdwg.mxu0
  %s1389 = scalar_lea.vmem %s9, 24
  %1390 = vst [vmem:[%s1389] sm:$0xff] %v1384
  %1391 = vmax.xlane.f32.xlu0 %v1384
  %v1392 = vpop.xlane.xlu0 %1391
  %vm1393 = vcmp.eq.f32.partialorder %v1384, %v1392
  %v1394 = vsel %vm1393, %v136, 128
  %v1395 = vand.u32 %v1394, 65535
  %v1396 = vshra.s32 %v1394, 16
  %v1397 = vcvt.s32.f32 %v1395
  %v1398 = vcvt.s32.f32 %v1396
  %1399 = vmin.xlane.f32.xlu0 %v1398
  %v1400 = vpop.xlane.xlu0 %1399
  %vm1401 = vcmp.eq.f32.partialorder %v1398, %v1400
  %v1402 = vsel %vm1401, %v1397, inf
  %1403 = vmin.xlane.f32.xlu0 %v1402
  %v1404 = vpop.xlane.xlu0 %1403
  %v1405 = vcvt.f32.s32 %v1404
  %v1406 = vcvt.f32.s32 %v1400
  %v1407 = vshll.u32 %v1406, 16
  %v1408 = vadd.s32 %v1407, %v1405
  %vm1409 = vcmp.eq.s32.totalorder %v136, %v1408
  %v1410 = vsel %vm1409, 1, 0
  %v1411 = vcvt.s32.f32 %v1410
  %v1412 = vpack.c.bf16 %v1411, %v1411
  %1413 = vmatprep.subr.bf16.mxu0 0
  %1414 = vmatpush1.bf16.msra.mxu0 %v737
  %1415 = vmatprep.subr.bf16.mxu0 0
  %1416 = vmatpush1.bf16.msra.mxu0 %v738
  %1417 = vmatprep.subr.bf16.mxu0 0
  %1418 = vmatpush1.bf16.msra.mxu0 %v739
  %1419 = vmatprep.subr.bf16.mxu0 0
  %1420 = vmatpush1.bf16.msra.mxu0 %v740
  %1421 = vmatprep.subr.bf16.mxu0 0
  %1422 = vmatpush1.bf16.msra.mxu0 %v741
  %1423 = vmatprep.subr.bf16.mxu0 0
  %1424 = vmatpush1.bf16.msra.mxu0 %v742
  %1425 = vmatprep.subr.bf16.mxu0 0
  %1426 = vmatpush1.bf16.msra.mxu0 %v743
  %1427 = vmatprep.subr.bf16.mxu0 0
  %1428 = vmatpush1.bf16.msra.mxu0 %v744
  %1429 = vmatprep.subr.bf16.mxu0 0
  %1430 = vmatpush1.bf16.msra.mxu0 0
  %1431 = vmatprep.subr.bf16.mxu0 0
  %1432 = vmatpush1.bf16.msra.mxu0 0
  %1433 = vmatprep.subr.bf16.mxu0 0
  %1434 = vmatpush1.bf16.msra.mxu0 0
  %1435 = vmatprep.subr.bf16.mxu0 0
  %1436 = vmatpush1.bf16.msra.mxu0 0
  %1437 = vmatprep.subr.bf16.mxu0 0
  %1438 = vmatpush1.bf16.msra.mxu0 0
  %1439 = vmatprep.subr.bf16.mxu0 0
  %1440 = vmatpush1.bf16.msra.mxu0 0
  %1441 = vmatprep.subr.bf16.mxu0 0
  %1442 = vmatpush1.bf16.msra.mxu0 0
  %1443 = vmatprep.subr.bf16.mxu0 0
  %1444 = vmatpush1.bf16.msra.mxu0 0
  %1445 = vmatprep.mubr.bf16.mxu0 0
  %1446 = vmatmul.mubr.bf16.gmra.mrb[0].mxu0 %v1412
  %v1447 = vpop.f32.mrb[0].mxu0
  %v1448 = vadd.f32 0.0, %v1447
  %v1449 = vpop.f32.mrb[0].mxu0
  %v1450 = vpop.f32.mrb[0].mxu0
  %v1451 = vpop.f32.mrb[0].mxu0
  %1452 = vdwg.mxu0
  %v1453 = vpack.c.bf16 %v1448, %v1448
  %s1454 = sld [smem:[#allocation3 + $0x4]]
  %p1455 = scmp.eq.s32.totalorder %s1454, 1
  %s1456 = scalar_lea.vmem %s1, 16
  %v1457 = vld [vmem:[%s1456] sm:$0xf]
  %s1458 = scalar_select %p1455, 1, 0
  %v1459 = vstv %s1458
  %vm1460 = vcmp.eq.s32.totalorder %v1459, 1
  %v1461 = vsel %vm1460, %v1453, %v1457
  %1462 = vmatprep.subr.bf16.mxu0 %v354
  %1463 = vmatpush1.bf16.msra.mxu0 %v353
  %1464 = vmatprep.subr.bf16.mxu0 %v358
  %1465 = vmatpush1.bf16.msra.mxu0 %v357
  %1466 = vmatprep.subr.bf16.mxu0 %v362
  %1467 = vmatpush1.bf16.msra.mxu0 %v361
  %1468 = vmatprep.subr.bf16.mxu0 %v366
  %1469 = vmatpush1.bf16.msra.mxu0 %v365
  %1470 = vmatprep.subr.bf16.mxu0 %v370
  %1471 = vmatpush1.bf16.msra.mxu0 %v369
  %1472 = vmatprep.subr.bf16.mxu0 %v374
  %1473 = vmatpush1.bf16.msra.mxu0 %v373
  %1474 = vmatprep.subr.bf16.mxu0 %v378
  %1475 = vmatpush1.bf16.msra.mxu0 %v377
  %1476 = vmatprep.subr.bf16.mxu0 %v382
  %1477 = vmatpush1.bf16.msra.mxu0 %v381
  %1478 = vmatprep.subr.bf16.mxu0 %v386
  %1479 = vmatpush1.bf16.msra.mxu0 %v385
  %1480 = vmatprep.subr.bf16.mxu0 %v390
  %1481 = vmatpush1.bf16.msra.mxu0 %v389
  %1482 = vmatprep.subr.bf16.mxu0 %v394
  %1483 = vmatpush1.bf16.msra.mxu0 %v393
  %1484 = vmatprep.subr.bf16.mxu0 %v398
  %1485 = vmatpush1.bf16.msra.mxu0 %v397
  %1486 = vmatprep.subr.bf16.mxu0 %v402
  %1487 = vmatpush1.bf16.msra.mxu0 %v401
  %1488 = vmatprep.subr.bf16.mxu0 %v406
  %1489 = vmatpush1.bf16.msra.mxu0 %v405
  %1490 = vmatprep.subr.bf16.mxu0 %v410
  %1491 = vmatpush1.bf16.msra.mxu0 %v409
  %1492 = vmatprep.subr.bf16.mxu0 %v414
  %1493 = vmatpush1.bf16.msra.mxu0 %v413
  %1494 = vmatprep.mubr.bf16.mxu0 %v1348
  %1495 = vmatmul.mubr.bf16.gmra.mrb[0].mxu0 %v1461
  %v1496 = vpop.f32.mrb[0].mxu0
  %v1497 = vadd.f32 %v144, %v1496
  %v1498 = vpop.f32.mrb[0].mxu0
  %v1499 = vadd.f32 %v148, %v1498
  %v1500 = vpop.f32.mrb[0].mxu0
  %v1501 = vpop.f32.mrb[0].mxu0
  %1502 = vdwg.mxu0
  %1503 = vmatprep.subr.bf16.mxu0 %v356
  %1504 = vmatpush1.bf16.msra.mxu0 %v355
  %1505 = vmatprep.subr.bf16.mxu0 %v360
  %1506 = vmatpush1.bf16.msra.mxu0 %v359
  %1507 = vmatprep.subr.bf16.mxu0 %v364
  %1508 = vmatpush1.bf16.msra.mxu0 %v363
  %1509 = vmatprep.subr.bf16.mxu0 %v368
  %1510 = vmatpush1.bf16.msra.mxu0 %v367
  %1511 = vmatprep.subr.bf16.mxu0 %v372
  %1512 = vmatpush1.bf16.msra.mxu0 %v371
  %1513 = vmatprep.subr.bf16.mxu0 %v376
  %1514 = vmatpush1.bf16.msra.mxu0 %v375
  %1515 = vmatprep.subr.bf16.mxu0 %v380
  %1516 = vmatpush1.bf16.msra.mxu0 %v379
  %1517 = vmatprep.subr.bf16.mxu0 %v384
  %1518 = vmatpush1.bf16.msra.mxu0 %v383
  %1519 = vmatprep.subr.bf16.mxu0 %v388
  %1520 = vmatpush1.bf16.msra.mxu0 %v387
  %1521 = vmatprep.subr.bf16.mxu0 %v392
  %1522 = vmatpush1.bf16.msra.mxu0 %v391
  %1523 = vmatprep.subr.bf16.mxu0 %v396
  %1524 = vmatpush1.bf16.msra.mxu0 %v395
  %1525 = vmatprep.subr.bf16.mxu0 %v400
  %1526 = vmatpush1.bf16.msra.mxu0 %v399
  %1527 = vmatprep.subr.bf16.mxu0 %v404
  %1528 = vmatpush1.bf16.msra.mxu0 %v403
  %1529 = vmatprep.subr.bf16.mxu0 %v408
  %1530 = vmatpush1.bf16.msra.mxu0 %v407
  %1531 = vmatprep.subr.bf16.mxu0 %v412
  %1532 = vmatpush1.bf16.msra.mxu0 %v411
  %1533 = vmatprep.subr.bf16.mxu0 %v416
  %1534 = vmatpush1.bf16.msra.mxu0 %v415
  %1535 = vmatprep.mubr.bf16.mxu0 %v1348
  %1536 = vmatmul.mubr.bf16.gmra.mrb[0].mxu0 %v1461
  %v1537 = vpop.f32.mrb[0].mxu0
  %v1538 = vadd.f32 %v152, %v1537
  %v1539 = vpop.f32.mrb[0].mxu0
  %v1540 = vadd.f32 %v156, %v1539
  %v1541 = vpop.f32.mrb[0].mxu0
  %v1542 = vpop.f32.mrb[0].mxu0
  %1543 = vdwg.mxu0
  %v1544 = vxor.u32 %v1497, 2147483648
  %v1545 = vxor.u32 %v1499, 2147483648
  %v1546 = vxor.u32 %v1538, 2147483648
  %v1547 = vmul.f32 %v1544, 1.442695
  %v1548 = vpow.pop %v1547
  %v1549 = vmul.f32 %v1545, 1.442695
  %v1550 = vpow.pop %v1549
  %v1551 = vmul.f32 %v1546, 1.442695
  %v1552 = vpow.pop %v1551
  %v1553 = vadd.f32 %v1548, 1.0
  %v1554 = vadd.f32 %v1550, 1.0
  %v1555 = vadd.f32 %v1552, 1.0
  %v1556 = vrcp.pop %v1553
  %v1557 = vmul.f32 1.0, %v1556
  %v1558 = vrcp.pop %v1554
  %v1559 = vmul.f32 1.0, %v1558
  %v1560 = vrcp.pop %v1555
  %v1561 = vmul.f32 1.0, %v1560
  %v1562 = vtanh.pop %v1540
  %v1563 = vmul.f32 %v1559, %v1345
  %v1564 = vmul.f32 %v1557, %v1562
  %v1565 = vadd.f32 %v1563, %v1564
  %v1566 = vtanh.pop %v1565
  %v1567 = vmul.f32 %v1561, %v1566
  %v1568 = vpack.c.bf16 %v1567, %v1567
  %1569 = vmatprep.subr.bf16.mxu0 0
  %1570 = vmatpush1.bf16.msra.mxu0 %v626
  %1571 = vmatprep.subr.bf16.mxu0 0
  %1572 = vmatpush1.bf16.msra.mxu0 %v627
  %1573 = vmatprep.subr.bf16.mxu0 0
  %1574 = vmatpush1.bf16.msra.mxu0 %v628
  %1575 = vmatprep.subr.bf16.mxu0 0
  %1576 = vmatpush1.bf16.msra.mxu0 %v629
  %1577 = vmatprep.subr.bf16.mxu0 0
  %1578 = vmatpush1.bf16.msra.mxu0 %v630
  %1579 = vmatprep.subr.bf16.mxu0 0
  %1580 = vmatpush1.bf16.msra.mxu0 %v631
  %1581 = vmatprep.subr.bf16.mxu0 0
  %1582 = vmatpush1.bf16.msra.mxu0 %v632
  %1583 = vmatprep.subr.bf16.mxu0 0
  %1584 = vmatpush1.bf16.msra.mxu0 %v633
  %1585 = vmatprep.subr.bf16.mxu0 0
  %1586 = vmatpush1.bf16.msra.mxu0 0
  %1587 = vmatprep.subr.bf16.mxu0 0
  %1588 = vmatpush1.bf16.msra.mxu0 0
  %1589 = vmatprep.subr.bf16.mxu0 0
  %1590 = vmatpush1.bf16.msra.mxu0 0
  %1591 = vmatprep.subr.bf16.mxu0 0
  %1592 = vmatpush1.bf16.msra.mxu0 0
  %1593 = vmatprep.subr.bf16.mxu0 0
  %1594 = vmatpush1.bf16.msra.mxu0 0
  %1595 = vmatprep.subr.bf16.mxu0 0
  %1596 = vmatpush1.bf16.msra.mxu0 0
  %1597 = vmatprep.subr.bf16.mxu0 0
  %1598 = vmatpush1.bf16.msra.mxu0 0
  %1599 = vmatprep.subr.bf16.mxu0 0
  %1600 = vmatpush1.bf16.msra.mxu0 0
  %1601 = vmatprep.mubr.bf16.mxu0 0
  %1602 = vmatmul.mubr.bf16.gmra.mrb[0].mxu0 %v1568
  %v1603 = vpop.f32.mrb[0].mxu0
  %v1604 = vadd.f32 %v592, %v1603
  %v1605 = vpop.f32.mrb[0].mxu0
  %v1606 = vpop.f32.mrb[0].mxu0
  %v1607 = vpop.f32.mrb[0].mxu0
  %1608 = vdwg.mxu0
  %s1609 = scalar_lea.vmem %s9, 32
  %1610 = vst [vmem:[%s1609] sm:$0xff] %v1604
  %1611 = vmax.xlane.f32.xlu0 %v1604
  %v1612 = vpop.xlane.xlu0 %1611
  %vm1613 = vcmp.eq.f32.partialorder %v1604, %v1612
  %v1614 = vsel %vm1613, %v136, 128
  %v1615 = vand.u32 %v1614, 65535
  %v1616 = vshra.s32 %v1614, 16
  %v1617 = vcvt.s32.f32 %v1615
  %v1618 = vcvt.s32.f32 %v1616
  %1619 = vmin.xlane.f32.xlu0 %v1618
  %v1620 = vpop.xlane.xlu0 %1619
  %vm1621 = vcmp.eq.f32.partialorder %v1618, %v1620
  %v1622 = vsel %vm1621, %v1617, inf
  %1623 = vmin.xlane.f32.xlu0 %v1622
  %v1624 = vpop.xlane.xlu0 %1623
  %v1625 = vcvt.f32.s32 %v1624
  %v1626 = vcvt.f32.s32 %v1620
  %v1627 = vshll.u32 %v1626, 16
  %v1628 = vadd.s32 %v1627, %v1625
  %vm1629 = vcmp.eq.s32.totalorder %v136, %v1628
  %v1630 = vsel %vm1629, 1, 0
  %v1631 = vcvt.s32.f32 %v1630
  %v1632 = vpack.c.bf16 %v1631, %v1631
  %1633 = vmatprep.subr.bf16.mxu0 0
  %1634 = vmatpush1.bf16.msra.mxu0 %v737
  %1635 = vmatprep.subr.bf16.mxu0 0
  %1636 = vmatpush1.bf16.msra.mxu0 %v738
  %1637 = vmatprep.subr.bf16.mxu0 0
  %1638 = vmatpush1.bf16.msra.mxu0 %v739
  %1639 = vmatprep.subr.bf16.mxu0 0
  %1640 = vmatpush1.bf16.msra.mxu0 %v740
  %1641 = vmatprep.subr.bf16.mxu0 0
  %1642 = vmatpush1.bf16.msra.mxu0 %v741
  %1643 = vmatprep.subr.bf16.mxu0 0
  %1644 = vmatpush1.bf16.msra.mxu0 %v742
  %1645 = vmatprep.subr.bf16.mxu0 0
  %1646 = vmatpush1.bf16.msra.mxu0 %v743
  %1647 = vmatprep.subr.bf16.mxu0 0
  %1648 = vmatpush1.bf16.msra.mxu0 %v744
  %1649 = vmatprep.subr.bf16.mxu0 0
  %1650 = vmatpush1.bf16.msra.mxu0 0
  %1651 = vmatprep.subr.bf16.mxu0 0
  %1652 = vmatpush1.bf16.msra.mxu0 0
  %1653 = vmatprep.subr.bf16.mxu0 0
  %1654 = vmatpush1.bf16.msra.mxu0 0
  %1655 = vmatprep.subr.bf16.mxu0 0
  %1656 = vmatpush1.bf16.msra.mxu0 0
  %1657 = vmatprep.subr.bf16.mxu0 0
  %1658 = vmatpush1.bf16.msra.mxu0 0
  %1659 = vmatprep.subr.bf16.mxu0 0
  %1660 = vmatpush1.bf16.msra.mxu0 0
  %1661 = vmatprep.subr.bf16.mxu0 0
  %1662 = vmatpush1.bf16.msra.mxu0 0
  %1663 = vmatprep.subr.bf16.mxu0 0
  %1664 = vmatpush1.bf16.msra.mxu0 0
  %1665 = vmatprep.mubr.bf16.mxu0 0
  %1666 = vmatmul.mubr.bf16.gmra.mrb[0].mxu0 %v1632
  %v1667 = vpop.f32.mrb[0].mxu0
  %v1668 = vadd.f32 0.0, %v1667
  %v1669 = vpop.f32.mrb[0].mxu0
  %v1670 = vpop.f32.mrb[0].mxu0
  %v1671 = vpop.f32.mrb[0].mxu0
  %1672 = vdwg.mxu0
  %v1673 = vpack.c.bf16 %v1668, %v1668
  %s1674 = sld [smem:[#allocation3 + $0x5]]
  %p1675 = scmp.eq.s32.totalorder %s1674, 1
  %s1676 = scalar_lea.vmem %s1, 20
  %v1677 = vld [vmem:[%s1676] sm:$0xf]
  %s1678 = scalar_select %p1675, 1, 0
  %v1679 = vstv %s1678
  %vm1680 = vcmp.eq.s32.totalorder %v1679, 1
  %v1681 = vsel %vm1680, %v1673, %v1677
  %1682 = vmatprep.subr.bf16.mxu0 %v354
  %1683 = vmatpush1.bf16.msra.mxu0 %v353
  %1684 = vmatprep.subr.bf16.mxu0 %v358
  %1685 = vmatpush1.bf16.msra.mxu0 %v357
  %1686 = vmatprep.subr.bf16.mxu0 %v362
  %1687 = vmatpush1.bf16.msra.mxu0 %v361
  %1688 = vmatprep.subr.bf16.mxu0 %v366
  %1689 = vmatpush1.bf16.msra.mxu0 %v365
  %1690 = vmatprep.subr.bf16.mxu0 %v370
  %1691 = vmatpush1.bf16.msra.mxu0 %v369
  %1692 = vmatprep.subr.bf16.mxu0 %v374
  %1693 = vmatpush1.bf16.msra.mxu0 %v373
  %1694 = vmatprep.subr.bf16.mxu0 %v378
  %1695 = vmatpush1.bf16.msra.mxu0 %v377
  %1696 = vmatprep.subr.bf16.mxu0 %v382
  %1697 = vmatpush1.bf16.msra.mxu0 %v381
  %1698 = vmatprep.subr.bf16.mxu0 %v386
  %1699 = vmatpush1.bf16.msra.mxu0 %v385
  %1700 = vmatprep.subr.bf16.mxu0 %v390
  %1701 = vmatpush1.bf16.msra.mxu0 %v389
  %1702 = vmatprep.subr.bf16.mxu0 %v394
  %1703 = vmatpush1.bf16.msra.mxu0 %v393
  %1704 = vmatprep.subr.bf16.mxu0 %v398
  %1705 = vmatpush1.bf16.msra.mxu0 %v397
  %1706 = vmatprep.subr.bf16.mxu0 %v402
  %1707 = vmatpush1.bf16.msra.mxu0 %v401
  %1708 = vmatprep.subr.bf16.mxu0 %v406
  %1709 = vmatpush1.bf16.msra.mxu0 %v405
  %1710 = vmatprep.subr.bf16.mxu0 %v410
  %1711 = vmatpush1.bf16.msra.mxu0 %v409
  %1712 = vmatprep.subr.bf16.mxu0 %v414
  %1713 = vmatpush1.bf16.msra.mxu0 %v413
  %1714 = vmatprep.mubr.bf16.mxu0 %v1568
  %1715 = vmatmul.mubr.bf16.gmra.mrb[0].mxu0 %v1681
  %v1716 = vpop.f32.mrb[0].mxu0
  %v1717 = vadd.f32 %v144, %v1716
  %v1718 = vpop.f32.mrb[0].mxu0
  %v1719 = vadd.f32 %v148, %v1718
  %v1720 = vpop.f32.mrb[0].mxu0
  %v1721 = vpop.f32.mrb[0].mxu0
  %1722 = vdwg.mxu0
  %1723 = vmatprep.subr.bf16.mxu0 %v356
  %1724 = vmatpush1.bf16.msra.mxu0 %v355
  %1725 = vmatprep.subr.bf16.mxu0 %v360
  %1726 = vmatpush1.bf16.msra.mxu0 %v359
  %1727 = vmatprep.subr.bf16.mxu0 %v364
  %1728 = vmatpush1.bf16.msra.mxu0 %v363
  %1729 = vmatprep.subr.bf16.mxu0 %v368
  %1730 = vmatpush1.bf16.msra.mxu0 %v367
  %1731 = vmatprep.subr.bf16.mxu0 %v372
  %1732 = vmatpush1.bf16.msra.mxu0 %v371
  %1733 = vmatprep.subr.bf16.mxu0 %v376
  %1734 = vmatpush1.bf16.msra.mxu0 %v375
  %1735 = vmatprep.subr.bf16.mxu0 %v380
  %1736 = vmatpush1.bf16.msra.mxu0 %v379
  %1737 = vmatprep.subr.bf16.mxu0 %v384
  %1738 = vmatpush1.bf16.msra.mxu0 %v383
  %1739 = vmatprep.subr.bf16.mxu0 %v388
  %1740 = vmatpush1.bf16.msra.mxu0 %v387
  %1741 = vmatprep.subr.bf16.mxu0 %v392
  %1742 = vmatpush1.bf16.msra.mxu0 %v391
  %1743 = vmatprep.subr.bf16.mxu0 %v396
  %1744 = vmatpush1.bf16.msra.mxu0 %v395
  %1745 = vmatprep.subr.bf16.mxu0 %v400
  %1746 = vmatpush1.bf16.msra.mxu0 %v399
  %1747 = vmatprep.subr.bf16.mxu0 %v404
  %1748 = vmatpush1.bf16.msra.mxu0 %v403
  %1749 = vmatprep.subr.bf16.mxu0 %v408
  %1750 = vmatpush1.bf16.msra.mxu0 %v407
  %1751 = vmatprep.subr.bf16.mxu0 %v412
  %1752 = vmatpush1.bf16.msra.mxu0 %v411
  %1753 = vmatprep.subr.bf16.mxu0 %v416
  %1754 = vmatpush1.bf16.msra.mxu0 %v415
  %1755 = vmatprep.mubr.bf16.mxu0 %v1568
  %1756 = vmatmul.mubr.bf16.gmra.mrb[0].mxu0 %v1681
  %v1757 = vpop.f32.mrb[0].mxu0
  %v1758 = vadd.f32 %v152, %v1757
  %v1759 = vpop.f32.mrb[0].mxu0
  %v1760 = vadd.f32 %v156, %v1759
  %v1761 = vpop.f32.mrb[0].mxu0
  %v1762 = vpop.f32.mrb[0].mxu0
  %1763 = vdwg.mxu0
  %v1764 = vxor.u32 %v1717, 2147483648
  %v1765 = vxor.u32 %v1719, 2147483648
  %v1766 = vxor.u32 %v1758, 2147483648
  %v1767 = vmul.f32 %v1764, 1.442695
  %v1768 = vpow.pop %v1767
  %v1769 = vmul.f32 %v1765, 1.442695
  %v1770 = vpow.pop %v1769
  %v1771 = vmul.f32 %v1766, 1.442695
  %v1772 = vpow.pop %v1771
  %v1773 = vadd.f32 %v1768, 1.0
  %v1774 = vadd.f32 %v1770, 1.0
  %v1775 = vadd.f32 %v1772, 1.0
  %v1776 = vrcp.pop %v1773
  %v1777 = vmul.f32 1.0, %v1776
  %v1778 = vrcp.pop %v1774
  %v1779 = vmul.f32 1.0, %v1778
  %v1780 = vrcp.pop %v1775
  %v1781 = vmul.f32 1.0, %v1780
  %v1782 = vtanh.pop %v1760
  %v1783 = vmul.f32 %v1779, %v1565
  %v1784 = vmul.f32 %v1777, %v1782
  %v1785 = vadd.f32 %v1783, %v1784
  %v1786 = vtanh.pop %v1785
  %v1787 = vmul.f32 %v1781, %v1786
  %v1788 = vpack.c.bf16 %v1787, %v1787
  %1789 = vmatprep.subr.bf16.mxu0 0
  %1790 = vmatpush1.bf16.msra.mxu0 %v626
  %1791 = vmatprep.subr.bf16.mxu0 0
  %1792 = vmatpush1.bf16.msra.mxu0 %v627
  %1793 = vmatprep.subr.bf16.mxu0 0
  %1794 = vmatpush1.bf16.msra.mxu0 %v628
  %1795 = vmatprep.subr.bf16.mxu0 0
  %1796 = vmatpush1.bf16.msra.mxu0 %v629
  %1797 = vmatprep.subr.bf16.mxu0 0
  %1798 = vmatpush1.bf16.msra.mxu0 %v630
  %1799 = vmatprep.subr.bf16.mxu0 0
  %1800 = vmatpush1.bf16.msra.mxu0 %v631
  %1801 = vmatprep.subr.bf16.mxu0 0
  %1802 = vmatpush1.bf16.msra.mxu0 %v632
  %1803 = vmatprep.subr.bf16.mxu0 0
  %1804 = vmatpush1.bf16.msra.mxu0 %v633
  %1805 = vmatprep.subr.bf16.mxu0 0
  %1806 = vmatpush1.bf16.msra.mxu0 0
  %1807 = vmatprep.subr.bf16.mxu0 0
  %1808 = vmatpush1.bf16.msra.mxu0 0
  %1809 = vmatprep.subr.bf16.mxu0 0
  %1810 = vmatpush1.bf16.msra.mxu0 0
  %1811 = vmatprep.subr.bf16.mxu0 0
  %1812 = vmatpush1.bf16.msra.mxu0 0
  %1813 = vmatprep.subr.bf16.mxu0 0
  %1814 = vmatpush1.bf16.msra.mxu0 0
  %1815 = vmatprep.subr.bf16.mxu0 0
  %1816 = vmatpush1.bf16.msra.mxu0 0
  %1817 = vmatprep.subr.bf16.mxu0 0
  %1818 = vmatpush1.bf16.msra.mxu0 0
  %1819 = vmatprep.subr.bf16.mxu0 0
  %1820 = vmatpush1.bf16.msra.mxu0 0
  %1821 = vmatprep.mubr.bf16.mxu0 0
  %1822 = vmatmul.mubr.bf16.gmra.mrb[0].mxu0 %v1788
  %v1823 = vpop.f32.mrb[0].mxu0
  %v1824 = vadd.f32 %v592, %v1823
  %v1825 = vpop.f32.mrb[0].mxu0
  %v1826 = vpop.f32.mrb[0].mxu0
  %v1827 = vpop.f32.mrb[0].mxu0
  %1828 = vdwg.mxu0
  %s1829 = scalar_lea.vmem %s9, 40
  %1830 = vst [vmem:[%s1829] sm:$0xff] %v1824
  %1831 = vmax.xlane.f32.xlu0 %v1824
  %v1832 = vpop.xlane.xlu0 %1831
  %vm1833 = vcmp.eq.f32.partialorder %v1824, %v1832
  %v1834 = vsel %vm1833, %v136, 128
  %v1835 = vand.u32 %v1834, 65535
  %v1836 = vshra.s32 %v1834, 16
  %v1837 = vcvt.s32.f32 %v1835
  %v1838 = vcvt.s32.f32 %v1836
  %1839 = vmin.xlane.f32.xlu0 %v1838
  %v1840 = vpop.xlane.xlu0 %1839
  %vm1841 = vcmp.eq.f32.partialorder %v1838, %v1840
  %v1842 = vsel %vm1841, %v1837, inf
  %1843 = vmin.xlane.f32.xlu0 %v1842
  %v1844 = vpop.xlane.xlu0 %1843
  %v1845 = vcvt.f32.s32 %v1844
  %v1846 = vcvt.f32.s32 %v1840
  %v1847 = vshll.u32 %v1846, 16
  %v1848 = vadd.s32 %v1847, %v1845
  %vm1849 = vcmp.eq.s32.totalorder %v136, %v1848
  %v1850 = vsel %vm1849, 1, 0
  %v1851 = vcvt.s32.f32 %v1850
  %v1852 = vpack.c.bf16 %v1851, %v1851
  %1853 = vmatprep.subr.bf16.mxu0 0
  %1854 = vmatpush1.bf16.msra.mxu0 %v737
  %1855 = vmatprep.subr.bf16.mxu0 0
  %1856 = vmatpush1.bf16.msra.mxu0 %v738
  %1857 = vmatprep.subr.bf16.mxu0 0
  %1858 = vmatpush1.bf16.msra.mxu0 %v739
  %1859 = vmatprep.subr.bf16.mxu0 0
  %1860 = vmatpush1.bf16.msra.mxu0 %v740
  %1861 = vmatprep.subr.bf16.mxu0 0
  %1862 = vmatpush1.bf16.msra.mxu0 %v741
  %1863 = vmatprep.subr.bf16.mxu0 0
  %1864 = vmatpush1.bf16.msra.mxu0 %v742
  %1865 = vmatprep.subr.bf16.mxu0 0
  %1866 = vmatpush1.bf16.msra.mxu0 %v743
  %1867 = vmatprep.subr.bf16.mxu0 0
  %1868 = vmatpush1.bf16.msra.mxu0 %v744
  %1869 = vmatprep.subr.bf16.mxu0 0
  %1870 = vmatpush1.bf16.msra.mxu0 0
  %1871 = vmatprep.subr.bf16.mxu0 0
  %1872 = vmatpush1.bf16.msra.mxu0 0
  %1873 = vmatprep.subr.bf16.mxu0 0
  %1874 = vmatpush1.bf16.msra.mxu0 0
  %1875 = vmatprep.subr.bf16.mxu0 0
  %1876 = vmatpush1.bf16.msra.mxu0 0
  %1877 = vmatprep.subr.bf16.mxu0 0
  %1878 = vmatpush1.bf16.msra.mxu0 0
  %1879 = vmatprep.subr.bf16.mxu0 0
  %1880 = vmatpush1.bf16.msra.mxu0 0
  %1881 = vmatprep.subr.bf16.mxu0 0
  %1882 = vmatpush1.bf16.msra.mxu0 0
  %1883 = vmatprep.subr.bf16.mxu0 0
  %1884 = vmatpush1.bf16.msra.mxu0 0
  %1885 = vmatprep.mubr.bf16.mxu0 0
  %1886 = vmatmul.mubr.bf16.gmra.mrb[0].mxu0 %v1852
  %v1887 = vpop.f32.mrb[0].mxu0
  %v1888 = vadd.f32 0.0, %v1887
  %v1889 = vpop.f32.mrb[0].mxu0
  %v1890 = vpop.f32.mrb[0].mxu0
  %v1891 = vpop.f32.mrb[0].mxu0
  %1892 = vdwg.mxu0
  %v1893 = vpack.c.bf16 %v1888, %v1888
  %s1894 = sld [smem:[#allocation3 + $0x6]]
  %p1895 = scmp.eq.s32.totalorder %s1894, 1
  %s1896 = scalar_lea.vmem %s1, 24
  %v1897 = vld [vmem:[%s1896] sm:$0xf]
  %s1898 = scalar_select %p1895, 1, 0
  %v1899 = vstv %s1898
  %vm1900 = vcmp.eq.s32.totalorder %v1899, 1
  %v1901 = vsel %vm1900, %v1893, %v1897
  %1902 = vmatprep.subr.bf16.mxu0 %v354
  %1903 = vmatpush1.bf16.msra.mxu0 %v353
  %1904 = vmatprep.subr.bf16.mxu0 %v358
  %1905 = vmatpush1.bf16.msra.mxu0 %v357
  %1906 = vmatprep.subr.bf16.mxu0 %v362
  %1907 = vmatpush1.bf16.msra.mxu0 %v361
  %1908 = vmatprep.subr.bf16.mxu0 %v366
  %1909 = vmatpush1.bf16.msra.mxu0 %v365
  %1910 = vmatprep.subr.bf16.mxu0 %v370
  %1911 = vmatpush1.bf16.msra.mxu0 %v369
  %1912 = vmatprep.subr.bf16.mxu0 %v374
  %1913 = vmatpush1.bf16.msra.mxu0 %v373
  %1914 = vmatprep.subr.bf16.mxu0 %v378
  %1915 = vmatpush1.bf16.msra.mxu0 %v377
  %1916 = vmatprep.subr.bf16.mxu0 %v382
  %1917 = vmatpush1.bf16.msra.mxu0 %v381
  %1918 = vmatprep.subr.bf16.mxu0 %v386
  %1919 = vmatpush1.bf16.msra.mxu0 %v385
  %1920 = vmatprep.subr.bf16.mxu0 %v390
  %1921 = vmatpush1.bf16.msra.mxu0 %v389
  %1922 = vmatprep.subr.bf16.mxu0 %v394
  %1923 = vmatpush1.bf16.msra.mxu0 %v393
  %1924 = vmatprep.subr.bf16.mxu0 %v398
  %1925 = vmatpush1.bf16.msra.mxu0 %v397
  %1926 = vmatprep.subr.bf16.mxu0 %v402
  %1927 = vmatpush1.bf16.msra.mxu0 %v401
  %1928 = vmatprep.subr.bf16.mxu0 %v406
  %1929 = vmatpush1.bf16.msra.mxu0 %v405
  %1930 = vmatprep.subr.bf16.mxu0 %v410
  %1931 = vmatpush1.bf16.msra.mxu0 %v409
  %1932 = vmatprep.subr.bf16.mxu0 %v414
  %1933 = vmatpush1.bf16.msra.mxu0 %v413
  %1934 = vmatprep.mubr.bf16.mxu0 %v1788
  %1935 = vmatmul.mubr.bf16.gmra.mrb[0].mxu0 %v1901
  %v1936 = vpop.f32.mrb[0].mxu0
  %v1937 = vadd.f32 %v144, %v1936
  %v1938 = vpop.f32.mrb[0].mxu0
  %v1939 = vadd.f32 %v148, %v1938
  %v1940 = vpop.f32.mrb[0].mxu0
  %v1941 = vpop.f32.mrb[0].mxu0
  %1942 = vdwg.mxu0
  %1943 = vmatprep.subr.bf16.mxu0 %v356
  %1944 = vmatpush1.bf16.msra.mxu0 %v355
  %1945 = vmatprep.subr.bf16.mxu0 %v360
  %1946 = vmatpush1.bf16.msra.mxu0 %v359
  %1947 = vmatprep.subr.bf16.mxu0 %v364
  %1948 = vmatpush1.bf16.msra.mxu0 %v363
  %1949 = vmatprep.subr.bf16.mxu0 %v368
  %1950 = vmatpush1.bf16.msra.mxu0 %v367
  %1951 = vmatprep.subr.bf16.mxu0 %v372
  %1952 = vmatpush1.bf16.msra.mxu0 %v371
  %1953 = vmatprep.subr.bf16.mxu0 %v376
  %1954 = vmatpush1.bf16.msra.mxu0 %v375
  %1955 = vmatprep.subr.bf16.mxu0 %v380
  %1956 = vmatpush1.bf16.msra.mxu0 %v379
  %1957 = vmatprep.subr.bf16.mxu0 %v384
  %1958 = vmatpush1.bf16.msra.mxu0 %v383
  %1959 = vmatprep.subr.bf16.mxu0 %v388
  %1960 = vmatpush1.bf16.msra.mxu0 %v387
  %1961 = vmatprep.subr.bf16.mxu0 %v392
  %1962 = vmatpush1.bf16.msra.mxu0 %v391
  %1963 = vmatprep.subr.bf16.mxu0 %v396
  %1964 = vmatpush1.bf16.msra.mxu0 %v395
  %1965 = vmatprep.subr.bf16.mxu0 %v400
  %1966 = vmatpush1.bf16.msra.mxu0 %v399
  %1967 = vmatprep.subr.bf16.mxu0 %v404
  %1968 = vmatpush1.bf16.msra.mxu0 %v403
  %1969 = vmatprep.subr.bf16.mxu0 %v408
  %1970 = vmatpush1.bf16.msra.mxu0 %v407
  %1971 = vmatprep.subr.bf16.mxu0 %v412
  %1972 = vmatpush1.bf16.msra.mxu0 %v411
  %1973 = vmatprep.subr.bf16.mxu0 %v416
  %1974 = vmatpush1.bf16.msra.mxu0 %v415
  %1975 = vmatprep.mubr.bf16.mxu0 %v1788
  %1976 = vmatmul.mubr.bf16.gmra.mrb[0].mxu0 %v1901
  %v1977 = vpop.f32.mrb[0].mxu0
  %v1978 = vadd.f32 %v152, %v1977
  %v1979 = vpop.f32.mrb[0].mxu0
  %v1980 = vadd.f32 %v156, %v1979
  %v1981 = vpop.f32.mrb[0].mxu0
  %v1982 = vpop.f32.mrb[0].mxu0
  %1983 = vdwg.mxu0
  %v1984 = vxor.u32 %v1937, 2147483648
  %v1985 = vxor.u32 %v1939, 2147483648
  %v1986 = vxor.u32 %v1978, 2147483648
  %v1987 = vmul.f32 %v1984, 1.442695
  %v1988 = vpow.pop %v1987
  %v1989 = vmul.f32 %v1985, 1.442695
  %v1990 = vpow.pop %v1989
  %v1991 = vmul.f32 %v1986, 1.442695
  %v1992 = vpow.pop %v1991
  %v1993 = vadd.f32 %v1988, 1.0
  %v1994 = vadd.f32 %v1990, 1.0
  %v1995 = vadd.f32 %v1992, 1.0
  %v1996 = vrcp.pop %v1993
  %v1997 = vmul.f32 1.0, %v1996
  %v1998 = vrcp.pop %v1994
  %v1999 = vmul.f32 1.0, %v1998
  %v2000 = vrcp.pop %v1995
  %v2001 = vmul.f32 1.0, %v2000
  %v2002 = vtanh.pop %v1980
  %v2003 = vmul.f32 %v1999, %v1785
  %v2004 = vmul.f32 %v1997, %v2002
  %v2005 = vadd.f32 %v2003, %v2004
  %v2006 = vtanh.pop %v2005
  %v2007 = vmul.f32 %v2001, %v2006
  %v2008 = vpack.c.bf16 %v2007, %v2007
  %2009 = vmatprep.subr.bf16.mxu0 0
  %2010 = vmatpush1.bf16.msra.mxu0 %v626
  %2011 = vmatprep.subr.bf16.mxu0 0
  %2012 = vmatpush1.bf16.msra.mxu0 %v627
  %2013 = vmatprep.subr.bf16.mxu0 0
  %2014 = vmatpush1.bf16.msra.mxu0 %v628
  %2015 = vmatprep.subr.bf16.mxu0 0
  %2016 = vmatpush1.bf16.msra.mxu0 %v629
  %2017 = vmatprep.subr.bf16.mxu0 0
  %2018 = vmatpush1.bf16.msra.mxu0 %v630
  %2019 = vmatprep.subr.bf16.mxu0 0
  %2020 = vmatpush1.bf16.msra.mxu0 %v631
  %2021 = vmatprep.subr.bf16.mxu0 0
  %2022 = vmatpush1.bf16.msra.mxu0 %v632
  %2023 = vmatprep.subr.bf16.mxu0 0
  %2024 = vmatpush1.bf16.msra.mxu0 %v633
  %2025 = vmatprep.subr.bf16.mxu0 0
  %2026 = vmatpush1.bf16.msra.mxu0 0
  %2027 = vmatprep.subr.bf16.mxu0 0
  %2028 = vmatpush1.bf16.msra.mxu0 0
  %2029 = vmatprep.subr.bf16.mxu0 0
  %2030 = vmatpush1.bf16.msra.mxu0 0
  %2031 = vmatprep.subr.bf16.mxu0 0
  %2032 = vmatpush1.bf16.msra.mxu0 0
  %2033 = vmatprep.subr.bf16.mxu0 0
  %2034 = vmatpush1.bf16.msra.mxu0 0
  %2035 = vmatprep.subr.bf16.mxu0 0
  %2036 = vmatpush1.bf16.msra.mxu0 0
  %2037 = vmatprep.subr.bf16.mxu0 0
  %2038 = vmatpush1.bf16.msra.mxu0 0
  %2039 = vmatprep.subr.bf16.mxu0 0
  %2040 = vmatpush1.bf16.msra.mxu0 0
  %2041 = vmatprep.mubr.bf16.mxu0 0
  %2042 = vmatmul.mubr.bf16.gmra.mrb[0].mxu0 %v2008
  %v2043 = vpop.f32.mrb[0].mxu0
  %v2044 = vadd.f32 %v592, %v2043
  %v2045 = vpop.f32.mrb[0].mxu0
  %v2046 = vpop.f32.mrb[0].mxu0
  %v2047 = vpop.f32.mrb[0].mxu0
  %2048 = vdwg.mxu0
  %s2049 = scalar_lea.vmem %s9, 48
  %2050 = vst [vmem:[%s2049] sm:$0xff] %v2044
  // Predicated region
  $region34: #{seq2seq_forward.3} parent=0 // pred_check
    _
  $region35: #{seq2seq_forward.3} parent=0 // pred_check_branch
    %2052 = sbr.rel (0) target = $region37
  $region36: #{seq2seq_forward.3} parent=0 // pred_region
    _
  $region37: #{seq2seq_forward.3} parent=0 // pred_fallthru
    _
  // Predicated region
  $region38: #{seq2seq_forward.3} parent=0 // pred_check
    _
  $region39: #{seq2seq_forward.3} parent=0 // pred_check_branch
    %2054 = sbr.rel (0) target = $region41
  $region40: #{seq2seq_forward.3} parent=0 // pred_region
    _
  $region41: #{seq2seq_forward.3} parent=0 // pred_fallthru
    _

</llo_original>
